<compile_context>
chip_gen: v7x
topology: tpu7x:2x2x1
jax: 0.10.0
libtpu: 0.0.40
codegen_flags: <defaults>
</compile_context>

<pallas_src>
import functools

import numpy as np

import jax
import jax.numpy as jnp
from jax.experimental import pallas as pl
from jax.experimental.pallas import tpu as pltpu


TR = 256          # rows (relation candidates) per grid step
LANE_PAD = 128    # lane-dense logits slab width (classes live in cols 0..1)


# ----------------------------------------------------------------------------
# Pallas kernel: projections + biaffine attention + weighted cross-entropy
# ----------------------------------------------------------------------------
def _re_kernel(head_ref, tail_ref, labels_ref, rw_ref,
               w1h_ref, b1h_ref, w2h_ref, b2h_ref,
               w1t_ref, b1t_ref, w2t_ref, b2t_ref,
               wbil_ref, wlin_h_ref, wlin_t_ref, blin_ref,
               logits_ref, loss_ref):
    i = pl.program_id(0)

    # Loss accumulator lives in the resident (1,1) output block.
    @pl.when(i == 0)
    def _init():
        loss_ref[...] = jnp.zeros_like(loss_ref)

    # ffnn_head: Linear(2H -> H) + ReLU + Dropout + Linear(H -> H/2) + ReLU + Dropout
    # (dropout == identity, eval mode)
    h = jnp.maximum(
        jnp.dot(head_ref[...], w1h_ref[...],
                preferred_element_type=jnp.float32) + b1h_ref[...], 0.0)
    h = jnp.maximum(
        jnp.dot(h.astype(jnp.bfloat16), w2h_ref[...],
                preferred_element_type=jnp.float32) + b2h_ref[...], 0.0)

    # ffnn_tail (independent parameter copy)
    t = jnp.maximum(
        jnp.dot(tail_ref[...], w1t_ref[...],
                preferred_element_type=jnp.float32) + b1t_ref[...], 0.0)
    t = jnp.maximum(
        jnp.dot(t.astype(jnp.bfloat16), w2t_ref[...],
                preferred_element_type=jnp.float32) + b2t_ref[...], 0.0)

    h2 = h.shape[-1]  # hidden_size // 2

    # BiaffineAttention bilinear part, fused: one (TR,H2) @ (H2, 2*H2) matmul,
    # then per-class row reductions against t.
    bil = jnp.dot(h.astype(jnp.bfloat16), wbil_ref[...],
                  preferred_element_type=jnp.float32)          # (TR, 2*H2)
    bil0 = jnp.sum(bil[:, :h2] * t, axis=-1, keepdims=True)    # (TR, 1)
    bil1 = jnp.sum(bil[:, h2:] * t, axis=-1, keepdims=True)    # (TR, 1)

    # Linear(cat(h, t)) -> 2 classes, done on VPU/XLU (N=2 matmul wastes MXU).
    lin0 = (jnp.sum(h * wlin_h_ref[0:1, :], axis=-1, keepdims=True)
            + jnp.sum(t * wlin_t_ref[0:1, :], axis=-1, keepdims=True)
            + blin_ref[0:1, 0:1])
    lin1 = (jnp.sum(h * wlin_h_ref[1:2, :], axis=-1, keepdims=True)
            + jnp.sum(t * wlin_t_ref[1:2, :], axis=-1, keepdims=True)
            + blin_ref[0:1, 1:2])

    logit0 = bil0 + lin0                                       # (TR, 1)
    logit1 = bil1 + lin1                                       # (TR, 1)

    # Lane-dense logits slab: class 0 in lane 0, class 1 in lane 1, rest 0.
    col = jax.lax.broadcasted_iota(jnp.int32, logits_ref.shape, 1)
    logits_ref[...] = jnp.where(col == 0, logit0,
                                jnp.where(col == 1, logit1, 0.0))

    # Weighted CrossEntropy: per-row weight already encodes 1/R_doc
    # (0 for padded rows), so the running sum equals sum_b mean_b(CE).
    lbl = labels_ref[...]                                      # (TR, 1) int32
    w = rw_ref[...]                                            # (TR, 1) f32
    m = jnp.maximum(logit0, logit1)
    lse = m + jnp.log(jnp.exp(logit0 - m) + jnp.exp(logit1 - m))
    picked = jnp.where(lbl == 0, logit0, logit1)
    tile_loss = jnp.sum(w * (lse - picked), axis=0, keepdims=True)  # (1, 1)
    loss_ref[...] = loss_ref[...] + tile_loss


@jax.jit
def _re_batch(head_f32, tail_f32, labels2d, rowweight2d, p):
    r_pad, in_dim = head_f32.shape            # in_dim = 2 * hidden_size
    hdim = p["w1h"].shape[1]                  # hidden_size
    h2 = p["w2h"].shape[1]                    # hidden_size // 2
    assert r_pad % TR == 0
    grid = (r_pad // TR,)

    head_bf = head_f32.astype(jnp.bfloat16)
    tail_bf = tail_f32.astype(jnp.bfloat16)

    def row_spec(cols):
        return pl.BlockSpec((TR, cols), lambda i: (i, 0))

    def full_spec(shape):
        return pl.BlockSpec(shape, lambda i: (0, 0))

    grid_spec = pltpu.PrefetchScalarGridSpec(
        num_scalar_prefetch=0,
        grid=grid,
        in_specs=[
            row_spec(in_dim),            # head repr tile
            row_spec(in_dim),            # tail repr tile
            row_spec(1),                 # labels
            row_spec(1),                 # per-row loss weights
            full_spec((in_dim, hdim)),   # w1h
            full_spec((1, hdim)),        # b1h
            full_spec((hdim, h2)),       # w2h
            full_spec((1, h2)),          # b2h
            full_spec((in_dim, hdim)),   # w1t
            full_spec((1, hdim)),        # b1t
            full_spec((hdim, h2)),       # w2t
            full_spec((1, h2)),          # b2t
            full_spec((h2, 2 * h2)),     # wbil (fused bilinear weights)
            full_spec((2, h2)),          # wlin_h (transposed)
            full_spec((2, h2)),          # wlin_t (transposed)
            full_spec((1, 2)),           # blin
        ],
        out_specs=(
            pl.BlockSpec((TR, LANE_PAD), lambda i: (i, 0)),   # logits slab
            pl.BlockSpec((1, 1), lambda i: (0, 0)),           # loss accumulator
        ),
    )

    logits_pad, loss = pl.pallas_call(
        _re_kernel,
        out_shape=(jax.ShapeDtypeStruct((r_pad, LANE_PAD), jnp.float32),
                   jax.ShapeDtypeStruct((1, 1), jnp.float32)),
        grid_spec=grid_spec,
        compiler_params=pltpu.CompilerParams(
            dimension_semantics=("arbitrary",)),
    )(head_bf, tail_bf, labels2d, rowweight2d,
      p["w1h"], p["b1h"], p["w2h"], p["b2h"],
      p["w1t"], p["b1t"], p["w2t"], p["b2t"],
      p["wbil"], p["wlin_h"], p["wlin_t"], p["blin"])

    return logits_pad[:, :2], loss[0, 0]


def _round_up_rows(r):
    """Pad row count to TR * next_power_of_2(tiles) -> bounded recompiles."""
    tiles = max(1, -(-r // TR))
    tiles = 1 << (tiles - 1).bit_length()
    return tiles * TR


# ----------------------------------------------------------------------------
# Python glue: relation candidate construction (faithful port of PyTorch code)
# ----------------------------------------------------------------------------
def build_relation(relations, entities):
    batch_size = len(relations)
    new_relations = []
    for b in range(batch_size):
        if len(entities[b]["start"]) <= 2:
            entities[b] = {"end": [1, 1], "label": [0, 0], "start": [0, 0]}
        all_possible_relations = set(
            [(i, j)
             for i in range(len(entities[b]["label"]))
             for j in range(len(entities[b]["label"]))
             if entities[b]["label"][i] == 0 and entities[b]["label"][j] == 1])
        if len(all_possible_relations) == 0:
            all_possible_relations = set([(0, 1)])
        positive_relations = set(list(zip(relations[b]["head"], relations[b]["tail"])))
        negative_relations = all_possible_relations - positive_relations
        positive_relations = set(
            [i for i in positive_relations if i in all_possible_relations])
        reordered_relations = list(positive_relations) + list(negative_relations)
        relation_per_doc = {"head": [], "tail": [], "label": []}
        relation_per_doc["head"] = [i[0] for i in reordered_relations]
        relation_per_doc["tail"] = [i[1] for i in reordered_relations]
        relation_per_doc["label"] = ([1] * len(positive_relations)
                                     + [0] * (len(reordered_relations)
                                              - len(positive_relations)))
        assert len(relation_per_doc["head"]) != 0
        new_relations.append(relation_per_doc)
    return new_relations, entities


def get_predicted_relations(logits_np, relations, entities):
    """Post-processing on host numpy arrays (single device->host transfer)."""
    pred_relations = []
    m = logits_np.max(axis=-1, keepdims=True)
    e = np.exp(logits_np - m)
    probs = e / e.sum(axis=-1, keepdims=True)
    pred_labels = logits_np.argmax(axis=-1)
    for i in range(logits_np.shape[0]):
        if int(pred_labels[i]) != 1:
            continue
        rel = {}
        rel["head_id"] = relations["head"][i]
        rel["head"] = (entities["start"][rel["head_id"]],
                       entities["end"][rel["head_id"]])
        rel["head_type"] = entities["label"][rel["head_id"]]
        rel["tail_id"] = relations["tail"][i]
        rel["tail"] = (entities["start"][rel["tail_id"]],
                       entities["end"][rel["tail_id"]])
        rel["tail_type"] = entities["label"][rel["tail_id"]]
        rel["type"] = 1
        rel["conf"] = float(probs[i].max())
        pred_relations.append(rel)
    return pred_relations


# ----------------------------------------------------------------------------
# Parameter preparation for the kernel (bf16 matmul weights, fused bilinear)
# ----------------------------------------------------------------------------
def prepare_params(params):
    return {
        "w1h": params["w1h"].astype(jnp.bfloat16),
        "b1h": params["b1h"].astype(jnp.float32),
        "w2h": params["w2h"].astype(jnp.bfloat16),
        "b2h": params["b2h"].astype(jnp.float32),
        "w1t": params["w1t"].astype(jnp.bfloat16),
        "b1t": params["b1t"].astype(jnp.float32),
        "w2t": params["w2t"].astype(jnp.bfloat16),
        "b2t": params["b2t"].astype(jnp.float32),
        "wbil": jnp.concatenate([params["wbil0"], params["wbil1"]],
                                axis=1).astype(jnp.bfloat16),
        "wlin_h": params["wlin_h"].T.astype(jnp.float32),   # (2, H/2)
        "wlin_t": params["wlin_t"].T.astype(jnp.float32),   # (2, H/2)
        "blin": params["blin"].astype(jnp.float32),
    }


# ----------------------------------------------------------------------------
# Full REDecoder forward
# ----------------------------------------------------------------------------
def re_decoder_forward(hidden_states, entities, relations, params,
                       kernel_params=None):
    if kernel_params is None:
        kernel_params = prepare_params(params)
    batch_size = hidden_states.shape[0]
    relations, entities = build_relation(relations, entities)

    hidden_np = np.asarray(jax.device_get(hidden_states), np.float32)
    emb_np = np.asarray(jax.device_get(params["entity_emb"]), np.float32)

    head_list, tail_list, label_list, weight_list = [], [], [], []
    doc_slices = []
    offset = 0
    for b in range(batch_size):
        head_entities = np.asarray(relations[b]["head"], np.int64)
        tail_entities = np.asarray(relations[b]["tail"], np.int64)
        relation_labels = np.asarray(relations[b]["label"], np.int32)
        ent_start = np.asarray(entities[b]["start"], np.int64)
        ent_label = np.asarray(entities[b]["label"], np.int64)

        head_index = ent_start[head_entities]
        head_label = ent_label[head_entities]
        tail_index = ent_start[tail_entities]
        tail_label = ent_label[tail_entities]

        head_repr = np.concatenate(
            [hidden_np[b][head_index], emb_np[head_label]], axis=-1)
        tail_repr = np.concatenate(
            [hidden_np[b][tail_index], emb_np[tail_label]], axis=-1)
        rb = head_repr.shape[0]

        head_list.append(head_repr.astype(np.float32))
        tail_list.append(tail_repr.astype(np.float32))
        label_list.append(relation_labels)
        # per-row weight = 1/R_doc  ->  kernel sum == sum over docs of mean CE
        weight_list.append(np.full((rb,), 1.0 / rb, np.float32))
        doc_slices.append((offset, offset + rb))
        offset += rb

    r_total = offset
    r_pad = _round_up_rows(r_total)
    pad = r_pad - r_total

    head_all = np.pad(np.concatenate(head_list, axis=0), ((0, pad), (0, 0)))
    tail_all = np.pad(np.concatenate(tail_list, axis=0), ((0, pad), (0, 0)))
    labels_all = np.pad(np.concatenate(label_list), (0, pad)).astype(np.int32)
    weights_all = np.pad(np.concatenate(weight_list), (0, pad)).astype(np.float32)

    logits_dev, loss = _re_batch(
        jnp.asarray(head_all), jnp.asarray(tail_all),
        jnp.asarray(labels_all.reshape(-1, 1)),
        jnp.asarray(weights_all.reshape(-1, 1)),
        kernel_params)

    logits_np = np.asarray(jax.device_get(logits_dev))[:r_total]

    all_pred_relations = []
    for b in range(batch_size):
        s, e = doc_slices[b]
        all_pred_relations.append(
            get_predicted_relations(logits_np[s:e], relations[b], entities[b]))
    return loss, all_pred_relations


# ----------------------------------------------------------------------------
# Deterministic parameter init (shapes from REDecoder.__init__)
# ----------------------------------------------------------------------------
def init_params(key, hidden_size):
    H, H2 = hidden_size, hidden_size // 2
    ks = jax.random.split(key, 16)

    def uinit(k, fan_in, shape):
        bound = 1.0 / (fan_in ** 0.5)
        return jax.random.uniform(k, shape, jnp.float32, -bound, bound)

    wlin = uinit(ks[12], 2 * H2, (2 * H2, 2))   # Linear(2*H2 -> 2)
    return {
        "entity_emb": jax.random.normal(ks[0], (2, H), jnp.float32),
        # ffnn_head
        "w1h": uinit(ks[1], 2 * H, (2 * H, H)),
        "b1h": uinit(ks[2], 2 * H, (1, H)),
        "w2h": uinit(ks[3], H, (H, H2)),
        "b2h": uinit(ks[4], H, (1, H2)),
        # ffnn_tail
        "w1t": uinit(ks[5], 2 * H, (2 * H, H)),
        "b1t": uinit(ks[6], 2 * H, (1, H)),
        "w2t": uinit(ks[7], H, (H, H2)),
        "b2t": uinit(ks[8], H, (1, H2)),
        # BiaffineAttention: Bilinear(H2, H2, 2, bias=False) + Linear(2*H2, 2)
        "wbil0": uinit(ks[9], H2, (H2, H2)),
        "wbil1": uinit(ks[10], H2, (H2, H2)),
        "wlin_h": wlin[:H2, :],
        "wlin_t": wlin[H2:, :],
        "blin": uinit(ks[13], 2 * H2, (1, 2)),
    }


if __name__ == "__main__":
    key = jax.random.PRNGKey(0)
    k_params, k_hidden = jax.random.split(key)

    batch_size, max_n_words, hidden_size = 2, 8, 32
    params = init_params(k_params, hidden_size)
    kernel_params = prepare_params(params)
    hidden_states = jax.random.normal(
        k_hidden, (batch_size, max_n_words, hidden_size), jnp.float32)

    entities = [
        {"start": [0, 1, 2, 3], "end": [1, 2, 3, 4], "label": [0, 1, 0, 1]},
        {"start": [0, 2, 4], "end": [1, 3, 5], "label": [0, 1, 1]},
    ]
    relations = [
        {"head": [0], "tail": [1]},
        {"head": [0], "tail": [2]},
    ]

    loss, all_pred_relations = re_decoder_forward(
        hidden_states, entities, relations, params, kernel_params)
    jax.block_until_ready(loss)
    print("KERNEL_OK")
</pallas_src>

<mosaic_0001>
module attributes {stable_mosaic.version = 11 : i64} {
  func.func @_re_kernel(%arg0: i32, %arg1: memref<256x64xbf16, #tpu.memory_space<vmem>>, %arg2: memref<256x64xbf16, #tpu.memory_space<vmem>>, %arg3: memref<256x1xi32, #tpu.memory_space<vmem>>, %arg4: memref<256x1xf32, #tpu.memory_space<vmem>>, %arg5: memref<64x32xbf16, #tpu.memory_space<vmem>>, %arg6: memref<1x32xf32, #tpu.memory_space<vmem>>, %arg7: memref<32x16xbf16, #tpu.memory_space<vmem>>, %arg8: memref<1x16xf32, #tpu.memory_space<vmem>>, %arg9: memref<64x32xbf16, #tpu.memory_space<vmem>>, %arg10: memref<1x32xf32, #tpu.memory_space<vmem>>, %arg11: memref<32x16xbf16, #tpu.memory_space<vmem>>, %arg12: memref<1x16xf32, #tpu.memory_space<vmem>>, %arg13: memref<16x32xbf16, #tpu.memory_space<vmem>>, %arg14: memref<2x16xf32, #tpu.memory_space<vmem>>, %arg15: memref<2x16xf32, #tpu.memory_space<vmem>>, %arg16: memref<1x2xf32, #tpu.memory_space<vmem>>, %arg17: memref<256x128xf32, #tpu.memory_space<vmem>>, %arg18: memref<1x1xf32, #tpu.memory_space<vmem>>) attributes {dimension_semantics = [#tpu.dimension_semantics<arbitrary>], iteration_bounds = array<i64: 1>, scalar_prefetch = 0 : i64, scratch_operands = 0 : i64, tpu.core_type = #tpu.core_type<tc>, window_params = [{transform_indices = @transform_0, window_bounds = array<i64: 256, 64>}, {transform_indices = @transform_1, window_bounds = array<i64: 256, 64>}, {transform_indices = @transform_2, window_bounds = array<i64: 256, 1>}, {transform_indices = @transform_3, window_bounds = array<i64: 256, 1>}, {pipeline_mode = #tpu.pipeline_mode<synchronous>, transform_indices = @transform_4, window_bounds = array<i64: 64, 32>}, {pipeline_mode = #tpu.pipeline_mode<synchronous>, transform_indices = @transform_5, window_bounds = array<i64: 1, 32>}, {pipeline_mode = #tpu.pipeline_mode<synchronous>, transform_indices = @transform_6, window_bounds = array<i64: 32, 16>}, {pipeline_mode = #tpu.pipeline_mode<synchronous>, transform_indices = @transform_7, window_bounds = array<i64: 1, 16>}, {pipeline_mode = #tpu.pipeline_mode<synchronous>, transform_indices = @transform_8, window_bounds = array<i64: 64, 32>}, {pipeline_mode = #tpu.pipeline_mode<synchronous>, transform_indices = @transform_9, window_bounds = array<i64: 1, 32>}, {pipeline_mode = #tpu.pipeline_mode<synchronous>, transform_indices = @transform_10, window_bounds = array<i64: 32, 16>}, {pipeline_mode = #tpu.pipeline_mode<synchronous>, transform_indices = @transform_11, window_bounds = array<i64: 1, 16>}, {pipeline_mode = #tpu.pipeline_mode<synchronous>, transform_indices = @transform_12, window_bounds = array<i64: 16, 32>}, {pipeline_mode = #tpu.pipeline_mode<synchronous>, transform_indices = @transform_13, window_bounds = array<i64: 2, 16>}, {pipeline_mode = #tpu.pipeline_mode<synchronous>, transform_indices = @transform_14, window_bounds = array<i64: 2, 16>}, {pipeline_mode = #tpu.pipeline_mode<synchronous>, transform_indices = @transform_15, window_bounds = array<i64: 1, 2>}, {transform_indices = @transform_16, window_bounds = array<i64: 256, 128>}, {pipeline_mode = #tpu.pipeline_mode<synchronous>, transform_indices = @transform_17, window_bounds = array<i64: 1, 1>}]} {
    %c0_i32 = arith.constant 0 : i32
    %0 = arith.cmpi eq, %arg0, %c0_i32 : i32
    %1 = arith.extui %0 : i1 to i32
    %c0_i32_0 = arith.constant 0 : i32
    %2 = arith.cmpi ne, %1, %c0_i32_0 : i32
    scf.if %2 {
      %cst_61 = arith.constant 0.000000e+00 : f32
      %109 = vector.broadcast %cst_61 : f32 to vector<1x1xf32>
      %c0_62 = arith.constant 0 : index
      %c0_63 = arith.constant 0 : index
      %110 = vector.load %arg18[%c0_62, %c0_63] : memref<1x1xf32, #tpu.memory_space<vmem>>, vector<1x1xf32>
      tpu.vector_store %arg18[%c0_62, %c0_63], %109 {strides = array<i32>} : memref<1x1xf32, #tpu.memory_space<vmem>>, vector<1x1xf32>,
    } else {
    }
    %c0 = arith.constant 0 : index
    %c0_1 = arith.constant 0 : index
    %3 = vector.load %arg1[%c0, %c0_1] : memref<256x64xbf16, #tpu.memory_space<vmem>>, vector<256x64xbf16>
    %c0_2 = arith.constant 0 : index
    %c0_3 = arith.constant 0 : index
    %4 = vector.load %arg5[%c0_2, %c0_3] : memref<64x32xbf16, #tpu.memory_space<vmem>>, vector<64x32xbf16>
    %cst = arith.constant dense<0.000000e+00> : vector<256x32xf32>
    %5 = tpu.matmul %3, %4, %cst {dimension_numbers = #tpu.dot_dimension_numbers<[1], [0], [0], [1], [0, 0, 1, 1], [], []>} : vector<256x64xbf16>, vector<64x32xbf16>, vector<256x32xf32> -> vector<256x32xf32>
    %c0_4 = arith.constant 0 : index
    %c0_5 = arith.constant 0 : index
    %6 = vector.load %arg6[%c0_4, %c0_5] : memref<1x32xf32, #tpu.memory_space<vmem>>, vector<1x32xf32>
    %7 = vector.broadcast %6 : vector<1x32xf32> to vector<256x32xf32>
    %8 = arith.addf %5, %7 : vector<256x32xf32>
    %cst_6 = arith.constant 0.000000e+00 : f32
    %9 = vector.broadcast %cst_6 : f32 to vector<256x32xf32>
    %10 = arith.maximumf %8, %9 : vector<256x32xf32>
    %11 = arith.truncf %10 : vector<256x32xf32> to vector<256x32xbf16>
    %c0_7 = arith.constant 0 : index
    %c0_8 = arith.constant 0 : index
    %12 = vector.load %arg7[%c0_7, %c0_8] : memref<32x16xbf16, #tpu.memory_space<vmem>>, vector<32x16xbf16>
    %cst_9 = arith.constant dense<0.000000e+00> : vector<256x16xf32>
    %13 = tpu.matmul %11, %12, %cst_9 {dimension_numbers = #tpu.dot_dimension_numbers<[1], [0], [0], [1], [0, 0, 1, 1], [], []>} : vector<256x32xbf16>, vector<32x16xbf16>, vector<256x16xf32> -> vector<256x16xf32>
    %c0_10 = arith.constant 0 : index
    %c0_11 = arith.constant 0 : index
    %14 = vector.load %arg8[%c0_10, %c0_11] : memref<1x16xf32, #tpu.memory_space<vmem>>, vector<1x16xf32>
    %15 = vector.broadcast %14 : vector<1x16xf32> to vector<256x16xf32>
    %16 = arith.addf %13, %15 : vector<256x16xf32>
    %cst_12 = arith.constant 0.000000e+00 : f32
    %17 = vector.broadcast %cst_12 : f32 to vector<256x16xf32>
    %18 = arith.maximumf %16, %17 : vector<256x16xf32>
    %c0_13 = arith.constant 0 : index
    %c0_14 = arith.constant 0 : index
    %19 = vector.load %arg2[%c0_13, %c0_14] : memref<256x64xbf16, #tpu.memory_space<vmem>>, vector<256x64xbf16>
    %c0_15 = arith.constant 0 : index
    %c0_16 = arith.constant 0 : index
    %20 = vector.load %arg9[%c0_15, %c0_16] : memref<64x32xbf16, #tpu.memory_space<vmem>>, vector<64x32xbf16>
    %cst_17 = arith.constant dense<0.000000e+00> : vector<256x32xf32>
    %21 = tpu.matmul %19, %20, %cst_17 {dimension_numbers = #tpu.dot_dimension_numbers<[1], [0], [0], [1], [0, 0, 1, 1], [], []>} : vector<256x64xbf16>, vector<64x32xbf16>, vector<256x32xf32> -> vector<256x32xf32>
    %c0_18 = arith.constant 0 : index
    %c0_19 = arith.constant 0 : index
    %22 = vector.load %arg10[%c0_18, %c0_19] : memref<1x32xf32, #tpu.memory_space<vmem>>, vector<1x32xf32>
    %23 = vector.broadcast %22 : vector<1x32xf32> to vector<256x32xf32>
    %24 = arith.addf %21, %23 : vector<256x32xf32>
    %cst_20 = arith.constant 0.000000e+00 : f32
    %25 = vector.broadcast %cst_20 : f32 to vector<256x32xf32>
    %26 = arith.maximumf %24, %25 : vector<256x32xf32>
    %27 = arith.truncf %26 : vector<256x32xf32> to vector<256x32xbf16>
    %c0_21 = arith.constant 0 : index
    %c0_22 = arith.constant 0 : index
    %28 = vector.load %arg11[%c0_21, %c0_22] : memref<32x16xbf16, #tpu.memory_space<vmem>>, vector<32x16xbf16>
    %cst_23 = arith.constant dense<0.000000e+00> : vector<256x16xf32>
    %29 = tpu.matmul %27, %28, %cst_23 {dimension_numbers = #tpu.dot_dimension_numbers<[1], [0], [0], [1], [0, 0, 1, 1], [], []>} : vector<256x32xbf16>, vector<32x16xbf16>, vector<256x16xf32> -> vector<256x16xf32>
    %c0_24 = arith.constant 0 : index
    %c0_25 = arith.constant 0 : index
    %30 = vector.load %arg12[%c0_24, %c0_25] : memref<1x16xf32, #tpu.memory_space<vmem>>, vector<1x16xf32>
    %31 = vector.broadcast %30 : vector<1x16xf32> to vector<256x16xf32>
    %32 = arith.addf %29, %31 : vector<256x16xf32>
    %cst_26 = arith.constant 0.000000e+00 : f32
    %33 = vector.broadcast %cst_26 : f32 to vector<256x16xf32>
    %34 = arith.maximumf %32, %33 : vector<256x16xf32>
    %35 = arith.truncf %18 : vector<256x16xf32> to vector<256x16xbf16>
    %c0_27 = arith.constant 0 : index
    %c0_28 = arith.constant 0 : index
    %36 = vector.load %arg13[%c0_27, %c0_28] : memref<16x32xbf16, #tpu.memory_space<vmem>>, vector<16x32xbf16>
    %cst_29 = arith.constant dense<0.000000e+00> : vector<256x32xf32>
    %37 = tpu.matmul %35, %36, %cst_29 {dimension_numbers = #tpu.dot_dimension_numbers<[1], [0], [0], [1], [0, 0, 1, 1], [], []>} : vector<256x16xbf16>, vector<16x32xbf16>, vector<256x32xf32> -> vector<256x32xf32>
    %38 = vector.extract_strided_slice %37 {offsets = [0, 0], sizes = [256, 16], strides = [1, 1]} : vector<256x32xf32> to vector<256x16xf32>
    %39 = arith.mulf %38, %34 : vector<256x16xf32>
    %cst_30 = arith.constant dense<0.000000e+00> : vector<256xf32>
    %40 = vector.multi_reduction <add>, %39, %cst_30 [1] : vector<256x16xf32> to vector<256xf32>
    %41 = vector.shape_cast %40 : vector<256xf32> to vector<256x1xf32>
    %42 = vector.extract_strided_slice %37 {offsets = [0, 16], sizes = [256, 16], strides = [1, 1]} : vector<256x32xf32> to vector<256x16xf32>
    %43 = arith.mulf %42, %34 : vector<256x16xf32>
    %cst_31 = arith.constant dense<0.000000e+00> : vector<256xf32>
    %44 = vector.multi_reduction <add>, %43, %cst_31 [1] : vector<256x16xf32> to vector<256xf32>
    %45 = vector.shape_cast %44 : vector<256xf32> to vector<256x1xf32>
    %c0_32 = arith.constant 0 : index
    %c0_33 = arith.constant 0 : index
    %46 = vector.load %arg14[%c0_32, %c0_33] : memref<2x16xf32, #tpu.memory_space<vmem>>, vector<1x16xf32>
    %47 = vector.broadcast %46 : vector<1x16xf32> to vector<256x16xf32>
    %48 = arith.mulf %18, %47 : vector<256x16xf32>
    %cst_34 = arith.constant dense<0.000000e+00> : vector<256xf32>
    %49 = vector.multi_reduction <add>, %48, %cst_34 [1] : vector<256x16xf32> to vector<256xf32>
    %50 = vector.shape_cast %49 : vector<256xf32> to vector<256x1xf32>
    %c0_35 = arith.constant 0 : index
    %c0_36 = arith.constant 0 : index
    %51 = vector.load %arg15[%c0_35, %c0_36] : memref<2x16xf32, #tpu.memory_space<vmem>>, vector<1x16xf32>
    %52 = vector.broadcast %51 : vector<1x16xf32> to vector<256x16xf32>
    %53 = arith.mulf %34, %52 : vector<256x16xf32>
    %cst_37 = arith.constant dense<0.000000e+00> : vector<256xf32>
    %54 = vector.multi_reduction <add>, %53, %cst_37 [1] : vector<256x16xf32> to vector<256xf32>
    %55 = vector.shape_cast %54 : vector<256xf32> to vector<256x1xf32>
    %56 = arith.addf %50, %55 : vector<256x1xf32>
    %c0_38 = arith.constant 0 : index
    %c0_39 = arith.constant 0 : index
    %57 = vector.load %arg16[%c0_38, %c0_39] : memref<1x2xf32, #tpu.memory_space<vmem>>, vector<1x1xf32>
    %58 = vector.broadcast %57 : vector<1x1xf32> to vector<256x1xf32>
    %59 = arith.addf %56, %58 : vector<256x1xf32>
    %c1 = arith.constant 1 : index
    %c0_40 = arith.constant 0 : index
    %60 = vector.load %arg14[%c1, %c0_40] : memref<2x16xf32, #tpu.memory_space<vmem>>, vector<1x16xf32>
    %61 = vector.broadcast %60 : vector<1x16xf32> to vector<256x16xf32>
    %62 = arith.mulf %18, %61 : vector<256x16xf32>
    %cst_41 = arith.constant dense<0.000000e+00> : vector<256xf32>
    %63 = vector.multi_reduction <add>, %62, %cst_41 [1] : vector<256x16xf32> to vector<256xf32>
    %64 = vector.shape_cast %63 : vector<256xf32> to vector<256x1xf32>
    %c1_42 = arith.constant 1 : index
    %c0_43 = arith.constant 0 : index
    %65 = vector.load %arg15[%c1_42, %c0_43] : memref<2x16xf32, #tpu.memory_space<vmem>>, vector<1x16xf32>
    %66 = vector.broadcast %65 : vector<1x16xf32> to vector<256x16xf32>
    %67 = arith.mulf %34, %66 : vector<256x16xf32>
    %cst_44 = arith.constant dense<0.000000e+00> : vector<256xf32>
    %68 = vector.multi_reduction <add>, %67, %cst_44 [1] : vector<256x16xf32> to vector<256xf32>
    %69 = vector.shape_cast %68 : vector<256xf32> to vector<256x1xf32>
    %70 = arith.addf %64, %69 : vector<256x1xf32>
    %c0_45 = arith.constant 0 : index
    %c1_46 = arith.constant 1 : index
    %71 = vector.load %arg16[%c0_45, %c1_46] : memref<1x2xf32, #tpu.memory_space<vmem>>, vector<1x1xf32>
    %72 = vector.broadcast %71 : vector<1x1xf32> to vector<256x1xf32>
    %73 = arith.addf %70, %72 : vector<256x1xf32>
    %74 = arith.addf %41, %59 : vector<256x1xf32>
    %75 = arith.addf %45, %73 : vector<256x1xf32>
    %76 = tpu.iota {dimensions = array<i32: 1>} : vector<256x128xi32>
    %c0_i32_47 = arith.constant 0 : i32
    %77 = vector.broadcast %c0_i32_47 : i32 to vector<256x128xi32>
    %78 = arith.cmpi eq, %76, %77 : vector<256x128xi32>
    %c1_i32 = arith.constant 1 : i32
    %79 = vector.broadcast %c1_i32 : i32 to vector<256x128xi32>
    %80 = arith.cmpi eq, %76, %79 : vector<256x128xi32>
    %cst_48 = arith.constant 0.000000e+00 : f32
    %81 = vector.shape_cast %75 : vector<256x1xf32> to vector<256x1xf32>
    %82 = vector.broadcast %81 : vector<256x1xf32> to vector<256x128xf32>
    %83 = vector.broadcast %cst_48 : f32 to vector<256x128xf32>
    %84 = arith.select %80, %82, %83 : vector<256x128xi1>, vector<256x128xf32>
    %85 = vector.shape_cast %74 : vector<256x1xf32> to vector<256x1xf32>
    %86 = vector.broadcast %85 : vector<256x1xf32> to vector<256x128xf32>
    %87 = arith.select %78, %86, %84 : vector<256x128xi1>, vector<256x128xf32>
    %c0_49 = arith.constant 0 : index
    %c0_50 = arith.constant 0 : index
    %88 = vector.load %arg17[%c0_49, %c0_50] : memref<256x128xf32, #tpu.memory_space<vmem>>, vector<256x128xf32>
    tpu.vector_store %arg17[%c0_49, %c0_50], %87 {strides = array<i32>} : memref<256x128xf32, #tpu.memory_space<vmem>>, vector<256x128xf32>,
    %c0_51 = arith.constant 0 : index
    %c0_52 = arith.constant 0 : index
    %89 = vector.load %arg3[%c0_51, %c0_52] : memref<256x1xi32, #tpu.memory_space<vmem>>, vector<256x1xi32>
    %c0_53 = arith.constant 0 : index
    %c0_54 = arith.constant 0 : index
    %90 = vector.load %arg4[%c0_53, %c0_54] : memref<256x1xf32, #tpu.memory_space<vmem>>, vector<256x1xf32>
    %91 = arith.maximumf %74, %75 : vector<256x1xf32>
    %92 = arith.subf %74, %91 : vector<256x1xf32>
    %93 = math.exp %92 : vector<256x1xf32>
    %94 = arith.subf %75, %91 : vector<256x1xf32>
    %95 = math.exp %94 : vector<256x1xf32>
    %96 = arith.addf %93, %95 : vector<256x1xf32>
    %97 = math.log %96 : vector<256x1xf32>
    %98 = arith.addf %91, %97 : vector<256x1xf32>
    %c0_i32_55 = arith.constant 0 : i32
    %99 = vector.broadcast %c0_i32_55 : i32 to vector<256x1xi32>
    %100 = arith.cmpi eq, %89, %99 : vector<256x1xi32>
    %101 = arith.select %100, %74, %75 : vector<256x1xi1>, vector<256x1xf32>
    %102 = arith.subf %98, %101 : vector<256x1xf32>
    %103 = arith.mulf %90, %102 : vector<256x1xf32>
    %cst_56 = arith.constant dense<0.000000e+00> : vector<1xf32>
    %104 = vector.multi_reduction <add>, %103, %cst_56 [0] : vector<256x1xf32> to vector<1xf32>
    %105 = vector.shape_cast %104 : vector<1xf32> to vector<1x1xf32>
    %c0_57 = arith.constant 0 : index
    %c0_58 = arith.constant 0 : index
    %106 = vector.load %arg18[%c0_57, %c0_58] : memref<1x1xf32, #tpu.memory_space<vmem>>, vector<1x1xf32>
    %107 = arith.addf %106, %105 : vector<1x1xf32>
    %c0_59 = arith.constant 0 : index
    %c0_60 = arith.constant 0 : index
    %108 = vector.load %arg18[%c0_59, %c0_60] : memref<1x1xf32, #tpu.memory_space<vmem>>, vector<1x1xf32>
    tpu.vector_store %arg18[%c0_59, %c0_60], %107 {strides = array<i32>} : memref<1x1xf32, #tpu.memory_space<vmem>>, vector<1x1xf32>,
    return
  }
  func.func @transform_0(%arg0: i32) -> (i32, i32) {
    %c0_i32 = arith.constant 0 : i32
    %c0_i32_0 = arith.constant 0 : i32
    return %arg0, %c0_i32 : i32, i32
  }
  func.func @transform_1(%arg0: i32) -> (i32, i32) {
    %c0_i32 = arith.constant 0 : i32
    %c0_i32_0 = arith.constant 0 : i32
    return %arg0, %c0_i32 : i32, i32
  }
  func.func @transform_2(%arg0: i32) -> (i32, i32) {
    %c0_i32 = arith.constant 0 : i32
    %c0_i32_0 = arith.constant 0 : i32
    return %arg0, %c0_i32 : i32, i32
  }
  func.func @transform_3(%arg0: i32) -> (i32, i32) {
    %c0_i32 = arith.constant 0 : i32
    %c0_i32_0 = arith.constant 0 : i32
    return %arg0, %c0_i32 : i32, i32
  }
  func.func @transform_4(%arg0: i32) -> (i32, i32) {
    %c0_i32 = arith.constant 0 : i32
    %c0_i32_0 = arith.constant 0 : i32
    %c0_i32_1 = arith.constant 0 : i32
    return %c0_i32, %c0_i32_0 : i32, i32
  }
  func.func @transform_5(%arg0: i32) -> (i32, i32) {
    %c0_i32 = arith.constant 0 : i32
    %c0_i32_0 = arith.constant 0 : i32
    %c0_i32_1 = arith.constant 0 : i32
    return %c0_i32, %c0_i32_0 : i32, i32
  }
  func.func @transform_6(%arg0: i32) -> (i32, i32) {
    %c0_i32 = arith.constant 0 : i32
    %c0_i32_0 = arith.constant 0 : i32
    %c0_i32_1 = arith.constant 0 : i32
    return %c0_i32, %c0_i32_0 : i32, i32
  }
  func.func @transform_7(%arg0: i32) -> (i32, i32) {
    %c0_i32 = arith.constant 0 : i32
    %c0_i32_0 = arith.constant 0 : i32
    %c0_i32_1 = arith.constant 0 : i32
    return %c0_i32, %c0_i32_0 : i32, i32
  }
  func.func @transform_8(%arg0: i32) -> (i32, i32) {
    %c0_i32 = arith.constant 0 : i32
    %c0_i32_0 = arith.constant 0 : i32
    %c0_i32_1 = arith.constant 0 : i32
    return %c0_i32, %c0_i32_0 : i32, i32
  }
  func.func @transform_9(%arg0: i32) -> (i32, i32) {
    %c0_i32 = arith.constant 0 : i32
    %c0_i32_0 = arith.constant 0 : i32
    %c0_i32_1 = arith.constant 0 : i32
    return %c0_i32, %c0_i32_0 : i32, i32
  }
  func.func @transform_10(%arg0: i32) -> (i32, i32) {
    %c0_i32 = arith.constant 0 : i32
    %c0_i32_0 = arith.constant 0 : i32
    %c0_i32_1 = arith.constant 0 : i32
    return %c0_i32, %c0_i32_0 : i32, i32
  }
  func.func @transform_11(%arg0: i32) -> (i32, i32) {
    %c0_i32 = arith.constant 0 : i32
    %c0_i32_0 = arith.constant 0 : i32
    %c0_i32_1 = arith.constant 0 : i32
    return %c0_i32, %c0_i32_0 : i32, i32
  }
  func.func @transform_12(%arg0: i32) -> (i32, i32) {
    %c0_i32 = arith.constant 0 : i32
    %c0_i32_0 = arith.constant 0 : i32
    %c0_i32_1 = arith.constant 0 : i32
    return %c0_i32, %c0_i32_0 : i32, i32
  }
  func.func @transform_13(%arg0: i32) -> (i32, i32) {
    %c0_i32 = arith.constant 0 : i32
    %c0_i32_0 = arith.constant 0 : i32
    %c0_i32_1 = arith.constant 0 : i32
    return %c0_i32, %c0_i32_0 : i32, i32
  }
  func.func @transform_14(%arg0: i32) -> (i32, i32) {
    %c0_i32 = arith.constant 0 : i32
    %c0_i32_0 = arith.constant 0 : i32
    %c0_i32_1 = arith.constant 0 : i32
    return %c0_i32, %c0_i32_0 : i32, i32
  }
  func.func @transform_15(%arg0: i32) -> (i32, i32) {
    %c0_i32 = arith.constant 0 : i32
    %c0_i32_0 = arith.constant 0 : i32
    %c0_i32_1 = arith.constant 0 : i32
    return %c0_i32, %c0_i32_0 : i32, i32
  }
  func.func @transform_16(%arg0: i32) -> (i32, i32) {
    %c0_i32 = arith.constant 0 : i32
    %c0_i32_0 = arith.constant 0 : i32
    return %arg0, %c0_i32 : i32, i32
  }
  func.func @transform_17(%arg0: i32) -> (i32, i32) {
    %c0_i32 = arith.constant 0 : i32
    %c0_i32_0 = arith.constant 0 : i32
    %c0_i32_1 = arith.constant 0 : i32
    return %c0_i32, %c0_i32_0 : i32, i32
  }
}

</mosaic_0001>

<llo_original>
// kernel: _re_batch.1
$region0: #{_re_batch.1}
  #allocation0 [shape = 'u32[]', space=smem, size = 0x4, offset = 0x4, fixed_abs, tag = 'smem constant byte address 0x4 - core index']
  #allocation1 [shape = 'u32[144,128]{1,0:T(1,128)}', space=vmem, size = 0x12000, scoped, tag = 'internal scratch']
  %s0 = inlined_call_operand.vmem [shape: bf16[256,64], index: 0, kind: input, shape index: {}]
  %s1 = inlined_call_operand.vmem [shape: bf16[256,64], index: 1, kind: input, shape index: {}]
  %s2 = inlined_call_operand.vmem [shape: s32[256,1], index: 2, kind: input, shape index: {}]
  %s3 = inlined_call_operand.vmem [shape: f32[256,1], index: 3, kind: input, shape index: {}]
  %s4 = inlined_call_operand.vmem [shape: bf16[64,32], index: 4, kind: input, shape index: {}]
  %s5 = inlined_call_operand.vmem [shape: f32[1,32], index: 5, kind: input, shape index: {}]
  %s6 = inlined_call_operand.vmem [shape: bf16[32,16], index: 6, kind: input, shape index: {}]
  %s7 = inlined_call_operand.vmem [shape: f32[1,16], index: 7, kind: input, shape index: {}]
  %s8 = inlined_call_operand.vmem [shape: bf16[64,32], index: 8, kind: input, shape index: {}]
  %s9 = inlined_call_operand.vmem [shape: f32[1,32], index: 9, kind: input, shape index: {}]
  %s10 = inlined_call_operand.vmem [shape: bf16[32,16], index: 10, kind: input, shape index: {}]
  %s11 = inlined_call_operand.vmem [shape: f32[1,16], index: 11, kind: input, shape index: {}]
  %s12 = inlined_call_operand.vmem [shape: bf16[16,32], index: 12, kind: input, shape index: {}]
  %s13 = inlined_call_operand.vmem [shape: f32[2,16], index: 13, kind: input, shape index: {}]
  %s14 = inlined_call_operand.vmem [shape: f32[2,16], index: 14, kind: input, shape index: {}]
  %s15 = inlined_call_operand.vmem [shape: f32[1,2], index: 15, kind: input, shape index: {}]
  %s16 = inlined_call_operand.vmem [shape: f32[256,128], index: 16, kind: output, shape index: {0}]
  %s17 = inlined_call_operand.hbm [shape: f32[1,1], index: 17, kind: output, shape index: {1}]
  %18 = xla_tuple %s16, %s17
  %s19 = sld [smem:[#allocation0]]
  $region86: #{_re_batch.1} parent=0
    _
  %s21 = ssub.s32 1, %s19
  %s22 = scalar_select 0, %s21, %s19
  $region1: #{_re_batch.1} parent=0
    #allocation2 [shape = 'u8[512]{0}', space=vmem, size = 0x400, scoped, tag = 'output window, operand 1, single buffered']
    #allocation3 [shape = 's32[1]{0}', space=sflag, size = 0x4, scoped, tag = 'scoped memory for _re_batch.1']
    %23 = vsyncpa [#allocation3], 0
    // Predicated region
    $region2: #{_re_batch.1} parent=1 // pred_check
      _
    $region3: #{_re_batch.1} parent=1 // pred_check_branch
      %25 = sbr.rel (0) target = $region5
    $region4: #{_re_batch.1} parent=1 // pred_region
      _
    $region5: #{_re_batch.1} parent=1 // pred_fallthru
      _
    // Predicated region
    $region6: #{_re_batch.1} parent=1 // pred_check
      _
    $region7: #{_re_batch.1} parent=1 // pred_check_branch
      %27 = sbr.rel (0) target = $region9
    $region8: #{_re_batch.1} parent=1 // pred_region
      _
    $region9: #{_re_batch.1} parent=1 // pred_fallthru
      _
    // Predicated region
    $region10: #{_re_batch.1} parent=1 // pred_check
      _
    $region11: #{_re_batch.1} parent=1 // pred_check_branch
      %29 = sbr.rel (0) target = $region13
    $region12: #{_re_batch.1} parent=1 // pred_region
      _
    $region13: #{_re_batch.1} parent=1 // pred_fallthru
      _
    // Predicated region
    $region14: #{_re_batch.1} parent=1 // pred_check
      _
    $region15: #{_re_batch.1} parent=1 // pred_check_branch
      %31 = sbr.rel (0) target = $region17
    $region16: #{_re_batch.1} parent=1 // pred_region
      _
    $region17: #{_re_batch.1} parent=1 // pred_fallthru
      _
    // Predicated region
    $region18: #{_re_batch.1} parent=1 // pred_check
      _
    $region19: #{_re_batch.1} parent=1 // pred_check_branch
      %33 = sbr.rel (0) target = $region21
    $region20: #{_re_batch.1} parent=1 // pred_region
      _
    $region21: #{_re_batch.1} parent=1 // pred_fallthru
      _
    // Predicated region
    $region22: #{_re_batch.1} parent=1 // pred_check
      _
    $region23: #{_re_batch.1} parent=1 // pred_check_branch
      %35 = sbr.rel (0) target = $region25
    $region24: #{_re_batch.1} parent=1 // pred_region
      _
    $region25: #{_re_batch.1} parent=1 // pred_fallthru
      _
    // Predicated region
    $region26: #{_re_batch.1} parent=1 // pred_check
      _
    $region27: #{_re_batch.1} parent=1 // pred_check_branch
      %37 = sbr.rel (0) target = $region29
    $region28: #{_re_batch.1} parent=1 // pred_region
      _
    $region29: #{_re_batch.1} parent=1 // pred_fallthru
      _
    // Predicated region
    $region30: #{_re_batch.1} parent=1 // pred_check
      _
    $region31: #{_re_batch.1} parent=1 // pred_check_branch
      %39 = sbr.rel (0) target = $region33
    $region32: #{_re_batch.1} parent=1 // pred_region
      _
    $region33: #{_re_batch.1} parent=1 // pred_fallthru
      _
    // Predicated region
    $region34: #{_re_batch.1} parent=1 // pred_check
      _
    $region35: #{_re_batch.1} parent=1 // pred_check_branch
      %41 = sbr.rel (0) target = $region37
    $region36: #{_re_batch.1} parent=1 // pred_region
      _
    $region37: #{_re_batch.1} parent=1 // pred_fallthru
      _
    // Predicated region
    $region38: #{_re_batch.1} parent=1 // pred_check
      _
    $region39: #{_re_batch.1} parent=1 // pred_check_branch
      %43 = sbr.rel (0) target = $region41
    $region40: #{_re_batch.1} parent=1 // pred_region
      _
    $region41: #{_re_batch.1} parent=1 // pred_fallthru
      _
    // Predicated region
    $region42: #{_re_batch.1} parent=1 // pred_check
      _
    $region43: #{_re_batch.1} parent=1 // pred_check_branch
      %45 = sbr.rel (0) target = $region45
    $region44: #{_re_batch.1} parent=1 // pred_region
      _
    $region45: #{_re_batch.1} parent=1 // pred_fallthru
      _
    // Predicated region
    $region46: #{_re_batch.1} parent=1 // pred_check
      _
    $region47: #{_re_batch.1} parent=1 // pred_check_branch
      %47 = sbr.rel (0) target = $region49
    $region48: #{_re_batch.1} parent=1 // pred_region
      _
    $region49: #{_re_batch.1} parent=1 // pred_fallthru
      _
    // Predicated region
    $region50: #{_re_batch.1} parent=1 // pred_check
      _
    $region51: #{_re_batch.1} parent=1 // pred_check_branch
      %49 = sbr.rel (0) target = $region53
    $region52: #{_re_batch.1} parent=1 // pred_region
      _
    $region53: #{_re_batch.1} parent=1 // pred_fallthru
      _
    // Predicated region
    $region54: #{_re_batch.1} parent=1 // pred_check
      _
    $region55: #{_re_batch.1} parent=1 // pred_check_branch
      %51 = sbr.rel (0) target = $region57
    $region56: #{_re_batch.1} parent=1 // pred_region
      _
    $region57: #{_re_batch.1} parent=1 // pred_fallthru
      _
    // Predicated region
    $region58: #{_re_batch.1} parent=1 // pred_check
      _
    $region59: #{_re_batch.1} parent=1 // pred_check_branch
      %53 = sbr.rel (0) target = $region61
    $region60: #{_re_batch.1} parent=1 // pred_region
      _
    $region61: #{_re_batch.1} parent=1 // pred_fallthru
      _
    // Predicated region
    $region62: #{_re_batch.1} parent=1 // pred_check
      _
    $region63: #{_re_batch.1} parent=1 // pred_check_branch
      %55 = sbr.rel (0) target = $region65
    $region64: #{_re_batch.1} parent=1 // pred_region
      _
    $region65: #{_re_batch.1} parent=1 // pred_fallthru
      _
    %p57 = scmp.eq.s32.totalorder 0, 0
    // Predicated region
    $region66: #{_re_batch.1} parent=1 // pred_check
      %p58 = pneg %p57
    $region67: #{_re_batch.1} parent=1 // pred_check_branch
      %60 = sbr.rel (%p58) target = $region69
    $region68: #{_re_batch.1} parent=1 // pred_region
      %vm61 = vcmask 0
      %62 = vst.msk [vmem:[#allocation2] sm:$0x1] %vm61, 0.0
    $region69: #{_re_batch.1} parent=1 // pred_fallthru
      _
    %v63 = vld [vmem:[%s0] sm:$0xf]
    %v64 = vld [vmem:[%s0 + $0x4] sm:$0xf]
    %v65 = vld [vmem:[%s0 + $0x8] sm:$0xf]
    %v66 = vld [vmem:[%s0 + $0xc] sm:$0xf]
    %v67 = vld [vmem:[%s0 + $0x10] sm:$0xf]
    %v68 = vld [vmem:[%s0 + $0x14] sm:$0xf]
    %v69 = vld [vmem:[%s0 + $0x18] sm:$0xf]
    %v70 = vld [vmem:[%s0 + $0x1c] sm:$0xf]
    %v71 = vld [vmem:[%s0 + $0x20] sm:$0xf]
    %v72 = vld [vmem:[%s0 + $0x24] sm:$0xf]
    %v73 = vld [vmem:[%s0 + $0x28] sm:$0xf]
    %v74 = vld [vmem:[%s0 + $0x2c] sm:$0xf]
    %v75 = vld [vmem:[%s0 + $0x30] sm:$0xf]
    %v76 = vld [vmem:[%s0 + $0x34] sm:$0xf]
    %v77 = vld [vmem:[%s0 + $0x38] sm:$0xf]
    %v78 = vld [vmem:[%s0 + $0x3c] sm:$0xf]
    %v79 = vld [vmem:[%s0 + $0x40] sm:$0xf]
    %v80 = vld [vmem:[%s0 + $0x44] sm:$0xf]
    %v81 = vld [vmem:[%s0 + $0x48] sm:$0xf]
    %v82 = vld [vmem:[%s0 + $0x4c] sm:$0xf]
    %v83 = vld [vmem:[%s0 + $0x50] sm:$0xf]
    %v84 = vld [vmem:[%s0 + $0x54] sm:$0xf]
    %v85 = vld [vmem:[%s0 + $0x58] sm:$0xf]
    %v86 = vld [vmem:[%s0 + $0x5c] sm:$0xf]
    %v87 = vld [vmem:[%s0 + $0x60] sm:$0xf]
    %v88 = vld [vmem:[%s0 + $0x64] sm:$0xf]
    %v89 = vld [vmem:[%s0 + $0x68] sm:$0xf]
    %v90 = vld [vmem:[%s0 + $0x6c] sm:$0xf]
    %v91 = vld [vmem:[%s0 + $0x70] sm:$0xf]
    %v92 = vld [vmem:[%s0 + $0x74] sm:$0xf]
    %v93 = vld [vmem:[%s0 + $0x78] sm:$0xf]
    %v94 = vld [vmem:[%s0 + $0x7c] sm:$0xf]
    %v95 = vld [vmem:[%s4] sm:$0xf]
    %v96 = vld [vmem:[%s4 + $0x4] sm:$0xf]
    %v97 = vld [vmem:[%s4 + $0x8] sm:$0xf]
    %v98 = vld [vmem:[%s4 + $0xc] sm:$0xf]
    %v99 = vld [vmem:[%s4 + $0x10] sm:$0xf]
    %v100 = vld [vmem:[%s4 + $0x14] sm:$0xf]
    %v101 = vld [vmem:[%s4 + $0x18] sm:$0xf]
    %v102 = vld [vmem:[%s4 + $0x1c] sm:$0xf]
    %v103 = vld [vmem:[%s5] sm:$0x1]
    %v105 = vlaneseq
    %v106 = vshrl.u32 %v105, 7
    %v107 = vsub.s32 0, %v106
    %v108 = vrot.slane %v103, %v107
    %v142 = vunpack.c.l.b16 %v63
    %v143 = vunpack.c.l.b16 %v64
    %v144 = vunpack.c.l.b16 %v65
    %v145 = vunpack.c.l.b16 %v66
    %v146 = vunpack.c.l.b16 %v67
    %v147 = vunpack.c.l.b16 %v68
    %v148 = vunpack.c.l.b16 %v69
    %v149 = vunpack.c.l.b16 %v70
    %v150 = vunpack.c.l.b16 %v71
    %v151 = vunpack.c.l.b16 %v72
    %v152 = vunpack.c.l.b16 %v73
    %v153 = vunpack.c.l.b16 %v74
    %v154 = vunpack.c.l.b16 %v75
    %v155 = vunpack.c.l.b16 %v76
    %v156 = vunpack.c.l.b16 %v77
    %v157 = vunpack.c.l.b16 %v78
    %v158 = vunpack.c.l.b16 %v79
    %v159 = vunpack.c.l.b16 %v80
    %v160 = vunpack.c.l.b16 %v81
    %v161 = vunpack.c.l.b16 %v82
    %v162 = vunpack.c.l.b16 %v83
    %v163 = vunpack.c.l.b16 %v84
    %v164 = vunpack.c.l.b16 %v85
    %v165 = vunpack.c.l.b16 %v86
    %v166 = vunpack.c.l.b16 %v87
    %v167 = vunpack.c.l.b16 %v88
    %v168 = vunpack.c.l.b16 %v89
    %v169 = vunpack.c.l.b16 %v90
    %v170 = vunpack.c.l.b16 %v91
    %v171 = vunpack.c.l.b16 %v92
    %v172 = vunpack.c.l.b16 %v93
    %v173 = vunpack.c.l.b16 %v94
    %v174 = vpack.c.b16 %v143, %v142
    %v175 = vpack.c.b16 %v145, %v144
    %v176 = vpack.c.b16 %v147, %v146
    %v177 = vpack.c.b16 %v149, %v148
    %v178 = vpack.c.b16 %v151, %v150
    %v179 = vpack.c.b16 %v153, %v152
    %v180 = vpack.c.b16 %v155, %v154
    %v181 = vpack.c.b16 %v157, %v156
    %v182 = vpack.c.b16 %v159, %v158
    %v183 = vpack.c.b16 %v161, %v160
    %v184 = vpack.c.b16 %v163, %v162
    %v185 = vpack.c.b16 %v165, %v164
    %v186 = vpack.c.b16 %v167, %v166
    %v187 = vpack.c.b16 %v169, %v168
    %v188 = vpack.c.b16 %v171, %v170
    %v189 = vpack.c.b16 %v173, %v172
    %v198 = vunpack.c.l.b16 %v95
    %v199 = vunpack.c.l.b16 %v96
    %v200 = vunpack.c.l.b16 %v97
    %v201 = vunpack.c.l.b16 %v98
    %v202 = vunpack.c.l.b16 %v99
    %v203 = vunpack.c.l.b16 %v100
    %v204 = vunpack.c.l.b16 %v101
    %v205 = vunpack.c.l.b16 %v102
    %v206 = vpack.c.b16 %v199, %v198
    %v207 = vpack.c.b16 %v201, %v200
    %v208 = vpack.c.b16 %v203, %v202
    %v209 = vpack.c.b16 %v205, %v204
    %vm214 = vcmask 523264
    %v216 = vsel %vm214, %v174, 0
    %v219 = vsel %vm214, %v175, 0
    %v222 = vsel %vm214, %v176, 0
    %v225 = vsel %vm214, %v177, 0
    %v228 = vsel %vm214, %v178, 0
    %v231 = vsel %vm214, %v179, 0
    %v234 = vsel %vm214, %v180, 0
    %v237 = vsel %vm214, %v181, 0
    %v240 = vsel %vm214, %v182, 0
    %v243 = vsel %vm214, %v183, 0
    %v246 = vsel %vm214, %v184, 0
    %v249 = vsel %vm214, %v185, 0
    %v252 = vsel %vm214, %v186, 0
    %v255 = vsel %vm214, %v187, 0
    %v258 = vsel %vm214, %v188, 0
    %v261 = vsel %vm214, %v189, 0
    %263 = vmatprep.subr.bf16.mxu0 0
    %264 = vmatpush1.bf16.msra.mxu0 %v206
    %265 = vmatprep.subr.bf16.mxu0 0
    %266 = vmatpush1.bf16.msra.mxu0 %v207
    %267 = vmatprep.subr.bf16.mxu0 0
    %268 = vmatpush1.bf16.msra.mxu0 %v208
    %269 = vmatprep.subr.bf16.mxu0 0
    %270 = vmatpush1.bf16.msra.mxu0 %v209
    %271 = vmatprep.subr.bf16.mxu0 0
    %272 = vmatpush1.bf16.msra.mxu0 0
    %273 = vmatprep.subr.bf16.mxu0 0
    %274 = vmatpush1.bf16.msra.mxu0 0
    %275 = vmatprep.subr.bf16.mxu0 0
    %276 = vmatpush1.bf16.msra.mxu0 0
    %277 = vmatprep.subr.bf16.mxu0 0
    %278 = vmatpush1.bf16.msra.mxu0 0
    %279 = vmatprep.subr.bf16.mxu0 0
    %280 = vmatpush1.bf16.msra.mxu0 0
    %281 = vmatprep.subr.bf16.mxu0 0
    %282 = vmatpush1.bf16.msra.mxu0 0
    %283 = vmatprep.subr.bf16.mxu0 0
    %284 = vmatpush1.bf16.msra.mxu0 0
    %285 = vmatprep.subr.bf16.mxu0 0
    %286 = vmatpush1.bf16.msra.mxu0 0
    %287 = vmatprep.subr.bf16.mxu0 0
    %288 = vmatpush1.bf16.msra.mxu0 0
    %289 = vmatprep.subr.bf16.mxu0 0
    %290 = vmatpush1.bf16.msra.mxu0 0
    %291 = vmatprep.subr.bf16.mxu0 0
    %292 = vmatpush1.bf16.msra.mxu0 0
    %293 = vmatprep.subr.bf16.mxu0 0
    %294 = vmatpush1.bf16.msra.mxu0 0
    %295 = vmatprep.mubr.bf16.mxu0 0
    %296 = vmatmul.mubr.bf16.gmra.mrb[0].mxu0 %v216
    %v297 = vpop.f32.mrb[0].mxu0
    %v298 = vadd.f32 %v108, %v297
    %v299 = vpop.f32.mrb[0].mxu0
    %v300 = vpop.f32.mrb[0].mxu0
    %v301 = vadd.f32 %v108, %v300
    %v302 = vpop.f32.mrb[0].mxu0
    %303 = vmatprep.mubr.bf16.mxu0 0
    %304 = vmatmul.mubr.bf16.gmra.mrb[0].mxu0 %v219
    %v305 = vpop.f32.mrb[0].mxu0
    %v306 = vadd.f32 %v108, %v305
    %v307 = vpop.f32.mrb[0].mxu0
    %v308 = vpop.f32.mrb[0].mxu0
    %v309 = vadd.f32 %v108, %v308
    %v310 = vpop.f32.mrb[0].mxu0
    %311 = vmatprep.mubr.bf16.mxu0 0
    %312 = vmatmul.mubr.bf16.gmra.mrb[0].mxu0 %v222
    %v313 = vpop.f32.mrb[0].mxu0
    %v314 = vadd.f32 %v108, %v313
    %v315 = vpop.f32.mrb[0].mxu0
    %v316 = vpop.f32.mrb[0].mxu0
    %v317 = vadd.f32 %v108, %v316
    %v318 = vpop.f32.mrb[0].mxu0
    %319 = vmatprep.mubr.bf16.mxu0 0
    %320 = vmatmul.mubr.bf16.gmra.mrb[0].mxu0 %v225
    %v321 = vpop.f32.mrb[0].mxu0
    %v322 = vadd.f32 %v108, %v321
    %v323 = vpop.f32.mrb[0].mxu0
    %v324 = vpop.f32.mrb[0].mxu0
    %v325 = vadd.f32 %v108, %v324
    %v326 = vpop.f32.mrb[0].mxu0
    %327 = vmatprep.mubr.bf16.mxu0 0
    %328 = vmatmul.mubr.bf16.gmra.mrb[0].mxu0 %v228
    %v329 = vpop.f32.mrb[0].mxu0
    %v330 = vadd.f32 %v108, %v329
    %v331 = vpop.f32.mrb[0].mxu0
    %v332 = vpop.f32.mrb[0].mxu0
    %v333 = vadd.f32 %v108, %v332
    %v334 = vpop.f32.mrb[0].mxu0
    %335 = vmatprep.mubr.bf16.mxu0 0
    %336 = vmatmul.mubr.bf16.gmra.mrb[0].mxu0 %v231
    %v337 = vpop.f32.mrb[0].mxu0
    %v338 = vadd.f32 %v108, %v337
    %v339 = vpop.f32.mrb[0].mxu0
    %v340 = vpop.f32.mrb[0].mxu0
    %v341 = vadd.f32 %v108, %v340
    %v342 = vpop.f32.mrb[0].mxu0
    %343 = vmatprep.mubr.bf16.mxu0 0
    %344 = vmatmul.mubr.bf16.gmra.mrb[0].mxu0 %v234
    %v345 = vpop.f32.mrb[0].mxu0
    %v346 = vadd.f32 %v108, %v345
    %v347 = vpop.f32.mrb[0].mxu0
    %v348 = vpop.f32.mrb[0].mxu0
    %v349 = vadd.f32 %v108, %v348
    %v350 = vpop.f32.mrb[0].mxu0
    %351 = vmatprep.mubr.bf16.mxu0 0
    %352 = vmatmul.mubr.bf16.gmra.mrb[0].mxu0 %v237
    %v353 = vpop.f32.mrb[0].mxu0
    %v354 = vadd.f32 %v108, %v353
    %v355 = vpop.f32.mrb[0].mxu0
    %v356 = vpop.f32.mrb[0].mxu0
    %v357 = vadd.f32 %v108, %v356
    %v358 = vpop.f32.mrb[0].mxu0
    %359 = vmatprep.mubr.bf16.mxu0 0
    %360 = vmatmul.mubr.bf16.gmra.mrb[0].mxu0 %v240
    %v361 = vpop.f32.mrb[0].mxu0
    %v362 = vadd.f32 %v108, %v361
    %v363 = vpop.f32.mrb[0].mxu0
    %v364 = vpop.f32.mrb[0].mxu0
    %v365 = vadd.f32 %v108, %v364
    %v366 = vpop.f32.mrb[0].mxu0
    %367 = vmatprep.mubr.bf16.mxu0 0
    %368 = vmatmul.mubr.bf16.gmra.mrb[0].mxu0 %v243
    %v369 = vpop.f32.mrb[0].mxu0
    %v370 = vadd.f32 %v108, %v369
    %v371 = vpop.f32.mrb[0].mxu0
    %v372 = vpop.f32.mrb[0].mxu0
    %v373 = vadd.f32 %v108, %v372
    %v374 = vpop.f32.mrb[0].mxu0
    %375 = vmatprep.mubr.bf16.mxu0 0
    %376 = vmatmul.mubr.bf16.gmra.mrb[0].mxu0 %v246
    %v377 = vpop.f32.mrb[0].mxu0
    %v378 = vadd.f32 %v108, %v377
    %v379 = vpop.f32.mrb[0].mxu0
    %v380 = vpop.f32.mrb[0].mxu0
    %v381 = vadd.f32 %v108, %v380
    %v382 = vpop.f32.mrb[0].mxu0
    %383 = vmatprep.mubr.bf16.mxu0 0
    %384 = vmatmul.mubr.bf16.gmra.mrb[0].mxu0 %v249
    %v385 = vpop.f32.mrb[0].mxu0
    %v386 = vadd.f32 %v108, %v385
    %v387 = vpop.f32.mrb[0].mxu0
    %v388 = vpop.f32.mrb[0].mxu0
    %v389 = vadd.f32 %v108, %v388
    %v390 = vpop.f32.mrb[0].mxu0
    %391 = vmatprep.mubr.bf16.mxu0 0
    %392 = vmatmul.mubr.bf16.gmra.mrb[0].mxu0 %v252
    %v393 = vpop.f32.mrb[0].mxu0
    %v394 = vadd.f32 %v108, %v393
    %v395 = vpop.f32.mrb[0].mxu0
    %v396 = vpop.f32.mrb[0].mxu0
    %v397 = vadd.f32 %v108, %v396
    %v398 = vpop.f32.mrb[0].mxu0
    %399 = vmatprep.mubr.bf16.mxu0 0
    %400 = vmatmul.mubr.bf16.gmra.mrb[0].mxu0 %v255
    %v401 = vpop.f32.mrb[0].mxu0
    %v402 = vadd.f32 %v108, %v401
    %v403 = vpop.f32.mrb[0].mxu0
    %v404 = vpop.f32.mrb[0].mxu0
    %v405 = vadd.f32 %v108, %v404
    %v406 = vpop.f32.mrb[0].mxu0
    %407 = vmatprep.mubr.bf16.mxu0 0
    %408 = vmatmul.mubr.bf16.gmra.mrb[0].mxu0 %v258
    %v409 = vpop.f32.mrb[0].mxu0
    %v410 = vadd.f32 %v108, %v409
    %v411 = vpop.f32.mrb[0].mxu0
    %v412 = vpop.f32.mrb[0].mxu0
    %v413 = vadd.f32 %v108, %v412
    %v414 = vpop.f32.mrb[0].mxu0
    %415 = vmatprep.mubr.bf16.mxu0 0
    %416 = vmatmul.mubr.bf16.gmra.mrb[0].mxu0 %v261
    %v417 = vpop.f32.mrb[0].mxu0
    %v418 = vadd.f32 %v108, %v417
    %v419 = vpop.f32.mrb[0].mxu0
    %v420 = vpop.f32.mrb[0].mxu0
    %v421 = vadd.f32 %v108, %v420
    %v422 = vpop.f32.mrb[0].mxu0
    %423 = vdwg.mxu0
    %v424 = vmax.f32 %v298, 0.0
    %v425 = vmax.f32 %v301, 0.0
    %v426 = vmax.f32 %v306, 0.0
    %v427 = vmax.f32 %v309, 0.0
    %v428 = vmax.f32 %v314, 0.0
    %v429 = vmax.f32 %v317, 0.0
    %v430 = vmax.f32 %v322, 0.0
    %v431 = vmax.f32 %v325, 0.0
    %v432 = vmax.f32 %v330, 0.0
    %v433 = vmax.f32 %v333, 0.0
    %v434 = vmax.f32 %v338, 0.0
    %v435 = vmax.f32 %v341, 0.0
    %v436 = vmax.f32 %v346, 0.0
    %v437 = vmax.f32 %v349, 0.0
    %v438 = vmax.f32 %v354, 0.0
    %v439 = vmax.f32 %v357, 0.0
    %v440 = vmax.f32 %v362, 0.0
    %v441 = vmax.f32 %v365, 0.0
    %v442 = vmax.f32 %v370, 0.0
    %v443 = vmax.f32 %v373, 0.0
    %v444 = vmax.f32 %v378, 0.0
    %v445 = vmax.f32 %v381, 0.0
    %v446 = vmax.f32 %v386, 0.0
    %v447 = vmax.f32 %v389, 0.0
    %v448 = vmax.f32 %v394, 0.0
    %v449 = vmax.f32 %v397, 0.0
    %v450 = vmax.f32 %v402, 0.0
    %v451 = vmax.f32 %v405, 0.0
    %v452 = vmax.f32 %v410, 0.0
    %v453 = vmax.f32 %v413, 0.0
    %v454 = vmax.f32 %v418, 0.0
    %v455 = vmax.f32 %v421, 0.0
    %v456 = vpack.c.bf16 %v425, %v424
    %v457 = vpack.c.bf16 %v427, %v426
    %v458 = vpack.c.bf16 %v429, %v428
    %v459 = vpack.c.bf16 %v431, %v430
    %v460 = vpack.c.bf16 %v433, %v432
    %v461 = vpack.c.bf16 %v435, %v434
    %v462 = vpack.c.bf16 %v437, %v436
    %v463 = vpack.c.bf16 %v439, %v438
    %v464 = vpack.c.bf16 %v441, %v440
    %v465 = vpack.c.bf16 %v443, %v442
    %v466 = vpack.c.bf16 %v445, %v444
    %v467 = vpack.c.bf16 %v447, %v446
    %v468 = vpack.c.bf16 %v449, %v448
    %v469 = vpack.c.bf16 %v451, %v450
    %v470 = vpack.c.bf16 %v453, %v452
    %v471 = vpack.c.bf16 %v455, %v454
    %v472 = vld [vmem:[%s6] sm:$0xf]
    %v473 = vld [vmem:[%s6 + $0x4] sm:$0xf]
    %v474 = vld [vmem:[%s6 + $0x8] sm:$0xf]
    %v475 = vld [vmem:[%s6 + $0xc] sm:$0xf]
    %v476 = vld [vmem:[%s7] sm:$0x1]
    %v478 = vlaneseq
    %v479 = vshrl.u32 %v478, 7
    %v480 = vsub.s32 0, %v479
    %v481 = vrot.slane %v476, %v480
    %v487 = vunpack.c.l.b16 %v472
    %v488 = vunpack.c.l.b16 %v473
    %v489 = vunpack.c.l.b16 %v474
    %v490 = vunpack.c.l.b16 %v475
    %v491 = vpack.c.b16 %v488, %v487
    %v492 = vpack.c.b16 %v490, %v489
    %vm495 = vcmask 261120
    %v497 = vsel %vm495, %v456, 0
    %v500 = vsel %vm495, %v457, 0
    %v503 = vsel %vm495, %v458, 0
    %v506 = vsel %vm495, %v459, 0
    %v509 = vsel %vm495, %v460, 0
    %v512 = vsel %vm495, %v461, 0
    %v515 = vsel %vm495, %v462, 0
    %v518 = vsel %vm495, %v463, 0
    %v521 = vsel %vm495, %v464, 0
    %v524 = vsel %vm495, %v465, 0
    %v527 = vsel %vm495, %v466, 0
    %v530 = vsel %vm495, %v467, 0
    %v533 = vsel %vm495, %v468, 0
    %v536 = vsel %vm495, %v469, 0
    %v539 = vsel %vm495, %v470, 0
    %v542 = vsel %vm495, %v471, 0
    %544 = vmatprep.subr.bf16.mxu0 0
    %545 = vmatpush1.bf16.msra.mxu0 %v491
    %546 = vmatprep.subr.bf16.mxu0 0
    %547 = vmatpush1.bf16.msra.mxu0 %v492
    %548 = vmatprep.subr.bf16.mxu0 0
    %549 = vmatpush1.bf16.msra.mxu0 0
    %550 = vmatprep.subr.bf16.mxu0 0
    %551 = vmatpush1.bf16.msra.mxu0 0
    %552 = vmatprep.subr.bf16.mxu0 0
    %553 = vmatpush1.bf16.msra.mxu0 0
    %554 = vmatprep.subr.bf16.mxu0 0
    %555 = vmatpush1.bf16.msra.mxu0 0
    %556 = vmatprep.subr.bf16.mxu0 0
    %557 = vmatpush1.bf16.msra.mxu0 0
    %558 = vmatprep.subr.bf16.mxu0 0
    %559 = vmatpush1.bf16.msra.mxu0 0
    %560 = vmatprep.subr.bf16.mxu0 0
    %561 = vmatpush1.bf16.msra.mxu0 0
    %562 = vmatprep.subr.bf16.mxu0 0
    %563 = vmatpush1.bf16.msra.mxu0 0
    %564 = vmatprep.subr.bf16.mxu0 0
    %565 = vmatpush1.bf16.msra.mxu0 0
    %566 = vmatprep.subr.bf16.mxu0 0
    %567 = vmatpush1.bf16.msra.mxu0 0
    %568 = vmatprep.subr.bf16.mxu0 0
    %569 = vmatpush1.bf16.msra.mxu0 0
    %570 = vmatprep.subr.bf16.mxu0 0
    %571 = vmatpush1.bf16.msra.mxu0 0
    %572 = vmatprep.subr.bf16.mxu0 0
    %573 = vmatpush1.bf16.msra.mxu0 0
    %574 = vmatprep.subr.bf16.mxu0 0
    %575 = vmatpush1.bf16.msra.mxu0 0
    %576 = vmatprep.mubr.bf16.mxu0 0
    %577 = vmatmul.mubr.bf16.gmra.mrb[0].mxu0 %v497
    %v578 = vpop.f32.mrb[0].mxu0
    %v579 = vadd.f32 %v481, %v578
    %v580 = vpop.f32.mrb[0].mxu0
    %v581 = vpop.f32.mrb[0].mxu0
    %v582 = vadd.f32 %v481, %v581
    %v583 = vpop.f32.mrb[0].mxu0
    %584 = vmatprep.mubr.bf16.mxu0 0
    %585 = vmatmul.mubr.bf16.gmra.mrb[0].mxu0 %v500
    %v586 = vpop.f32.mrb[0].mxu0
    %v587 = vadd.f32 %v481, %v586
    %v588 = vpop.f32.mrb[0].mxu0
    %v589 = vpop.f32.mrb[0].mxu0
    %v590 = vadd.f32 %v481, %v589
    %v591 = vpop.f32.mrb[0].mxu0
    %592 = vmatprep.mubr.bf16.mxu0 0
    %593 = vmatmul.mubr.bf16.gmra.mrb[0].mxu0 %v503
    %v594 = vpop.f32.mrb[0].mxu0
    %v595 = vadd.f32 %v481, %v594
    %v596 = vpop.f32.mrb[0].mxu0
    %v597 = vpop.f32.mrb[0].mxu0
    %v598 = vadd.f32 %v481, %v597
    %v599 = vpop.f32.mrb[0].mxu0
    %600 = vmatprep.mubr.bf16.mxu0 0
    %601 = vmatmul.mubr.bf16.gmra.mrb[0].mxu0 %v506
    %v602 = vpop.f32.mrb[0].mxu0
    %v603 = vadd.f32 %v481, %v602
    %v604 = vpop.f32.mrb[0].mxu0
    %v605 = vpop.f32.mrb[0].mxu0
    %v606 = vadd.f32 %v481, %v605
    %v607 = vpop.f32.mrb[0].mxu0
    %608 = vmatprep.mubr.bf16.mxu0 0
    %609 = vmatmul.mubr.bf16.gmra.mrb[0].mxu0 %v509
    %v610 = vpop.f32.mrb[0].mxu0
    %v611 = vadd.f32 %v481, %v610
    %v612 = vpop.f32.mrb[0].mxu0
    %v613 = vpop.f32.mrb[0].mxu0
    %v614 = vadd.f32 %v481, %v613
    %v615 = vpop.f32.mrb[0].mxu0
    %616 = vmatprep.mubr.bf16.mxu0 0
    %617 = vmatmul.mubr.bf16.gmra.mrb[0].mxu0 %v512
    %v618 = vpop.f32.mrb[0].mxu0
    %v619 = vadd.f32 %v481, %v618
    %v620 = vpop.f32.mrb[0].mxu0
    %v621 = vpop.f32.mrb[0].mxu0
    %v622 = vadd.f32 %v481, %v621
    %v623 = vpop.f32.mrb[0].mxu0
    %624 = vmatprep.mubr.bf16.mxu0 0
    %625 = vmatmul.mubr.bf16.gmra.mrb[0].mxu0 %v515
    %v626 = vpop.f32.mrb[0].mxu0
    %v627 = vadd.f32 %v481, %v626
    %v628 = vpop.f32.mrb[0].mxu0
    %v629 = vpop.f32.mrb[0].mxu0
    %v630 = vadd.f32 %v481, %v629
    %v631 = vpop.f32.mrb[0].mxu0
    %632 = vmatprep.mubr.bf16.mxu0 0
    %633 = vmatmul.mubr.bf16.gmra.mrb[0].mxu0 %v518
    %v634 = vpop.f32.mrb[0].mxu0
    %v635 = vadd.f32 %v481, %v634
    %v636 = vpop.f32.mrb[0].mxu0
    %v637 = vpop.f32.mrb[0].mxu0
    %v638 = vadd.f32 %v481, %v637
    %v639 = vpop.f32.mrb[0].mxu0
    %640 = vmatprep.mubr.bf16.mxu0 0
    %641 = vmatmul.mubr.bf16.gmra.mrb[0].mxu0 %v521
    %v642 = vpop.f32.mrb[0].mxu0
    %v643 = vadd.f32 %v481, %v642
    %v644 = vpop.f32.mrb[0].mxu0
    %v645 = vpop.f32.mrb[0].mxu0
    %v646 = vadd.f32 %v481, %v645
    %v647 = vpop.f32.mrb[0].mxu0
    %648 = vmatprep.mubr.bf16.mxu0 0
    %649 = vmatmul.mubr.bf16.gmra.mrb[0].mxu0 %v524
    %v650 = vpop.f32.mrb[0].mxu0
    %v651 = vadd.f32 %v481, %v650
    %v652 = vpop.f32.mrb[0].mxu0
    %v653 = vpop.f32.mrb[0].mxu0
    %v654 = vadd.f32 %v481, %v653
    %v655 = vpop.f32.mrb[0].mxu0
    %656 = vmatprep.mubr.bf16.mxu0 0
    %657 = vmatmul.mubr.bf16.gmra.mrb[0].mxu0 %v527
    %v658 = vpop.f32.mrb[0].mxu0
    %v659 = vadd.f32 %v481, %v658
    %v660 = vpop.f32.mrb[0].mxu0
    %v661 = vpop.f32.mrb[0].mxu0
    %v662 = vadd.f32 %v481, %v661
    %v663 = vpop.f32.mrb[0].mxu0
    %664 = vmatprep.mubr.bf16.mxu0 0
    %665 = vmatmul.mubr.bf16.gmra.mrb[0].mxu0 %v530
    %v666 = vpop.f32.mrb[0].mxu0
    %v667 = vadd.f32 %v481, %v666
    %v668 = vpop.f32.mrb[0].mxu0
    %v669 = vpop.f32.mrb[0].mxu0
    %v670 = vadd.f32 %v481, %v669
    %v671 = vpop.f32.mrb[0].mxu0
    %672 = vmatprep.mubr.bf16.mxu0 0
    %673 = vmatmul.mubr.bf16.gmra.mrb[0].mxu0 %v533
    %v674 = vpop.f32.mrb[0].mxu0
    %v675 = vadd.f32 %v481, %v674
    %v676 = vpop.f32.mrb[0].mxu0
    %v677 = vpop.f32.mrb[0].mxu0
    %v678 = vadd.f32 %v481, %v677
    %v679 = vpop.f32.mrb[0].mxu0
    %680 = vmatprep.mubr.bf16.mxu0 0
    %681 = vmatmul.mubr.bf16.gmra.mrb[0].mxu0 %v536
    %v682 = vpop.f32.mrb[0].mxu0
    %v683 = vadd.f32 %v481, %v682
    %v684 = vpop.f32.mrb[0].mxu0
    %v685 = vpop.f32.mrb[0].mxu0
    %v686 = vadd.f32 %v481, %v685
    %v687 = vpop.f32.mrb[0].mxu0
    %688 = vmatprep.mubr.bf16.mxu0 0
    %689 = vmatmul.mubr.bf16.gmra.mrb[0].mxu0 %v539
    %v690 = vpop.f32.mrb[0].mxu0
    %v691 = vadd.f32 %v481, %v690
    %v692 = vpop.f32.mrb[0].mxu0
    %v693 = vpop.f32.mrb[0].mxu0
    %v694 = vadd.f32 %v481, %v693
    %v695 = vpop.f32.mrb[0].mxu0
    %696 = vmatprep.mubr.bf16.mxu0 0
    %697 = vmatmul.mubr.bf16.gmra.mrb[0].mxu0 %v542
    %v698 = vpop.f32.mrb[0].mxu0
    %v699 = vadd.f32 %v481, %v698
    %v700 = vpop.f32.mrb[0].mxu0
    %v701 = vpop.f32.mrb[0].mxu0
    %v702 = vadd.f32 %v481, %v701
    %v703 = vpop.f32.mrb[0].mxu0
    %704 = vdwg.mxu0
    %v705 = vmax.f32 %v579, 0.0
    %v706 = vmax.f32 %v582, 0.0
    %v707 = vmax.f32 %v587, 0.0
    %v708 = vmax.f32 %v590, 0.0
    %v709 = vmax.f32 %v595, 0.0
    %v710 = vmax.f32 %v598, 0.0
    %v711 = vmax.f32 %v603, 0.0
    %v712 = vmax.f32 %v606, 0.0
    %v713 = vmax.f32 %v611, 0.0
    %v714 = vmax.f32 %v614, 0.0
    %v715 = vmax.f32 %v619, 0.0
    %v716 = vmax.f32 %v622, 0.0
    %v717 = vmax.f32 %v627, 0.0
    %v718 = vmax.f32 %v630, 0.0
    %v719 = vmax.f32 %v635, 0.0
    %v720 = vmax.f32 %v638, 0.0
    %v721 = vmax.f32 %v643, 0.0
    %v722 = vmax.f32 %v646, 0.0
    %v723 = vmax.f32 %v651, 0.0
    %v724 = vmax.f32 %v654, 0.0
    %v725 = vmax.f32 %v659, 0.0
    %v726 = vmax.f32 %v662, 0.0
    %v727 = vmax.f32 %v667, 0.0
    %v728 = vmax.f32 %v670, 0.0
    %v729 = vmax.f32 %v675, 0.0
    %v730 = vmax.f32 %v678, 0.0
    %v731 = vmax.f32 %v683, 0.0
    %v732 = vmax.f32 %v686, 0.0
    %v733 = vmax.f32 %v691, 0.0
    %v734 = vmax.f32 %v694, 0.0
    %v735 = vmax.f32 %v699, 0.0
    %v736 = vmax.f32 %v702, 0.0
    %v737 = vld [vmem:[%s1] sm:$0xf]
    %v738 = vld [vmem:[%s1 + $0x4] sm:$0xf]
    %v739 = vld [vmem:[%s1 + $0x8] sm:$0xf]
    %v740 = vld [vmem:[%s1 + $0xc] sm:$0xf]
    %v741 = vld [vmem:[%s1 + $0x10] sm:$0xf]
    %v742 = vld [vmem:[%s1 + $0x14] sm:$0xf]
    %v743 = vld [vmem:[%s1 + $0x18] sm:$0xf]
    %v744 = vld [vmem:[%s1 + $0x1c] sm:$0xf]
    %v745 = vld [vmem:[%s1 + $0x20] sm:$0xf]
    %v746 = vld [vmem:[%s1 + $0x24] sm:$0xf]
    %v747 = vld [vmem:[%s1 + $0x28] sm:$0xf]
    %v748 = vld [vmem:[%s1 + $0x2c] sm:$0xf]
    %v749 = vld [vmem:[%s1 + $0x30] sm:$0xf]
    %v750 = vld [vmem:[%s1 + $0x34] sm:$0xf]
    %v751 = vld [vmem:[%s1 + $0x38] sm:$0xf]
    %v752 = vld [vmem:[%s1 + $0x3c] sm:$0xf]
    %v753 = vld [vmem:[%s1 + $0x40] sm:$0xf]
    %v754 = vld [vmem:[%s1 + $0x44] sm:$0xf]
    %v755 = vld [vmem:[%s1 + $0x48] sm:$0xf]
    %v756 = vld [vmem:[%s1 + $0x4c] sm:$0xf]
    %v757 = vld [vmem:[%s1 + $0x50] sm:$0xf]
    %v758 = vld [vmem:[%s1 + $0x54] sm:$0xf]
    %v759 = vld [vmem:[%s1 + $0x58] sm:$0xf]
    %v760 = vld [vmem:[%s1 + $0x5c] sm:$0xf]
    %v761 = vld [vmem:[%s1 + $0x60] sm:$0xf]
    %v762 = vld [vmem:[%s1 + $0x64] sm:$0xf]
    %v763 = vld [vmem:[%s1 + $0x68] sm:$0xf]
    %v764 = vld [vmem:[%s1 + $0x6c] sm:$0xf]
    %v765 = vld [vmem:[%s1 + $0x70] sm:$0xf]
    %v766 = vld [vmem:[%s1 + $0x74] sm:$0xf]
    %v767 = vld [vmem:[%s1 + $0x78] sm:$0xf]
    %v768 = vld [vmem:[%s1 + $0x7c] sm:$0xf]
    %v769 = vld [vmem:[%s8] sm:$0xf]
    %v770 = vld [vmem:[%s8 + $0x4] sm:$0xf]
    %v771 = vld [vmem:[%s8 + $0x8] sm:$0xf]
    %v772 = vld [vmem:[%s8 + $0xc] sm:$0xf]
    %v773 = vld [vmem:[%s8 + $0x10] sm:$0xf]
    %v774 = vld [vmem:[%s8 + $0x14] sm:$0xf]
    %v775 = vld [vmem:[%s8 + $0x18] sm:$0xf]
    %v776 = vld [vmem:[%s8 + $0x1c] sm:$0xf]
    %v777 = vld [vmem:[%s9] sm:$0x1]
    %v779 = vlaneseq
    %v780 = vshrl.u32 %v779, 7
    %v781 = vsub.s32 0, %v780
    %v782 = vrot.slane %v777, %v781
    %v816 = vunpack.c.l.b16 %v737
    %v817 = vunpack.c.l.b16 %v738
    %v818 = vunpack.c.l.b16 %v739
    %v819 = vunpack.c.l.b16 %v740
    %v820 = vunpack.c.l.b16 %v741
    %v821 = vunpack.c.l.b16 %v742
    %v822 = vunpack.c.l.b16 %v743
    %v823 = vunpack.c.l.b16 %v744
    %v824 = vunpack.c.l.b16 %v745
    %v825 = vunpack.c.l.b16 %v746
    %v826 = vunpack.c.l.b16 %v747
    %v827 = vunpack.c.l.b16 %v748
    %v828 = vunpack.c.l.b16 %v749
    %v829 = vunpack.c.l.b16 %v750
    %v830 = vunpack.c.l.b16 %v751
    %v831 = vunpack.c.l.b16 %v752
    %v832 = vunpack.c.l.b16 %v753
    %v833 = vunpack.c.l.b16 %v754
    %v834 = vunpack.c.l.b16 %v755
    %v835 = vunpack.c.l.b16 %v756
    %v836 = vunpack.c.l.b16 %v757
    %v837 = vunpack.c.l.b16 %v758
    %v838 = vunpack.c.l.b16 %v759
    %v839 = vunpack.c.l.b16 %v760
    %v840 = vunpack.c.l.b16 %v761
    %v841 = vunpack.c.l.b16 %v762
    %v842 = vunpack.c.l.b16 %v763
    %v843 = vunpack.c.l.b16 %v764
    %v844 = vunpack.c.l.b16 %v765
    %v845 = vunpack.c.l.b16 %v766
    %v846 = vunpack.c.l.b16 %v767
    %v847 = vunpack.c.l.b16 %v768
    %v848 = vpack.c.b16 %v817, %v816
    %v849 = vpack.c.b16 %v819, %v818
    %v850 = vpack.c.b16 %v821, %v820
    %v851 = vpack.c.b16 %v823, %v822
    %v852 = vpack.c.b16 %v825, %v824
    %v853 = vpack.c.b16 %v827, %v826
    %v854 = vpack.c.b16 %v829, %v828
    %v855 = vpack.c.b16 %v831, %v830
    %v856 = vpack.c.b16 %v833, %v832
    %v857 = vpack.c.b16 %v835, %v834
    %v858 = vpack.c.b16 %v837, %v836
    %v859 = vpack.c.b16 %v839, %v838
    %v860 = vpack.c.b16 %v841, %v840
    %v861 = vpack.c.b16 %v843, %v842
    %v862 = vpack.c.b16 %v845, %v844
    %v863 = vpack.c.b16 %v847, %v846
    %v872 = vunpack.c.l.b16 %v769
    %v873 = vunpack.c.l.b16 %v770
    %v874 = vunpack.c.l.b16 %v771
    %v875 = vunpack.c.l.b16 %v772
    %v876 = vunpack.c.l.b16 %v773
    %v877 = vunpack.c.l.b16 %v774
    %v878 = vunpack.c.l.b16 %v775
    %v879 = vunpack.c.l.b16 %v776
    %v880 = vpack.c.b16 %v873, %v872
    %v881 = vpack.c.b16 %v875, %v874
    %v882 = vpack.c.b16 %v877, %v876
    %v883 = vpack.c.b16 %v879, %v878
    %v889 = vsel %vm214, %v848, 0
    %v892 = vsel %vm214, %v849, 0
    %v895 = vsel %vm214, %v850, 0
    %v898 = vsel %vm214, %v851, 0
    %v901 = vsel %vm214, %v852, 0
    %v904 = vsel %vm214, %v853, 0
    %v907 = vsel %vm214, %v854, 0
    %v910 = vsel %vm214, %v855, 0
    %v913 = vsel %vm214, %v856, 0
    %v916 = vsel %vm214, %v857, 0
    %v919 = vsel %vm214, %v858, 0
    %v922 = vsel %vm214, %v859, 0
    %v925 = vsel %vm214, %v860, 0
    %v928 = vsel %vm214, %v861, 0
    %v931 = vsel %vm214, %v862, 0
    %v934 = vsel %vm214, %v863, 0
    %936 = vmatprep.subr.bf16.mxu0 0
    %937 = vmatpush1.bf16.msra.mxu0 %v880
    %938 = vmatprep.subr.bf16.mxu0 0
    %939 = vmatpush1.bf16.msra.mxu0 %v881
    %940 = vmatprep.subr.bf16.mxu0 0
    %941 = vmatpush1.bf16.msra.mxu0 %v882
    %942 = vmatprep.subr.bf16.mxu0 0
    %943 = vmatpush1.bf16.msra.mxu0 %v883
    %944 = vmatprep.subr.bf16.mxu0 0
    %945 = vmatpush1.bf16.msra.mxu0 0
    %946 = vmatprep.subr.bf16.mxu0 0
    %947 = vmatpush1.bf16.msra.mxu0 0
    %948 = vmatprep.subr.bf16.mxu0 0
    %949 = vmatpush1.bf16.msra.mxu0 0
    %950 = vmatprep.subr.bf16.mxu0 0
    %951 = vmatpush1.bf16.msra.mxu0 0
    %952 = vmatprep.subr.bf16.mxu0 0
    %953 = vmatpush1.bf16.msra.mxu0 0
    %954 = vmatprep.subr.bf16.mxu0 0
    %955 = vmatpush1.bf16.msra.mxu0 0
    %956 = vmatprep.subr.bf16.mxu0 0
    %957 = vmatpush1.bf16.msra.mxu0 0
    %958 = vmatprep.subr.bf16.mxu0 0
    %959 = vmatpush1.bf16.msra.mxu0 0
    %960 = vmatprep.subr.bf16.mxu0 0
    %961 = vmatpush1.bf16.msra.mxu0 0
    %962 = vmatprep.subr.bf16.mxu0 0
    %963 = vmatpush1.bf16.msra.mxu0 0
    %964 = vmatprep.subr.bf16.mxu0 0
    %965 = vmatpush1.bf16.msra.mxu0 0
    %966 = vmatprep.subr.bf16.mxu0 0
    %967 = vmatpush1.bf16.msra.mxu0 0
    %968 = vmatprep.mubr.bf16.mxu0 0
    %969 = vmatmul.mubr.bf16.gmra.mrb[0].mxu0 %v889
    %v970 = vpop.f32.mrb[0].mxu0
    %v971 = vadd.f32 %v782, %v970
    %v972 = vpop.f32.mrb[0].mxu0
    %v973 = vpop.f32.mrb[0].mxu0
    %v974 = vadd.f32 %v782, %v973
    %v975 = vpop.f32.mrb[0].mxu0
    %976 = vmatprep.mubr.bf16.mxu0 0
    %977 = vmatmul.mubr.bf16.gmra.mrb[0].mxu0 %v892
    %v978 = vpop.f32.mrb[0].mxu0
    %v979 = vadd.f32 %v782, %v978
    %v980 = vpop.f32.mrb[0].mxu0
    %v981 = vpop.f32.mrb[0].mxu0
    %v982 = vadd.f32 %v782, %v981
    %v983 = vpop.f32.mrb[0].mxu0
    %984 = vmatprep.mubr.bf16.mxu0 0
    %985 = vmatmul.mubr.bf16.gmra.mrb[0].mxu0 %v895
    %v986 = vpop.f32.mrb[0].mxu0
    %v987 = vadd.f32 %v782, %v986
    %v988 = vpop.f32.mrb[0].mxu0
    %v989 = vpop.f32.mrb[0].mxu0
    %v990 = vadd.f32 %v782, %v989
    %v991 = vpop.f32.mrb[0].mxu0
    %992 = vmatprep.mubr.bf16.mxu0 0
    %993 = vmatmul.mubr.bf16.gmra.mrb[0].mxu0 %v898
    %v994 = vpop.f32.mrb[0].mxu0
    %v995 = vadd.f32 %v782, %v994
    %v996 = vpop.f32.mrb[0].mxu0
    %v997 = vpop.f32.mrb[0].mxu0
    %v998 = vadd.f32 %v782, %v997
    %v999 = vpop.f32.mrb[0].mxu0
    %1000 = vmatprep.mubr.bf16.mxu0 0
    %1001 = vmatmul.mubr.bf16.gmra.mrb[0].mxu0 %v901
    %v1002 = vpop.f32.mrb[0].mxu0
    %v1003 = vadd.f32 %v782, %v1002
    %v1004 = vpop.f32.mrb[0].mxu0
    %v1005 = vpop.f32.mrb[0].mxu0
    %v1006 = vadd.f32 %v782, %v1005
    %v1007 = vpop.f32.mrb[0].mxu0
    %1008 = vmatprep.mubr.bf16.mxu0 0
    %1009 = vmatmul.mubr.bf16.gmra.mrb[0].mxu0 %v904
    %v1010 = vpop.f32.mrb[0].mxu0
    %v1011 = vadd.f32 %v782, %v1010
    %v1012 = vpop.f32.mrb[0].mxu0
    %v1013 = vpop.f32.mrb[0].mxu0
    %v1014 = vadd.f32 %v782, %v1013
    %v1015 = vpop.f32.mrb[0].mxu0
    %1016 = vmatprep.mubr.bf16.mxu0 0
    %1017 = vmatmul.mubr.bf16.gmra.mrb[0].mxu0 %v907
    %v1018 = vpop.f32.mrb[0].mxu0
    %v1019 = vadd.f32 %v782, %v1018
    %v1020 = vpop.f32.mrb[0].mxu0
    %v1021 = vpop.f32.mrb[0].mxu0
    %v1022 = vadd.f32 %v782, %v1021
    %v1023 = vpop.f32.mrb[0].mxu0
    %1024 = vmatprep.mubr.bf16.mxu0 0
    %1025 = vmatmul.mubr.bf16.gmra.mrb[0].mxu0 %v910
    %v1026 = vpop.f32.mrb[0].mxu0
    %v1027 = vadd.f32 %v782, %v1026
    %v1028 = vpop.f32.mrb[0].mxu0
    %v1029 = vpop.f32.mrb[0].mxu0
    %v1030 = vadd.f32 %v782, %v1029
    %v1031 = vpop.f32.mrb[0].mxu0
    %1032 = vmatprep.mubr.bf16.mxu0 0
    %1033 = vmatmul.mubr.bf16.gmra.mrb[0].mxu0 %v913
    %v1034 = vpop.f32.mrb[0].mxu0
    %v1035 = vadd.f32 %v782, %v1034
    %v1036 = vpop.f32.mrb[0].mxu0
    %v1037 = vpop.f32.mrb[0].mxu0
    %v1038 = vadd.f32 %v782, %v1037
    %v1039 = vpop.f32.mrb[0].mxu0
    %1040 = vmatprep.mubr.bf16.mxu0 0
    %1041 = vmatmul.mubr.bf16.gmra.mrb[0].mxu0 %v916
    %v1042 = vpop.f32.mrb[0].mxu0
    %v1043 = vadd.f32 %v782, %v1042
    %v1044 = vpop.f32.mrb[0].mxu0
    %v1045 = vpop.f32.mrb[0].mxu0
    %v1046 = vadd.f32 %v782, %v1045
    %v1047 = vpop.f32.mrb[0].mxu0
    %1048 = vmatprep.mubr.bf16.mxu0 0
    %1049 = vmatmul.mubr.bf16.gmra.mrb[0].mxu0 %v919
    %v1050 = vpop.f32.mrb[0].mxu0
    %v1051 = vadd.f32 %v782, %v1050
    %v1052 = vpop.f32.mrb[0].mxu0
    %v1053 = vpop.f32.mrb[0].mxu0
    %v1054 = vadd.f32 %v782, %v1053
    %v1055 = vpop.f32.mrb[0].mxu0
    %1056 = vmatprep.mubr.bf16.mxu0 0
    %1057 = vmatmul.mubr.bf16.gmra.mrb[0].mxu0 %v922
    %v1058 = vpop.f32.mrb[0].mxu0
    %v1059 = vadd.f32 %v782, %v1058
    %v1060 = vpop.f32.mrb[0].mxu0
    %v1061 = vpop.f32.mrb[0].mxu0
    %v1062 = vadd.f32 %v782, %v1061
    %v1063 = vpop.f32.mrb[0].mxu0
    %1064 = vmatprep.mubr.bf16.mxu0 0
    %1065 = vmatmul.mubr.bf16.gmra.mrb[0].mxu0 %v925
    %v1066 = vpop.f32.mrb[0].mxu0
    %v1067 = vadd.f32 %v782, %v1066
    %v1068 = vpop.f32.mrb[0].mxu0
    %v1069 = vpop.f32.mrb[0].mxu0
    %v1070 = vadd.f32 %v782, %v1069
    %v1071 = vpop.f32.mrb[0].mxu0
    %1072 = vmatprep.mubr.bf16.mxu0 0
    %1073 = vmatmul.mubr.bf16.gmra.mrb[0].mxu0 %v928
    %v1074 = vpop.f32.mrb[0].mxu0
    %v1075 = vadd.f32 %v782, %v1074
    %v1076 = vpop.f32.mrb[0].mxu0
    %v1077 = vpop.f32.mrb[0].mxu0
    %v1078 = vadd.f32 %v782, %v1077
    %v1079 = vpop.f32.mrb[0].mxu0
    %1080 = vmatprep.mubr.bf16.mxu0 0
    %1081 = vmatmul.mubr.bf16.gmra.mrb[0].mxu0 %v931
    %v1082 = vpop.f32.mrb[0].mxu0
    %v1083 = vadd.f32 %v782, %v1082
    %v1084 = vpop.f32.mrb[0].mxu0
    %v1085 = vpop.f32.mrb[0].mxu0
    %v1086 = vadd.f32 %v782, %v1085
    %v1087 = vpop.f32.mrb[0].mxu0
    %1088 = vmatprep.mubr.bf16.mxu0 0
    %1089 = vmatmul.mubr.bf16.gmra.mrb[0].mxu0 %v934
    %v1090 = vpop.f32.mrb[0].mxu0
    %v1091 = vadd.f32 %v782, %v1090
    %v1092 = vpop.f32.mrb[0].mxu0
    %v1093 = vpop.f32.mrb[0].mxu0
    %v1094 = vadd.f32 %v782, %v1093
    %v1095 = vpop.f32.mrb[0].mxu0
    %1096 = vdwg.mxu0
    %v1097 = vmax.f32 %v971, 0.0
    %v1098 = vmax.f32 %v974, 0.0
    %v1099 = vmax.f32 %v979, 0.0
    %v1100 = vmax.f32 %v982, 0.0
    %v1101 = vmax.f32 %v987, 0.0
    %v1102 = vmax.f32 %v990, 0.0
    %v1103 = vmax.f32 %v995, 0.0
    %v1104 = vmax.f32 %v998, 0.0
    %v1105 = vmax.f32 %v1003, 0.0
    %v1106 = vmax.f32 %v1006, 0.0
    %v1107 = vmax.f32 %v1011, 0.0
    %v1108 = vmax.f32 %v1014, 0.0
    %v1109 = vmax.f32 %v1019, 0.0
    %v1110 = vmax.f32 %v1022, 0.0
    %v1111 = vmax.f32 %v1027, 0.0
    %v1112 = vmax.f32 %v1030, 0.0
    %v1113 = vmax.f32 %v1035, 0.0
    %v1114 = vmax.f32 %v1038, 0.0
    %v1115 = vmax.f32 %v1043, 0.0
    %v1116 = vmax.f32 %v1046, 0.0
    %v1117 = vmax.f32 %v1051, 0.0
    %v1118 = vmax.f32 %v1054, 0.0
    %v1119 = vmax.f32 %v1059, 0.0
    %v1120 = vmax.f32 %v1062, 0.0
    %v1121 = vmax.f32 %v1067, 0.0
    %v1122 = vmax.f32 %v1070, 0.0
    %v1123 = vmax.f32 %v1075, 0.0
    %v1124 = vmax.f32 %v1078, 0.0
    %v1125 = vmax.f32 %v1083, 0.0
    %v1126 = vmax.f32 %v1086, 0.0
    %v1127 = vmax.f32 %v1091, 0.0
    %v1128 = vmax.f32 %v1094, 0.0
    %v1129 = vpack.c.bf16 %v1098, %v1097
    %v1130 = vpack.c.bf16 %v1100, %v1099
    %v1131 = vpack.c.bf16 %v1102, %v1101
    %v1132 = vpack.c.bf16 %v1104, %v1103
    %v1133 = vpack.c.bf16 %v1106, %v1105
    %v1134 = vpack.c.bf16 %v1108, %v1107
    %v1135 = vpack.c.bf16 %v1110, %v1109
    %v1136 = vpack.c.bf16 %v1112, %v1111
    %v1137 = vpack.c.bf16 %v1114, %v1113
    %v1138 = vpack.c.bf16 %v1116, %v1115
    %v1139 = vpack.c.bf16 %v1118, %v1117
    %v1140 = vpack.c.bf16 %v1120, %v1119
    %v1141 = vpack.c.bf16 %v1122, %v1121
    %v1142 = vpack.c.bf16 %v1124, %v1123
    %v1143 = vpack.c.bf16 %v1126, %v1125
    %v1144 = vpack.c.bf16 %v1128, %v1127
    %v1145 = vld [vmem:[%s10] sm:$0xf]
    %v1146 = vld [vmem:[%s10 + $0x4] sm:$0xf]
    %v1147 = vld [vmem:[%s10 + $0x8] sm:$0xf]
    %v1148 = vld [vmem:[%s10 + $0xc] sm:$0xf]
    %v1149 = vld [vmem:[%s11] sm:$0x1]
    %v1151 = vlaneseq
    %v1152 = vshrl.u32 %v1151, 7
    %v1153 = vsub.s32 0, %v1152
    %v1154 = vrot.slane %v1149, %v1153
    %v1160 = vunpack.c.l.b16 %v1145
    %v1161 = vunpack.c.l.b16 %v1146
    %v1162 = vunpack.c.l.b16 %v1147
    %v1163 = vunpack.c.l.b16 %v1148
    %v1164 = vpack.c.b16 %v1161, %v1160
    %v1165 = vpack.c.b16 %v1163, %v1162
    %v1169 = vsel %vm495, %v1129, 0
    %v1172 = vsel %vm495, %v1130, 0
    %v1175 = vsel %vm495, %v1131, 0
    %v1178 = vsel %vm495, %v1132, 0
    %v1181 = vsel %vm495, %v1133, 0
    %v1184 = vsel %vm495, %v1134, 0
    %v1187 = vsel %vm495, %v1135, 0
    %v1190 = vsel %vm495, %v1136, 0
    %v1193 = vsel %vm495, %v1137, 0
    %v1196 = vsel %vm495, %v1138, 0
    %v1199 = vsel %vm495, %v1139, 0
    %v1202 = vsel %vm495, %v1140, 0
    %v1205 = vsel %vm495, %v1141, 0
    %v1208 = vsel %vm495, %v1142, 0
    %v1211 = vsel %vm495, %v1143, 0
    %v1214 = vsel %vm495, %v1144, 0
    %1216 = vmatprep.subr.bf16.mxu0 0
    %1217 = vmatpush1.bf16.msra.mxu0 %v1164
    %1218 = vmatprep.subr.bf16.mxu0 0
    %1219 = vmatpush1.bf16.msra.mxu0 %v1165
    %1220 = vmatprep.subr.bf16.mxu0 0
    %1221 = vmatpush1.bf16.msra.mxu0 0
    %1222 = vmatprep.subr.bf16.mxu0 0
    %1223 = vmatpush1.bf16.msra.mxu0 0
    %1224 = vmatprep.subr.bf16.mxu0 0
    %1225 = vmatpush1.bf16.msra.mxu0 0
    %1226 = vmatprep.subr.bf16.mxu0 0
    %1227 = vmatpush1.bf16.msra.mxu0 0
    %1228 = vmatprep.subr.bf16.mxu0 0
    %1229 = vmatpush1.bf16.msra.mxu0 0
    %1230 = vmatprep.subr.bf16.mxu0 0
    %1231 = vmatpush1.bf16.msra.mxu0 0
    %1232 = vmatprep.subr.bf16.mxu0 0
    %1233 = vmatpush1.bf16.msra.mxu0 0
    %1234 = vmatprep.subr.bf16.mxu0 0
    %1235 = vmatpush1.bf16.msra.mxu0 0
    %1236 = vmatprep.subr.bf16.mxu0 0
    %1237 = vmatpush1.bf16.msra.mxu0 0
    %1238 = vmatprep.subr.bf16.mxu0 0
    %1239 = vmatpush1.bf16.msra.mxu0 0
    %1240 = vmatprep.subr.bf16.mxu0 0
    %1241 = vmatpush1.bf16.msra.mxu0 0
    %1242 = vmatprep.subr.bf16.mxu0 0
    %1243 = vmatpush1.bf16.msra.mxu0 0
    %1244 = vmatprep.subr.bf16.mxu0 0
    %1245 = vmatpush1.bf16.msra.mxu0 0
    %1246 = vmatprep.subr.bf16.mxu0 0
    %1247 = vmatpush1.bf16.msra.mxu0 0
    %1248 = vmatprep.mubr.bf16.mxu0 0
    %1249 = vmatmul.mubr.bf16.gmra.mrb[0].mxu0 %v1169
    %v1250 = vpop.f32.mrb[0].mxu0
    %v1251 = vadd.f32 %v1154, %v1250
    %v1252 = vpop.f32.mrb[0].mxu0
    %v1253 = vpop.f32.mrb[0].mxu0
    %v1254 = vadd.f32 %v1154, %v1253
    %v1255 = vpop.f32.mrb[0].mxu0
    %1256 = vmatprep.mubr.bf16.mxu0 0
    %1257 = vmatmul.mubr.bf16.gmra.mrb[0].mxu0 %v1172
    %v1258 = vpop.f32.mrb[0].mxu0
    %v1259 = vadd.f32 %v1154, %v1258
    %v1260 = vpop.f32.mrb[0].mxu0
    %v1261 = vpop.f32.mrb[0].mxu0
    %v1262 = vadd.f32 %v1154, %v1261
    %v1263 = vpop.f32.mrb[0].mxu0
    %1264 = vmatprep.mubr.bf16.mxu0 0
    %1265 = vmatmul.mubr.bf16.gmra.mrb[0].mxu0 %v1175
    %v1266 = vpop.f32.mrb[0].mxu0
    %v1267 = vadd.f32 %v1154, %v1266
    %v1268 = vpop.f32.mrb[0].mxu0
    %v1269 = vpop.f32.mrb[0].mxu0
    %v1270 = vadd.f32 %v1154, %v1269
    %v1271 = vpop.f32.mrb[0].mxu0
    %1272 = vmatprep.mubr.bf16.mxu0 0
    %1273 = vmatmul.mubr.bf16.gmra.mrb[0].mxu0 %v1178
    %v1274 = vpop.f32.mrb[0].mxu0
    %v1275 = vadd.f32 %v1154, %v1274
    %v1276 = vpop.f32.mrb[0].mxu0
    %v1277 = vpop.f32.mrb[0].mxu0
    %v1278 = vadd.f32 %v1154, %v1277
    %v1279 = vpop.f32.mrb[0].mxu0
    %1280 = vmatprep.mubr.bf16.mxu0 0
    %1281 = vmatmul.mubr.bf16.gmra.mrb[0].mxu0 %v1181
    %v1282 = vpop.f32.mrb[0].mxu0
    %v1283 = vadd.f32 %v1154, %v1282
    %v1284 = vpop.f32.mrb[0].mxu0
    %v1285 = vpop.f32.mrb[0].mxu0
    %v1286 = vadd.f32 %v1154, %v1285
    %v1287 = vpop.f32.mrb[0].mxu0
    %1288 = vmatprep.mubr.bf16.mxu0 0
    %1289 = vmatmul.mubr.bf16.gmra.mrb[0].mxu0 %v1184
    %v1290 = vpop.f32.mrb[0].mxu0
    %v1291 = vadd.f32 %v1154, %v1290
    %v1292 = vpop.f32.mrb[0].mxu0
    %v1293 = vpop.f32.mrb[0].mxu0
    %v1294 = vadd.f32 %v1154, %v1293
    %v1295 = vpop.f32.mrb[0].mxu0
    %1296 = vmatprep.mubr.bf16.mxu0 0
    %1297 = vmatmul.mubr.bf16.gmra.mrb[0].mxu0 %v1187
    %v1298 = vpop.f32.mrb[0].mxu0
    %v1299 = vadd.f32 %v1154, %v1298
    %v1300 = vpop.f32.mrb[0].mxu0
    %v1301 = vpop.f32.mrb[0].mxu0
    %v1302 = vadd.f32 %v1154, %v1301
    %v1303 = vpop.f32.mrb[0].mxu0
    %1304 = vmatprep.mubr.bf16.mxu0 0
    %1305 = vmatmul.mubr.bf16.gmra.mrb[0].mxu0 %v1190
    %v1306 = vpop.f32.mrb[0].mxu0
    %v1307 = vadd.f32 %v1154, %v1306
    %v1308 = vpop.f32.mrb[0].mxu0
    %v1309 = vpop.f32.mrb[0].mxu0
    %v1310 = vadd.f32 %v1154, %v1309
    %v1311 = vpop.f32.mrb[0].mxu0
    %1312 = vmatprep.mubr.bf16.mxu0 0
    %1313 = vmatmul.mubr.bf16.gmra.mrb[0].mxu0 %v1193
    %v1314 = vpop.f32.mrb[0].mxu0
    %v1315 = vadd.f32 %v1154, %v1314
    %v1316 = vpop.f32.mrb[0].mxu0
    %v1317 = vpop.f32.mrb[0].mxu0
    %v1318 = vadd.f32 %v1154, %v1317
    %v1319 = vpop.f32.mrb[0].mxu0
    %1320 = vmatprep.mubr.bf16.mxu0 0
    %1321 = vmatmul.mubr.bf16.gmra.mrb[0].mxu0 %v1196
    %v1322 = vpop.f32.mrb[0].mxu0
    %v1323 = vadd.f32 %v1154, %v1322
    %v1324 = vpop.f32.mrb[0].mxu0
    %v1325 = vpop.f32.mrb[0].mxu0
    %v1326 = vadd.f32 %v1154, %v1325
    %v1327 = vpop.f32.mrb[0].mxu0
    %1328 = vmatprep.mubr.bf16.mxu0 0
    %1329 = vmatmul.mubr.bf16.gmra.mrb[0].mxu0 %v1199
    %v1330 = vpop.f32.mrb[0].mxu0
    %v1331 = vadd.f32 %v1154, %v1330
    %v1332 = vpop.f32.mrb[0].mxu0
    %v1333 = vpop.f32.mrb[0].mxu0
    %v1334 = vadd.f32 %v1154, %v1333
    %v1335 = vpop.f32.mrb[0].mxu0
    %1336 = vmatprep.mubr.bf16.mxu0 0
    %1337 = vmatmul.mubr.bf16.gmra.mrb[0].mxu0 %v1202
    %v1338 = vpop.f32.mrb[0].mxu0
    %v1339 = vadd.f32 %v1154, %v1338
    %v1340 = vpop.f32.mrb[0].mxu0
    %v1341 = vpop.f32.mrb[0].mxu0
    %v1342 = vadd.f32 %v1154, %v1341
    %v1343 = vpop.f32.mrb[0].mxu0
    %1344 = vmatprep.mubr.bf16.mxu0 0
    %1345 = vmatmul.mubr.bf16.gmra.mrb[0].mxu0 %v1205
    %v1346 = vpop.f32.mrb[0].mxu0
    %v1347 = vadd.f32 %v1154, %v1346
    %v1348 = vpop.f32.mrb[0].mxu0
    %v1349 = vpop.f32.mrb[0].mxu0
    %v1350 = vadd.f32 %v1154, %v1349
    %v1351 = vpop.f32.mrb[0].mxu0
    %1352 = vmatprep.mubr.bf16.mxu0 0
    %1353 = vmatmul.mubr.bf16.gmra.mrb[0].mxu0 %v1208
    %v1354 = vpop.f32.mrb[0].mxu0
    %v1355 = vadd.f32 %v1154, %v1354
    %v1356 = vpop.f32.mrb[0].mxu0
    %v1357 = vpop.f32.mrb[0].mxu0
    %v1358 = vadd.f32 %v1154, %v1357
    %v1359 = vpop.f32.mrb[0].mxu0
    %1360 = vmatprep.mubr.bf16.mxu0 0
    %1361 = vmatmul.mubr.bf16.gmra.mrb[0].mxu0 %v1211
    %v1362 = vpop.f32.mrb[0].mxu0
    %v1363 = vadd.f32 %v1154, %v1362
    %v1364 = vpop.f32.mrb[0].mxu0
    %v1365 = vpop.f32.mrb[0].mxu0
    %v1366 = vadd.f32 %v1154, %v1365
    %v1367 = vpop.f32.mrb[0].mxu0
    %1368 = vmatprep.mubr.bf16.mxu0 0
    %1369 = vmatmul.mubr.bf16.gmra.mrb[0].mxu0 %v1214
    %v1370 = vpop.f32.mrb[0].mxu0
    %v1371 = vadd.f32 %v1154, %v1370
    %v1372 = vpop.f32.mrb[0].mxu0
    %v1373 = vpop.f32.mrb[0].mxu0
    %v1374 = vadd.f32 %v1154, %v1373
    %v1375 = vpop.f32.mrb[0].mxu0
    %1376 = vdwg.mxu0
    %v1377 = vmax.f32 %v1251, 0.0
    %v1378 = vmax.f32 %v1254, 0.0
    %v1379 = vmax.f32 %v1259, 0.0
    %v1380 = vmax.f32 %v1262, 0.0
    %v1381 = vmax.f32 %v1267, 0.0
    %v1382 = vmax.f32 %v1270, 0.0
    %v1383 = vmax.f32 %v1275, 0.0
    %v1384 = vmax.f32 %v1278, 0.0
    %v1385 = vmax.f32 %v1283, 0.0
    %v1386 = vmax.f32 %v1286, 0.0
    %v1387 = vmax.f32 %v1291, 0.0
    %v1388 = vmax.f32 %v1294, 0.0
    %v1389 = vmax.f32 %v1299, 0.0
    %v1390 = vmax.f32 %v1302, 0.0
    %v1391 = vmax.f32 %v1307, 0.0
    %v1392 = vmax.f32 %v1310, 0.0
    %v1393 = vmax.f32 %v1315, 0.0
    %v1394 = vmax.f32 %v1318, 0.0
    %v1395 = vmax.f32 %v1323, 0.0
    %v1396 = vmax.f32 %v1326, 0.0
    %v1397 = vmax.f32 %v1331, 0.0
    %v1398 = vmax.f32 %v1334, 0.0
    %v1399 = vmax.f32 %v1339, 0.0
    %v1400 = vmax.f32 %v1342, 0.0
    %v1401 = vmax.f32 %v1347, 0.0
    %v1402 = vmax.f32 %v1350, 0.0
    %v1403 = vmax.f32 %v1355, 0.0
    %v1404 = vmax.f32 %v1358, 0.0
    %v1405 = vmax.f32 %v1363, 0.0
    %v1406 = vmax.f32 %v1366, 0.0
    %v1407 = vmax.f32 %v1371, 0.0
    %v1408 = vmax.f32 %v1374, 0.0
    %v1409 = vpack.c.bf16 %v706, %v705
    %v1410 = vpack.c.bf16 %v708, %v707
    %v1411 = vpack.c.bf16 %v710, %v709
    %v1412 = vpack.c.bf16 %v712, %v711
    %v1413 = vpack.c.bf16 %v714, %v713
    %v1414 = vpack.c.bf16 %v716, %v715
    %v1415 = vpack.c.bf16 %v718, %v717
    %v1416 = vpack.c.bf16 %v720, %v719
    %v1417 = vpack.c.bf16 %v722, %v721
    %v1418 = vpack.c.bf16 %v724, %v723
    %v1419 = vpack.c.bf16 %v726, %v725
    %v1420 = vpack.c.bf16 %v728, %v727
    %v1421 = vpack.c.bf16 %v730, %v729
    %v1422 = vpack.c.bf16 %v732, %v731
    %v1423 = vpack.c.bf16 %v734, %v733
    %v1424 = vpack.c.bf16 %v736, %v735
    %v1425 = vld [vmem:[%s12] sm:$0xf]
    %v1426 = vld [vmem:[%s12 + $0x4] sm:$0xf]
    %v1429 = vunpack.c.l.b16 %v1425
    %v1430 = vunpack.c.l.b16 %v1426
    %v1431 = vpack.c.b16 %v1430, %v1429
    %vm1433 = vcmask 130048
    %v1435 = vsel %vm1433, %v1409, 0
    %v1438 = vsel %vm1433, %v1410, 0
    %v1441 = vsel %vm1433, %v1411, 0
    %v1444 = vsel %vm1433, %v1412, 0
    %v1447 = vsel %vm1433, %v1413, 0
    %v1450 = vsel %vm1433, %v1414, 0
    %v1453 = vsel %vm1433, %v1415, 0
    %v1456 = vsel %vm1433, %v1416, 0
    %v1459 = vsel %vm1433, %v1417, 0
    %v1462 = vsel %vm1433, %v1418, 0
    %v1465 = vsel %vm1433, %v1419, 0
    %v1468 = vsel %vm1433, %v1420, 0
    %v1471 = vsel %vm1433, %v1421, 0
    %v1474 = vsel %vm1433, %v1422, 0
    %v1477 = vsel %vm1433, %v1423, 0
    %v1480 = vsel %vm1433, %v1424, 0
    %1482 = vmatprep.subr.bf16.mxu0 0
    %1483 = vmatpush1.bf16.msra.mxu0 %v1431
    %1484 = vmatprep.subr.bf16.mxu0 0
    %1485 = vmatpush1.bf16.msra.mxu0 0
    %1486 = vmatprep.subr.bf16.mxu0 0
    %1487 = vmatpush1.bf16.msra.mxu0 0
    %1488 = vmatprep.subr.bf16.mxu0 0
    %1489 = vmatpush1.bf16.msra.mxu0 0
    %1490 = vmatprep.subr.bf16.mxu0 0
    %1491 = vmatpush1.bf16.msra.mxu0 0
    %1492 = vmatprep.subr.bf16.mxu0 0
    %1493 = vmatpush1.bf16.msra.mxu0 0
    %1494 = vmatprep.subr.bf16.mxu0 0
    %1495 = vmatpush1.bf16.msra.mxu0 0
    %1496 = vmatprep.subr.bf16.mxu0 0
    %1497 = vmatpush1.bf16.msra.mxu0 0
    %1498 = vmatprep.subr.bf16.mxu0 0
    %1499 = vmatpush1.bf16.msra.mxu0 0
    %1500 = vmatprep.subr.bf16.mxu0 0
    %1501 = vmatpush1.bf16.msra.mxu0 0
    %1502 = vmatprep.subr.bf16.mxu0 0
    %1503 = vmatpush1.bf16.msra.mxu0 0
    %1504 = vmatprep.subr.bf16.mxu0 0
    %1505 = vmatpush1.bf16.msra.mxu0 0
    %1506 = vmatprep.subr.bf16.mxu0 0
    %1507 = vmatpush1.bf16.msra.mxu0 0
    %1508 = vmatprep.subr.bf16.mxu0 0
    %1509 = vmatpush1.bf16.msra.mxu0 0
    %1510 = vmatprep.subr.bf16.mxu0 0
    %1511 = vmatpush1.bf16.msra.mxu0 0
    %1512 = vmatprep.subr.bf16.mxu0 0
    %1513 = vmatpush1.bf16.msra.mxu0 0
    %1514 = vmatprep.mubr.bf16.mxu0 0
    %1515 = vmatmul.mubr.bf16.gmra.mrb[0].mxu0 %v1435
    %v1516 = vpop.f32.mrb[0].mxu0
    %v1517 = vadd.f32 0.0, %v1516
    %v1518 = vpop.f32.mrb[0].mxu0
    %v1519 = vpop.f32.mrb[0].mxu0
    %v1520 = vadd.f32 0.0, %v1519
    %v1521 = vpop.f32.mrb[0].mxu0
    %1522 = vmatprep.mubr.bf16.mxu0 0
    %1523 = vmatmul.mubr.bf16.gmra.mrb[0].mxu0 %v1438
    %v1524 = vpop.f32.mrb[0].mxu0
    %v1525 = vadd.f32 0.0, %v1524
    %v1526 = vpop.f32.mrb[0].mxu0
    %v1527 = vpop.f32.mrb[0].mxu0
    %v1528 = vadd.f32 0.0, %v1527
    %v1529 = vpop.f32.mrb[0].mxu0
    %1530 = vmatprep.mubr.bf16.mxu0 0
    %1531 = vmatmul.mubr.bf16.gmra.mrb[0].mxu0 %v1441
    %v1532 = vpop.f32.mrb[0].mxu0
    %v1533 = vadd.f32 0.0, %v1532
    %v1534 = vpop.f32.mrb[0].mxu0
    %v1535 = vpop.f32.mrb[0].mxu0
    %v1536 = vadd.f32 0.0, %v1535
    %v1537 = vpop.f32.mrb[0].mxu0
    %1538 = vmatprep.mubr.bf16.mxu0 0
    %1539 = vmatmul.mubr.bf16.gmra.mrb[0].mxu0 %v1444
    %v1540 = vpop.f32.mrb[0].mxu0
    %v1541 = vadd.f32 0.0, %v1540
    %v1542 = vpop.f32.mrb[0].mxu0
    %v1543 = vpop.f32.mrb[0].mxu0
    %v1544 = vadd.f32 0.0, %v1543
    %v1545 = vpop.f32.mrb[0].mxu0
    %1546 = vmatprep.mubr.bf16.mxu0 0
    %1547 = vmatmul.mubr.bf16.gmra.mrb[0].mxu0 %v1447
    %v1548 = vpop.f32.mrb[0].mxu0
    %v1549 = vadd.f32 0.0, %v1548
    %v1550 = vpop.f32.mrb[0].mxu0
    %v1551 = vpop.f32.mrb[0].mxu0
    %v1552 = vadd.f32 0.0, %v1551
    %v1553 = vpop.f32.mrb[0].mxu0
    %1554 = vmatprep.mubr.bf16.mxu0 0
    %1555 = vmatmul.mubr.bf16.gmra.mrb[0].mxu0 %v1450
    %v1556 = vpop.f32.mrb[0].mxu0
    %v1557 = vadd.f32 0.0, %v1556
    %v1558 = vpop.f32.mrb[0].mxu0
    %v1559 = vpop.f32.mrb[0].mxu0
    %v1560 = vadd.f32 0.0, %v1559
    %v1561 = vpop.f32.mrb[0].mxu0
    %1562 = vmatprep.mubr.bf16.mxu0 0
    %1563 = vmatmul.mubr.bf16.gmra.mrb[0].mxu0 %v1453
    %v1564 = vpop.f32.mrb[0].mxu0
    %v1565 = vadd.f32 0.0, %v1564
    %v1566 = vpop.f32.mrb[0].mxu0
    %v1567 = vpop.f32.mrb[0].mxu0
    %v1568 = vadd.f32 0.0, %v1567
    %v1569 = vpop.f32.mrb[0].mxu0
    %1570 = vmatprep.mubr.bf16.mxu0 0
    %1571 = vmatmul.mubr.bf16.gmra.mrb[0].mxu0 %v1456
    %v1572 = vpop.f32.mrb[0].mxu0
    %v1573 = vadd.f32 0.0, %v1572
    %v1574 = vpop.f32.mrb[0].mxu0
    %v1575 = vpop.f32.mrb[0].mxu0
    %v1576 = vadd.f32 0.0, %v1575
    %v1577 = vpop.f32.mrb[0].mxu0
    %1578 = vmatprep.mubr.bf16.mxu0 0
    %1579 = vmatmul.mubr.bf16.gmra.mrb[0].mxu0 %v1459
    %v1580 = vpop.f32.mrb[0].mxu0
    %v1581 = vadd.f32 0.0, %v1580
    %v1582 = vpop.f32.mrb[0].mxu0
    %v1583 = vpop.f32.mrb[0].mxu0
    %v1584 = vadd.f32 0.0, %v1583
    %v1585 = vpop.f32.mrb[0].mxu0
    %1586 = vmatprep.mubr.bf16.mxu0 0
    %1587 = vmatmul.mubr.bf16.gmra.mrb[0].mxu0 %v1462
    %v1588 = vpop.f32.mrb[0].mxu0
    %v1589 = vadd.f32 0.0, %v1588
    %v1590 = vpop.f32.mrb[0].mxu0
    %v1591 = vpop.f32.mrb[0].mxu0
    %v1592 = vadd.f32 0.0, %v1591
    %v1593 = vpop.f32.mrb[0].mxu0
    %1594 = vmatprep.mubr.bf16.mxu0 0
    %1595 = vmatmul.mubr.bf16.gmra.mrb[0].mxu0 %v1465
    %v1596 = vpop.f32.mrb[0].mxu0
    %v1597 = vadd.f32 0.0, %v1596
    %v1598 = vpop.f32.mrb[0].mxu0
    %v1599 = vpop.f32.mrb[0].mxu0
    %v1600 = vadd.f32 0.0, %v1599
    %v1601 = vpop.f32.mrb[0].mxu0
    %1602 = vmatprep.mubr.bf16.mxu0 0
    %1603 = vmatmul.mubr.bf16.gmra.mrb[0].mxu0 %v1468
    %v1604 = vpop.f32.mrb[0].mxu0
    %v1605 = vadd.f32 0.0, %v1604
    %v1606 = vpop.f32.mrb[0].mxu0
    %v1607 = vpop.f32.mrb[0].mxu0
    %v1608 = vadd.f32 0.0, %v1607
    %v1609 = vpop.f32.mrb[0].mxu0
    %1610 = vmatprep.mubr.bf16.mxu0 0
    %1611 = vmatmul.mubr.bf16.gmra.mrb[0].mxu0 %v1471
    %v1612 = vpop.f32.mrb[0].mxu0
    %v1613 = vadd.f32 0.0, %v1612
    %v1614 = vpop.f32.mrb[0].mxu0
    %v1615 = vpop.f32.mrb[0].mxu0
    %v1616 = vadd.f32 0.0, %v1615
    %v1617 = vpop.f32.mrb[0].mxu0
    %1618 = vmatprep.mubr.bf16.mxu0 0
    %1619 = vmatmul.mubr.bf16.gmra.mrb[0].mxu0 %v1474
    %v1620 = vpop.f32.mrb[0].mxu0
    %v1621 = vadd.f32 0.0, %v1620
    %v1622 = vpop.f32.mrb[0].mxu0
    %v1623 = vpop.f32.mrb[0].mxu0
    %v1624 = vadd.f32 0.0, %v1623
    %v1625 = vpop.f32.mrb[0].mxu0
    %1626 = vmatprep.mubr.bf16.mxu0 0
    %1627 = vmatmul.mubr.bf16.gmra.mrb[0].mxu0 %v1477
    %v1628 = vpop.f32.mrb[0].mxu0
    %v1629 = vadd.f32 0.0, %v1628
    %v1630 = vpop.f32.mrb[0].mxu0
    %v1631 = vpop.f32.mrb[0].mxu0
    %v1632 = vadd.f32 0.0, %v1631
    %v1633 = vpop.f32.mrb[0].mxu0
    %1634 = vmatprep.mubr.bf16.mxu0 0
    %1635 = vmatmul.mubr.bf16.gmra.mrb[0].mxu0 %v1480
    %v1636 = vpop.f32.mrb[0].mxu0
    %v1637 = vadd.f32 0.0, %v1636
    %v1638 = vpop.f32.mrb[0].mxu0
    %v1639 = vpop.f32.mrb[0].mxu0
    %v1640 = vadd.f32 0.0, %v1639
    %v1641 = vpop.f32.mrb[0].mxu0
    %1642 = vdwg.mxu0
    %v1643 = vmul.f32 %v1517, %v1377
    %v1644 = vmul.f32 %v1520, %v1378
    %v1645 = vmul.f32 %v1525, %v1379
    %v1646 = vmul.f32 %v1528, %v1380
    %v1647 = vmul.f32 %v1533, %v1381
    %v1648 = vmul.f32 %v1536, %v1382
    %v1649 = vmul.f32 %v1541, %v1383
    %v1650 = vmul.f32 %v1544, %v1384
    %v1651 = vmul.f32 %v1549, %v1385
    %v1652 = vmul.f32 %v1552, %v1386
    %v1653 = vmul.f32 %v1557, %v1387
    %v1654 = vmul.f32 %v1560, %v1388
    %v1655 = vmul.f32 %v1565, %v1389
    %v1656 = vmul.f32 %v1568, %v1390
    %v1657 = vmul.f32 %v1573, %v1391
    %v1658 = vmul.f32 %v1576, %v1392
    %v1659 = vmul.f32 %v1581, %v1393
    %v1660 = vmul.f32 %v1584, %v1394
    %v1661 = vmul.f32 %v1589, %v1395
    %v1662 = vmul.f32 %v1592, %v1396
    %v1663 = vmul.f32 %v1597, %v1397
    %v1664 = vmul.f32 %v1600, %v1398
    %v1665 = vmul.f32 %v1605, %v1399
    %v1666 = vmul.f32 %v1608, %v1400
    %v1667 = vmul.f32 %v1613, %v1401
    %v1668 = vmul.f32 %v1616, %v1402
    %v1669 = vmul.f32 %v1621, %v1403
    %v1670 = vmul.f32 %v1624, %v1404
    %v1671 = vmul.f32 %v1629, %v1405
    %v1672 = vmul.f32 %v1632, %v1406
    %v1673 = vmul.f32 %v1637, %v1407
    %v1674 = vmul.f32 %v1640, %v1408
    %v1675 = vsel %vm1433, %v1643, 0.0
    %1676 = vadd.xlane.f32.xlu0 %v1675
    %v1677 = vpop.xlane.xlu0 %1676
    %v1678 = vsel %vm1433, %v1644, 0.0
    %1679 = vadd.xlane.f32.xlu0 %v1678
    %v1680 = vpop.xlane.xlu0 %1679
    %v1681 = vsel %vm1433, %v1645, 0.0
    %1682 = vadd.xlane.f32.xlu0 %v1681
    %v1683 = vpop.xlane.xlu0 %1682
    %v1684 = vsel %vm1433, %v1646, 0.0
    %1685 = vadd.xlane.f32.xlu0 %v1684
    %v1686 = vpop.xlane.xlu0 %1685
    %v1687 = vsel %vm1433, %v1647, 0.0
    %1688 = vadd.xlane.f32.xlu0 %v1687
    %v1689 = vpop.xlane.xlu0 %1688
    %v1690 = vsel %vm1433, %v1648, 0.0
    %1691 = vadd.xlane.f32.xlu0 %v1690
    %v1692 = vpop.xlane.xlu0 %1691
    %v1693 = vsel %vm1433, %v1649, 0.0
    %1694 = vadd.xlane.f32.xlu0 %v1693
    %v1695 = vpop.xlane.xlu0 %1694
    %v1696 = vsel %vm1433, %v1650, 0.0
    %1697 = vadd.xlane.f32.xlu0 %v1696
    %v1698 = vpop.xlane.xlu0 %1697
    %v1699 = vsel %vm1433, %v1651, 0.0
    %1700 = vadd.xlane.f32.xlu0 %v1699
    %v1701 = vpop.xlane.xlu0 %1700
    %v1702 = vsel %vm1433, %v1652, 0.0
    %1703 = vadd.xlane.f32.xlu0 %v1702
    %v1704 = vpop.xlane.xlu0 %1703
    %v1705 = vsel %vm1433, %v1653, 0.0
    %1706 = vadd.xlane.f32.xlu0 %v1705
    %v1707 = vpop.xlane.xlu0 %1706
    %v1708 = vsel %vm1433, %v1654, 0.0
    %1709 = vadd.xlane.f32.xlu0 %v1708
    %v1710 = vpop.xlane.xlu0 %1709
    %v1711 = vsel %vm1433, %v1655, 0.0
    %1712 = vadd.xlane.f32.xlu0 %v1711
    %v1713 = vpop.xlane.xlu0 %1712
    %v1714 = vsel %vm1433, %v1656, 0.0
    %1715 = vadd.xlane.f32.xlu0 %v1714
    %v1716 = vpop.xlane.xlu0 %1715
    %v1717 = vsel %vm1433, %v1657, 0.0
    %1718 = vadd.xlane.f32.xlu0 %v1717
    %v1719 = vpop.xlane.xlu0 %1718
    %v1720 = vsel %vm1433, %v1658, 0.0
    %1721 = vadd.xlane.f32.xlu0 %v1720
    %v1722 = vpop.xlane.xlu0 %1721
    %v1723 = vsel %vm1433, %v1659, 0.0
    %1724 = vadd.xlane.f32.xlu0 %v1723
    %v1725 = vpop.xlane.xlu0 %1724
    %v1726 = vsel %vm1433, %v1660, 0.0
    %1727 = vadd.xlane.f32.xlu0 %v1726
    %v1728 = vpop.xlane.xlu0 %1727
    %v1729 = vsel %vm1433, %v1661, 0.0
    %1730 = vadd.xlane.f32.xlu0 %v1729
    %v1731 = vpop.xlane.xlu0 %1730
    %v1732 = vsel %vm1433, %v1662, 0.0
    %1733 = vadd.xlane.f32.xlu0 %v1732
    %v1734 = vpop.xlane.xlu0 %1733
    %v1735 = vsel %vm1433, %v1663, 0.0
    %1736 = vadd.xlane.f32.xlu0 %v1735
    %v1737 = vpop.xlane.xlu0 %1736
    %v1738 = vsel %vm1433, %v1664, 0.0
    %1739 = vadd.xlane.f32.xlu0 %v1738
    %v1740 = vpop.xlane.xlu0 %1739
    %v1741 = vsel %vm1433, %v1665, 0.0
    %1742 = vadd.xlane.f32.xlu0 %v1741
    %v1743 = vpop.xlane.xlu0 %1742
    %v1744 = vsel %vm1433, %v1666, 0.0
    %1745 = vadd.xlane.f32.xlu0 %v1744
    %v1746 = vpop.xlane.xlu0 %1745
    %v1747 = vsel %vm1433, %v1667, 0.0
    %1748 = vadd.xlane.f32.xlu0 %v1747
    %v1749 = vpop.xlane.xlu0 %1748
    %v1750 = vsel %vm1433, %v1668, 0.0
    %1751 = vadd.xlane.f32.xlu0 %v1750
    %v1752 = vpop.xlane.xlu0 %1751
    %v1753 = vsel %vm1433, %v1669, 0.0
    %1754 = vadd.xlane.f32.xlu0 %v1753
    %v1755 = vpop.xlane.xlu0 %1754
    %v1756 = vsel %vm1433, %v1670, 0.0
    %1757 = vadd.xlane.f32.xlu0 %v1756
    %v1758 = vpop.xlane.xlu0 %1757
    %v1759 = vsel %vm1433, %v1671, 0.0
    %1760 = vadd.xlane.f32.xlu0 %v1759
    %v1761 = vpop.xlane.xlu0 %1760
    %v1762 = vsel %vm1433, %v1672, 0.0
    %1763 = vadd.xlane.f32.xlu0 %v1762
    %v1764 = vpop.xlane.xlu0 %1763
    %v1765 = vsel %vm1433, %v1673, 0.0
    %1766 = vadd.xlane.f32.xlu0 %v1765
    %v1767 = vpop.xlane.xlu0 %1766
    %v1768 = vsel %vm1433, %v1674, 0.0
    %1769 = vadd.xlane.f32.xlu0 %v1768
    %v1770 = vpop.xlane.xlu0 %1769
    %1803 = vrot.lane.b32.xlu0 %v1377, 16
    %v1804 = vpop.permute.xlu0 %1803
    %1805 = vrot.lane.b32.xlu0 %v1378, 16
    %v1806 = vpop.permute.xlu0 %1805
    %1807 = vrot.lane.b32.xlu0 %v1379, 16
    %v1808 = vpop.permute.xlu0 %1807
    %1809 = vrot.lane.b32.xlu0 %v1380, 16
    %v1810 = vpop.permute.xlu0 %1809
    %1811 = vrot.lane.b32.xlu0 %v1381, 16
    %v1812 = vpop.permute.xlu0 %1811
    %1813 = vrot.lane.b32.xlu0 %v1382, 16
    %v1814 = vpop.permute.xlu0 %1813
    %1815 = vrot.lane.b32.xlu0 %v1383, 16
    %v1816 = vpop.permute.xlu0 %1815
    %1817 = vrot.lane.b32.xlu0 %v1384, 16
    %v1818 = vpop.permute.xlu0 %1817
    %1819 = vrot.lane.b32.xlu0 %v1385, 16
    %v1820 = vpop.permute.xlu0 %1819
    %1821 = vrot.lane.b32.xlu0 %v1386, 16
    %v1822 = vpop.permute.xlu0 %1821
    %1823 = vrot.lane.b32.xlu0 %v1387, 16
    %v1824 = vpop.permute.xlu0 %1823
    %1825 = vrot.lane.b32.xlu0 %v1388, 16
    %v1826 = vpop.permute.xlu0 %1825
    %1827 = vrot.lane.b32.xlu0 %v1389, 16
    %v1828 = vpop.permute.xlu0 %1827
    %1829 = vrot.lane.b32.xlu0 %v1390, 16
    %v1830 = vpop.permute.xlu0 %1829
    %1831 = vrot.lane.b32.xlu0 %v1391, 16
    %v1832 = vpop.permute.xlu0 %1831
    %1833 = vrot.lane.b32.xlu0 %v1392, 16
    %v1834 = vpop.permute.xlu0 %1833
    %1835 = vrot.lane.b32.xlu0 %v1393, 16
    %v1836 = vpop.permute.xlu0 %1835
    %1837 = vrot.lane.b32.xlu0 %v1394, 16
    %v1838 = vpop.permute.xlu0 %1837
    %1839 = vrot.lane.b32.xlu0 %v1395, 16
    %v1840 = vpop.permute.xlu0 %1839
    %1841 = vrot.lane.b32.xlu0 %v1396, 16
    %v1842 = vpop.permute.xlu0 %1841
    %1843 = vrot.lane.b32.xlu0 %v1397, 16
    %v1844 = vpop.permute.xlu0 %1843
    %1845 = vrot.lane.b32.xlu0 %v1398, 16
    %v1846 = vpop.permute.xlu0 %1845
    %1847 = vrot.lane.b32.xlu0 %v1399, 16
    %v1848 = vpop.permute.xlu0 %1847
    %1849 = vrot.lane.b32.xlu0 %v1400, 16
    %v1850 = vpop.permute.xlu0 %1849
    %1851 = vrot.lane.b32.xlu0 %v1401, 16
    %v1852 = vpop.permute.xlu0 %1851
    %1853 = vrot.lane.b32.xlu0 %v1402, 16
    %v1854 = vpop.permute.xlu0 %1853
    %1855 = vrot.lane.b32.xlu0 %v1403, 16
    %v1856 = vpop.permute.xlu0 %1855
    %1857 = vrot.lane.b32.xlu0 %v1404, 16
    %v1858 = vpop.permute.xlu0 %1857
    %1859 = vrot.lane.b32.xlu0 %v1405, 16
    %v1860 = vpop.permute.xlu0 %1859
    %1861 = vrot.lane.b32.xlu0 %v1406, 16
    %v1862 = vpop.permute.xlu0 %1861
    %1863 = vrot.lane.b32.xlu0 %v1407, 16
    %v1864 = vpop.permute.xlu0 %1863
    %1865 = vrot.lane.b32.xlu0 %v1408, 16
    %v1866 = vpop.permute.xlu0 %1865
    %v1899 = vmul.f32 %v1517, %v1804
    %v1900 = vmul.f32 %v1520, %v1806
    %v1901 = vmul.f32 %v1525, %v1808
    %v1902 = vmul.f32 %v1528, %v1810
    %v1903 = vmul.f32 %v1533, %v1812
    %v1904 = vmul.f32 %v1536, %v1814
    %v1905 = vmul.f32 %v1541, %v1816
    %v1906 = vmul.f32 %v1544, %v1818
    %v1907 = vmul.f32 %v1549, %v1820
    %v1908 = vmul.f32 %v1552, %v1822
    %v1909 = vmul.f32 %v1557, %v1824
    %v1910 = vmul.f32 %v1560, %v1826
    %v1911 = vmul.f32 %v1565, %v1828
    %v1912 = vmul.f32 %v1568, %v1830
    %v1913 = vmul.f32 %v1573, %v1832
    %v1914 = vmul.f32 %v1576, %v1834
    %v1915 = vmul.f32 %v1581, %v1836
    %v1916 = vmul.f32 %v1584, %v1838
    %v1917 = vmul.f32 %v1589, %v1840
    %v1918 = vmul.f32 %v1592, %v1842
    %v1919 = vmul.f32 %v1597, %v1844
    %v1920 = vmul.f32 %v1600, %v1846
    %v1921 = vmul.f32 %v1605, %v1848
    %v1922 = vmul.f32 %v1608, %v1850
    %v1923 = vmul.f32 %v1613, %v1852
    %v1924 = vmul.f32 %v1616, %v1854
    %v1925 = vmul.f32 %v1621, %v1856
    %v1926 = vmul.f32 %v1624, %v1858
    %v1927 = vmul.f32 %v1629, %v1860
    %v1928 = vmul.f32 %v1632, %v1862
    %v1929 = vmul.f32 %v1637, %v1864
    %v1930 = vmul.f32 %v1640, %v1866
    %1963 = vrot.lane.b32.xlu0 %v1899, 112
    %v1964 = vpop.permute.xlu0 %1963
    %1965 = vrot.lane.b32.xlu0 %v1900, 112
    %v1966 = vpop.permute.xlu0 %1965
    %1967 = vrot.lane.b32.xlu0 %v1901, 112
    %v1968 = vpop.permute.xlu0 %1967
    %1969 = vrot.lane.b32.xlu0 %v1902, 112
    %v1970 = vpop.permute.xlu0 %1969
    %1971 = vrot.lane.b32.xlu0 %v1903, 112
    %v1972 = vpop.permute.xlu0 %1971
    %1973 = vrot.lane.b32.xlu0 %v1904, 112
    %v1974 = vpop.permute.xlu0 %1973
    %1975 = vrot.lane.b32.xlu0 %v1905, 112
    %v1976 = vpop.permute.xlu0 %1975
    %1977 = vrot.lane.b32.xlu0 %v1906, 112
    %v1978 = vpop.permute.xlu0 %1977
    %1979 = vrot.lane.b32.xlu0 %v1907, 112
    %v1980 = vpop.permute.xlu0 %1979
    %1981 = vrot.lane.b32.xlu0 %v1908, 112
    %v1982 = vpop.permute.xlu0 %1981
    %1983 = vrot.lane.b32.xlu0 %v1909, 112
    %v1984 = vpop.permute.xlu0 %1983
    %1985 = vrot.lane.b32.xlu0 %v1910, 112
    %v1986 = vpop.permute.xlu0 %1985
    %1987 = vrot.lane.b32.xlu0 %v1911, 112
    %v1988 = vpop.permute.xlu0 %1987
    %1989 = vrot.lane.b32.xlu0 %v1912, 112
    %v1990 = vpop.permute.xlu0 %1989
    %1991 = vrot.lane.b32.xlu0 %v1913, 112
    %v1992 = vpop.permute.xlu0 %1991
    %1993 = vrot.lane.b32.xlu0 %v1914, 112
    %v1994 = vpop.permute.xlu0 %1993
    %1995 = vrot.lane.b32.xlu0 %v1915, 112
    %v1996 = vpop.permute.xlu0 %1995
    %1997 = vrot.lane.b32.xlu0 %v1916, 112
    %v1998 = vpop.permute.xlu0 %1997
    %1999 = vrot.lane.b32.xlu0 %v1917, 112
    %v2000 = vpop.permute.xlu0 %1999
    %2001 = vrot.lane.b32.xlu0 %v1918, 112
    %v2002 = vpop.permute.xlu0 %2001
    %2003 = vrot.lane.b32.xlu0 %v1919, 112
    %v2004 = vpop.permute.xlu0 %2003
    %2005 = vrot.lane.b32.xlu0 %v1920, 112
    %v2006 = vpop.permute.xlu0 %2005
    %2007 = vrot.lane.b32.xlu0 %v1921, 112
    %v2008 = vpop.permute.xlu0 %2007
    %2009 = vrot.lane.b32.xlu0 %v1922, 112
    %v2010 = vpop.permute.xlu0 %2009
    %2011 = vrot.lane.b32.xlu0 %v1923, 112
    %v2012 = vpop.permute.xlu0 %2011
    %2013 = vrot.lane.b32.xlu0 %v1924, 112
    %v2014 = vpop.permute.xlu0 %2013
    %2015 = vrot.lane.b32.xlu0 %v1925, 112
    %v2016 = vpop.permute.xlu0 %2015
    %2017 = vrot.lane.b32.xlu0 %v1926, 112
    %v2018 = vpop.permute.xlu0 %2017
    %2019 = vrot.lane.b32.xlu0 %v1927, 112
    %v2020 = vpop.permute.xlu0 %2019
    %2021 = vrot.lane.b32.xlu0 %v1928, 112
    %v2022 = vpop.permute.xlu0 %2021
    %2023 = vrot.lane.b32.xlu0 %v1929, 112
    %v2024 = vpop.permute.xlu0 %2023
    %2025 = vrot.lane.b32.xlu0 %v1930, 112
    %v2026 = vpop.permute.xlu0 %2025
    %v2059 = vsel %vm1433, %v1964, 0.0
    %2060 = vadd.xlane.f32.xlu0 %v2059
    %v2061 = vpop.xlane.xlu0 %2060
    %v2062 = vsel %vm1433, %v1966, 0.0
    %2063 = vadd.xlane.f32.xlu0 %v2062
    %v2064 = vpop.xlane.xlu0 %2063
    %v2065 = vsel %vm1433, %v1968, 0.0
    %2066 = vadd.xlane.f32.xlu0 %v2065
    %v2067 = vpop.xlane.xlu0 %2066
    %v2068 = vsel %vm1433, %v1970, 0.0
    %2069 = vadd.xlane.f32.xlu0 %v2068
    %v2070 = vpop.xlane.xlu0 %2069
    %v2071 = vsel %vm1433, %v1972, 0.0
    %2072 = vadd.xlane.f32.xlu0 %v2071
    %v2073 = vpop.xlane.xlu0 %2072
    %v2074 = vsel %vm1433, %v1974, 0.0
    %2075 = vadd.xlane.f32.xlu0 %v2074
    %v2076 = vpop.xlane.xlu0 %2075
    %v2077 = vsel %vm1433, %v1976, 0.0
    %2078 = vadd.xlane.f32.xlu0 %v2077
    %v2079 = vpop.xlane.xlu0 %2078
    %v2080 = vsel %vm1433, %v1978, 0.0
    %2081 = vadd.xlane.f32.xlu0 %v2080
    %v2082 = vpop.xlane.xlu0 %2081
    %v2083 = vsel %vm1433, %v1980, 0.0
    %2084 = vadd.xlane.f32.xlu0 %v2083
    %v2085 = vpop.xlane.xlu0 %2084
    %v2086 = vsel %vm1433, %v1982, 0.0
    %2087 = vadd.xlane.f32.xlu0 %v2086
    %v2088 = vpop.xlane.xlu0 %2087
    %v2089 = vsel %vm1433, %v1984, 0.0
    %2090 = vadd.xlane.f32.xlu0 %v2089
    %v2091 = vpop.xlane.xlu0 %2090
    %v2092 = vsel %vm1433, %v1986, 0.0
    %2093 = vadd.xlane.f32.xlu0 %v2092
    %v2094 = vpop.xlane.xlu0 %2093
    %v2095 = vsel %vm1433, %v1988, 0.0
    %2096 = vadd.xlane.f32.xlu0 %v2095
    %v2097 = vpop.xlane.xlu0 %2096
    %v2098 = vsel %vm1433, %v1990, 0.0
    %2099 = vadd.xlane.f32.xlu0 %v2098
    %v2100 = vpop.xlane.xlu0 %2099
    %v2101 = vsel %vm1433, %v1992, 0.0
    %2102 = vadd.xlane.f32.xlu0 %v2101
    %v2103 = vpop.xlane.xlu0 %2102
    %v2104 = vsel %vm1433, %v1994, 0.0
    %2105 = vadd.xlane.f32.xlu0 %v2104
    %v2106 = vpop.xlane.xlu0 %2105
    %v2107 = vsel %vm1433, %v1996, 0.0
    %2108 = vadd.xlane.f32.xlu0 %v2107
    %v2109 = vpop.xlane.xlu0 %2108
    %v2110 = vsel %vm1433, %v1998, 0.0
    %2111 = vadd.xlane.f32.xlu0 %v2110
    %v2112 = vpop.xlane.xlu0 %2111
    %v2113 = vsel %vm1433, %v2000, 0.0
    %2114 = vadd.xlane.f32.xlu0 %v2113
    %v2115 = vpop.xlane.xlu0 %2114
    %v2116 = vsel %vm1433, %v2002, 0.0
    %2117 = vadd.xlane.f32.xlu0 %v2116
    %v2118 = vpop.xlane.xlu0 %2117
    %v2119 = vsel %vm1433, %v2004, 0.0
    %2120 = vadd.xlane.f32.xlu0 %v2119
    %v2121 = vpop.xlane.xlu0 %2120
    %v2122 = vsel %vm1433, %v2006, 0.0
    %2123 = vadd.xlane.f32.xlu0 %v2122
    %v2124 = vpop.xlane.xlu0 %2123
    %v2125 = vsel %vm1433, %v2008, 0.0
    %2126 = vadd.xlane.f32.xlu0 %v2125
    %v2127 = vpop.xlane.xlu0 %2126
    %v2128 = vsel %vm1433, %v2010, 0.0
    %2129 = vadd.xlane.f32.xlu0 %v2128
    %v2130 = vpop.xlane.xlu0 %2129
    %v2131 = vsel %vm1433, %v2012, 0.0
    %2132 = vadd.xlane.f32.xlu0 %v2131
    %v2133 = vpop.xlane.xlu0 %2132
    %v2134 = vsel %vm1433, %v2014, 0.0
    %2135 = vadd.xlane.f32.xlu0 %v2134
    %v2136 = vpop.xlane.xlu0 %2135
    %v2137 = vsel %vm1433, %v2016, 0.0
    %2138 = vadd.xlane.f32.xlu0 %v2137
    %v2139 = vpop.xlane.xlu0 %2138
    %v2140 = vsel %vm1433, %v2018, 0.0
    %2141 = vadd.xlane.f32.xlu0 %v2140
    %v2142 = vpop.xlane.xlu0 %2141
    %v2143 = vsel %vm1433, %v2020, 0.0
    %2144 = vadd.xlane.f32.xlu0 %v2143
    %v2145 = vpop.xlane.xlu0 %2144
    %v2146 = vsel %vm1433, %v2022, 0.0
    %2147 = vadd.xlane.f32.xlu0 %v2146
    %v2148 = vpop.xlane.xlu0 %2147
    %v2149 = vsel %vm1433, %v2024, 0.0
    %2150 = vadd.xlane.f32.xlu0 %v2149
    %v2151 = vpop.xlane.xlu0 %2150
    %v2152 = vsel %vm1433, %v2026, 0.0
    %2153 = vadd.xlane.f32.xlu0 %v2152
    %v2154 = vpop.xlane.xlu0 %2153
    %v2155 = vld [vmem:[%s13] sm:$0x1]
    %v2156 = vlaneseq
    %v2157 = vshrl.u32 %v2156, 7
    %v2158 = vsub.s32 0, %v2157
    %v2159 = vrot.slane %v2155, %v2158
    %v2160 = vmul.f32 %v705, %v2159
    %v2161 = vmul.f32 %v706, %v2159
    %v2162 = vmul.f32 %v707, %v2159
    %v2163 = vmul.f32 %v708, %v2159
    %v2164 = vmul.f32 %v709, %v2159
    %v2165 = vmul.f32 %v710, %v2159
    %v2166 = vmul.f32 %v711, %v2159
    %v2167 = vmul.f32 %v712, %v2159
    %v2168 = vmul.f32 %v713, %v2159
    %v2169 = vmul.f32 %v714, %v2159
    %v2170 = vmul.f32 %v715, %v2159
    %v2171 = vmul.f32 %v716, %v2159
    %v2172 = vmul.f32 %v717, %v2159
    %v2173 = vmul.f32 %v718, %v2159
    %v2174 = vmul.f32 %v719, %v2159
    %v2175 = vmul.f32 %v720, %v2159
    %v2176 = vmul.f32 %v721, %v2159
    %v2177 = vmul.f32 %v722, %v2159
    %v2178 = vmul.f32 %v723, %v2159
    %v2179 = vmul.f32 %v724, %v2159
    %v2180 = vmul.f32 %v725, %v2159
    %v2181 = vmul.f32 %v726, %v2159
    %v2182 = vmul.f32 %v727, %v2159
    %v2183 = vmul.f32 %v728, %v2159
    %v2184 = vmul.f32 %v729, %v2159
    %v2185 = vmul.f32 %v730, %v2159
    %v2186 = vmul.f32 %v731, %v2159
    %v2187 = vmul.f32 %v732, %v2159
    %v2188 = vmul.f32 %v733, %v2159
    %v2189 = vmul.f32 %v734, %v2159
    %v2190 = vmul.f32 %v735, %v2159
    %v2191 = vmul.f32 %v736, %v2159
    %v2192 = vsel %vm1433, %v2160, 0.0
    %2193 = vadd.xlane.f32.xlu0 %v2192
    %v2194 = vpop.xlane.xlu0 %2193
    %v2195 = vsel %vm1433, %v2161, 0.0
    %2196 = vadd.xlane.f32.xlu0 %v2195
    %v2197 = vpop.xlane.xlu0 %2196
    %v2198 = vsel %vm1433, %v2162, 0.0
    %2199 = vadd.xlane.f32.xlu0 %v2198
    %v2200 = vpop.xlane.xlu0 %2199
    %v2201 = vsel %vm1433, %v2163, 0.0
    %2202 = vadd.xlane.f32.xlu0 %v2201
    %v2203 = vpop.xlane.xlu0 %2202
    %v2204 = vsel %vm1433, %v2164, 0.0
    %2205 = vadd.xlane.f32.xlu0 %v2204
    %v2206 = vpop.xlane.xlu0 %2205
    %v2207 = vsel %vm1433, %v2165, 0.0
    %2208 = vadd.xlane.f32.xlu0 %v2207
    %v2209 = vpop.xlane.xlu0 %2208
    %v2210 = vsel %vm1433, %v2166, 0.0
    %2211 = vadd.xlane.f32.xlu0 %v2210
    %v2212 = vpop.xlane.xlu0 %2211
    %v2213 = vsel %vm1433, %v2167, 0.0
    %2214 = vadd.xlane.f32.xlu0 %v2213
    %v2215 = vpop.xlane.xlu0 %2214
    %v2216 = vsel %vm1433, %v2168, 0.0
    %2217 = vadd.xlane.f32.xlu0 %v2216
    %v2218 = vpop.xlane.xlu0 %2217
    %v2219 = vsel %vm1433, %v2169, 0.0
    %2220 = vadd.xlane.f32.xlu0 %v2219
    %v2221 = vpop.xlane.xlu0 %2220
    %v2222 = vsel %vm1433, %v2170, 0.0
    %2223 = vadd.xlane.f32.xlu0 %v2222
    %v2224 = vpop.xlane.xlu0 %2223
    %v2225 = vsel %vm1433, %v2171, 0.0
    %2226 = vadd.xlane.f32.xlu0 %v2225
    %v2227 = vpop.xlane.xlu0 %2226
    %v2228 = vsel %vm1433, %v2172, 0.0
    %2229 = vadd.xlane.f32.xlu0 %v2228
    %v2230 = vpop.xlane.xlu0 %2229
    %v2231 = vsel %vm1433, %v2173, 0.0
    %2232 = vadd.xlane.f32.xlu0 %v2231
    %v2233 = vpop.xlane.xlu0 %2232
    %v2234 = vsel %vm1433, %v2174, 0.0
    %2235 = vadd.xlane.f32.xlu0 %v2234
    %v2236 = vpop.xlane.xlu0 %2235
    %v2237 = vsel %vm1433, %v2175, 0.0
    %2238 = vadd.xlane.f32.xlu0 %v2237
    %v2239 = vpop.xlane.xlu0 %2238
    %v2240 = vsel %vm1433, %v2176, 0.0
    %2241 = vadd.xlane.f32.xlu0 %v2240
    %v2242 = vpop.xlane.xlu0 %2241
    %v2243 = vsel %vm1433, %v2177, 0.0
    %2244 = vadd.xlane.f32.xlu0 %v2243
    %v2245 = vpop.xlane.xlu0 %2244
    %v2246 = vsel %vm1433, %v2178, 0.0
    %2247 = vadd.xlane.f32.xlu0 %v2246
    %v2248 = vpop.xlane.xlu0 %2247
    %v2249 = vsel %vm1433, %v2179, 0.0
    %2250 = vadd.xlane.f32.xlu0 %v2249
    %v2251 = vpop.xlane.xlu0 %2250
    %v2252 = vsel %vm1433, %v2180, 0.0
    %2253 = vadd.xlane.f32.xlu0 %v2252
    %v2254 = vpop.xlane.xlu0 %2253
    %v2255 = vsel %vm1433, %v2181, 0.0
    %2256 = vadd.xlane.f32.xlu0 %v2255
    %v2257 = vpop.xlane.xlu0 %2256
    %v2258 = vsel %vm1433, %v2182, 0.0
    %2259 = vadd.xlane.f32.xlu0 %v2258
    %v2260 = vpop.xlane.xlu0 %2259
    %v2261 = vsel %vm1433, %v2183, 0.0
    %2262 = vadd.xlane.f32.xlu0 %v2261
    %v2263 = vpop.xlane.xlu0 %2262
    %v2264 = vsel %vm1433, %v2184, 0.0
    %2265 = vadd.xlane.f32.xlu0 %v2264
    %v2266 = vpop.xlane.xlu0 %2265
    %v2267 = vsel %vm1433, %v2185, 0.0
    %2268 = vadd.xlane.f32.xlu0 %v2267
    %v2269 = vpop.xlane.xlu0 %2268
    %v2270 = vsel %vm1433, %v2186, 0.0
    %2271 = vadd.xlane.f32.xlu0 %v2270
    %v2272 = vpop.xlane.xlu0 %2271
    %v2273 = vsel %vm1433, %v2187, 0.0
    %2274 = vadd.xlane.f32.xlu0 %v2273
    %v2275 = vpop.xlane.xlu0 %2274
    %v2276 = vsel %vm1433, %v2188, 0.0
    %2277 = vadd.xlane.f32.xlu0 %v2276
    %v2278 = vpop.xlane.xlu0 %2277
    %v2279 = vsel %vm1433, %v2189, 0.0
    %2280 = vadd.xlane.f32.xlu0 %v2279
    %v2281 = vpop.xlane.xlu0 %2280
    %v2282 = vsel %vm1433, %v2190, 0.0
    %2283 = vadd.xlane.f32.xlu0 %v2282
    %v2284 = vpop.xlane.xlu0 %2283
    %v2285 = vsel %vm1433, %v2191, 0.0
    %2286 = vadd.xlane.f32.xlu0 %v2285
    %v2287 = vpop.xlane.xlu0 %2286
    %v2288 = vld [vmem:[%s14] sm:$0x1]
    %v2289 = vlaneseq
    %v2290 = vshrl.u32 %v2289, 7
    %v2291 = vsub.s32 0, %v2290
    %v2292 = vrot.slane %v2288, %v2291
    %v2293 = vmul.f32 %v1377, %v2292
    %v2294 = vmul.f32 %v1378, %v2292
    %v2295 = vmul.f32 %v1379, %v2292
    %v2296 = vmul.f32 %v1380, %v2292
    %v2297 = vmul.f32 %v1381, %v2292
    %v2298 = vmul.f32 %v1382, %v2292
    %v2299 = vmul.f32 %v1383, %v2292
    %v2300 = vmul.f32 %v1384, %v2292
    %v2301 = vmul.f32 %v1385, %v2292
    %v2302 = vmul.f32 %v1386, %v2292
    %v2303 = vmul.f32 %v1387, %v2292
    %v2304 = vmul.f32 %v1388, %v2292
    %v2305 = vmul.f32 %v1389, %v2292
    %v2306 = vmul.f32 %v1390, %v2292
    %v2307 = vmul.f32 %v1391, %v2292
    %v2308 = vmul.f32 %v1392, %v2292
    %v2309 = vmul.f32 %v1393, %v2292
    %v2310 = vmul.f32 %v1394, %v2292
    %v2311 = vmul.f32 %v1395, %v2292
    %v2312 = vmul.f32 %v1396, %v2292
    %v2313 = vmul.f32 %v1397, %v2292
    %v2314 = vmul.f32 %v1398, %v2292
    %v2315 = vmul.f32 %v1399, %v2292
    %v2316 = vmul.f32 %v1400, %v2292
    %v2317 = vmul.f32 %v1401, %v2292
    %v2318 = vmul.f32 %v1402, %v2292
    %v2319 = vmul.f32 %v1403, %v2292
    %v2320 = vmul.f32 %v1404, %v2292
    %v2321 = vmul.f32 %v1405, %v2292
    %v2322 = vmul.f32 %v1406, %v2292
    %v2323 = vmul.f32 %v1407, %v2292
    %v2324 = vmul.f32 %v1408, %v2292
    %v2325 = vsel %vm1433, %v2293, 0.0
    %2326 = vadd.xlane.f32.xlu0 %v2325
    %v2327 = vpop.xlane.xlu0 %2326
    %v2328 = vsel %vm1433, %v2294, 0.0
    %2329 = vadd.xlane.f32.xlu0 %v2328
    %v2330 = vpop.xlane.xlu0 %2329
    %v2331 = vsel %vm1433, %v2295, 0.0
    %2332 = vadd.xlane.f32.xlu0 %v2331
    %v2333 = vpop.xlane.xlu0 %2332
    %v2334 = vsel %vm1433, %v2296, 0.0
    %2335 = vadd.xlane.f32.xlu0 %v2334
    %v2336 = vpop.xlane.xlu0 %2335
    %v2337 = vsel %vm1433, %v2297, 0.0
    %2338 = vadd.xlane.f32.xlu0 %v2337
    %v2339 = vpop.xlane.xlu0 %2338
    %v2340 = vsel %vm1433, %v2298, 0.0
    %2341 = vadd.xlane.f32.xlu0 %v2340
    %v2342 = vpop.xlane.xlu0 %2341
    %v2343 = vsel %vm1433, %v2299, 0.0
    %2344 = vadd.xlane.f32.xlu0 %v2343
    %v2345 = vpop.xlane.xlu0 %2344
    %v2346 = vsel %vm1433, %v2300, 0.0
    %2347 = vadd.xlane.f32.xlu0 %v2346
    %v2348 = vpop.xlane.xlu0 %2347
    %v2349 = vsel %vm1433, %v2301, 0.0
    %2350 = vadd.xlane.f32.xlu0 %v2349
    %v2351 = vpop.xlane.xlu0 %2350
    %v2352 = vsel %vm1433, %v2302, 0.0
    %2353 = vadd.xlane.f32.xlu0 %v2352
    %v2354 = vpop.xlane.xlu0 %2353
    %v2355 = vsel %vm1433, %v2303, 0.0
    %2356 = vadd.xlane.f32.xlu0 %v2355
    %v2357 = vpop.xlane.xlu0 %2356
    %v2358 = vsel %vm1433, %v2304, 0.0
    %2359 = vadd.xlane.f32.xlu0 %v2358
    %v2360 = vpop.xlane.xlu0 %2359
    %v2361 = vsel %vm1433, %v2305, 0.0
    %2362 = vadd.xlane.f32.xlu0 %v2361
    %v2363 = vpop.xlane.xlu0 %2362
    %v2364 = vsel %vm1433, %v2306, 0.0
    %2365 = vadd.xlane.f32.xlu0 %v2364
    %v2366 = vpop.xlane.xlu0 %2365
    %v2367 = vsel %vm1433, %v2307, 0.0
    %2368 = vadd.xlane.f32.xlu0 %v2367
    %v2369 = vpop.xlane.xlu0 %2368
    %v2370 = vsel %vm1433, %v2308, 0.0
    %2371 = vadd.xlane.f32.xlu0 %v2370
    %v2372 = vpop.xlane.xlu0 %2371
    %v2373 = vsel %vm1433, %v2309, 0.0
    %2374 = vadd.xlane.f32.xlu0 %v2373
    %v2375 = vpop.xlane.xlu0 %2374
    %v2376 = vsel %vm1433, %v2310, 0.0
    %2377 = vadd.xlane.f32.xlu0 %v2376
    %v2378 = vpop.xlane.xlu0 %2377
    %v2379 = vsel %vm1433, %v2311, 0.0
    %2380 = vadd.xlane.f32.xlu0 %v2379
    %v2381 = vpop.xlane.xlu0 %2380
    %v2382 = vsel %vm1433, %v2312, 0.0
    %2383 = vadd.xlane.f32.xlu0 %v2382
    %v2384 = vpop.xlane.xlu0 %2383
    %v2385 = vsel %vm1433, %v2313, 0.0
    %2386 = vadd.xlane.f32.xlu0 %v2385
    %v2387 = vpop.xlane.xlu0 %2386
    %v2388 = vsel %vm1433, %v2314, 0.0
    %2389 = vadd.xlane.f32.xlu0 %v2388
    %v2390 = vpop.xlane.xlu0 %2389
    %v2391 = vsel %vm1433, %v2315, 0.0
    %2392 = vadd.xlane.f32.xlu0 %v2391
    %v2393 = vpop.xlane.xlu0 %2392
    %v2394 = vsel %vm1433, %v2316, 0.0
    %2395 = vadd.xlane.f32.xlu0 %v2394
    %v2396 = vpop.xlane.xlu0 %2395
    %v2397 = vsel %vm1433, %v2317, 0.0
    %2398 = vadd.xlane.f32.xlu0 %v2397
    %v2399 = vpop.xlane.xlu0 %2398
    %v2400 = vsel %vm1433, %v2318, 0.0
    %2401 = vadd.xlane.f32.xlu0 %v2400
    %v2402 = vpop.xlane.xlu0 %2401
    %v2403 = vsel %vm1433, %v2319, 0.0
    %2404 = vadd.xlane.f32.xlu0 %v2403
    %v2405 = vpop.xlane.xlu0 %2404
    %v2406 = vsel %vm1433, %v2320, 0.0
    %2407 = vadd.xlane.f32.xlu0 %v2406
    %v2408 = vpop.xlane.xlu0 %2407
    %v2409 = vsel %vm1433, %v2321, 0.0
    %2410 = vadd.xlane.f32.xlu0 %v2409
    %v2411 = vpop.xlane.xlu0 %2410
    %v2412 = vsel %vm1433, %v2322, 0.0
    %2413 = vadd.xlane.f32.xlu0 %v2412
    %v2414 = vpop.xlane.xlu0 %2413
    %v2415 = vsel %vm1433, %v2323, 0.0
    %2416 = vadd.xlane.f32.xlu0 %v2415
    %v2417 = vpop.xlane.xlu0 %2416
    %v2418 = vsel %vm1433, %v2324, 0.0
    %2419 = vadd.xlane.f32.xlu0 %v2418
    %v2420 = vpop.xlane.xlu0 %2419
    %v2421 = vadd.f32 %v2194, %v2327
    %v2422 = vadd.f32 %v2197, %v2330
    %v2423 = vadd.f32 %v2200, %v2333
    %v2424 = vadd.f32 %v2203, %v2336
    %v2425 = vadd.f32 %v2206, %v2339
    %v2426 = vadd.f32 %v2209, %v2342
    %v2427 = vadd.f32 %v2212, %v2345
    %v2428 = vadd.f32 %v2215, %v2348
    %v2429 = vadd.f32 %v2218, %v2351
    %v2430 = vadd.f32 %v2221, %v2354
    %v2431 = vadd.f32 %v2224, %v2357
    %v2432 = vadd.f32 %v2227, %v2360
    %v2433 = vadd.f32 %v2230, %v2363
    %v2434 = vadd.f32 %v2233, %v2366
    %v2435 = vadd.f32 %v2236, %v2369
    %v2436 = vadd.f32 %v2239, %v2372
    %v2437 = vadd.f32 %v2242, %v2375
    %v2438 = vadd.f32 %v2245, %v2378
    %v2439 = vadd.f32 %v2248, %v2381
    %v2440 = vadd.f32 %v2251, %v2384
    %v2441 = vadd.f32 %v2254, %v2387
    %v2442 = vadd.f32 %v2257, %v2390
    %v2443 = vadd.f32 %v2260, %v2393
    %v2444 = vadd.f32 %v2263, %v2396
    %v2445 = vadd.f32 %v2266, %v2399
    %v2446 = vadd.f32 %v2269, %v2402
    %v2447 = vadd.f32 %v2272, %v2405
    %v2448 = vadd.f32 %v2275, %v2408
    %v2449 = vadd.f32 %v2278, %v2411
    %v2450 = vadd.f32 %v2281, %v2414
    %v2451 = vadd.f32 %v2284, %v2417
    %v2452 = vadd.f32 %v2287, %v2420
    %v2453 = vld [vmem:[%s15] sm:$0x1]
    %v2455 = vlaneseq
    %v2456 = vshrl.u32 %v2455, 7
    %v2457 = vsub.s32 0, %v2456
    %v2458 = vrot.slane %v2453, %v2457
    %v2460 = vadd.f32 %v2421, %v2458
    %v2461 = vadd.f32 %v2422, %v2458
    %v2462 = vadd.f32 %v2423, %v2458
    %v2463 = vadd.f32 %v2424, %v2458
    %v2464 = vadd.f32 %v2425, %v2458
    %v2465 = vadd.f32 %v2426, %v2458
    %v2466 = vadd.f32 %v2427, %v2458
    %v2467 = vadd.f32 %v2428, %v2458
    %v2468 = vadd.f32 %v2429, %v2458
    %v2469 = vadd.f32 %v2430, %v2458
    %v2470 = vadd.f32 %v2431, %v2458
    %v2471 = vadd.f32 %v2432, %v2458
    %v2472 = vadd.f32 %v2433, %v2458
    %v2473 = vadd.f32 %v2434, %v2458
    %v2474 = vadd.f32 %v2435, %v2458
    %v2475 = vadd.f32 %v2436, %v2458
    %v2476 = vadd.f32 %v2437, %v2458
    %v2477 = vadd.f32 %v2438, %v2458
    %v2478 = vadd.f32 %v2439, %v2458
    %v2479 = vadd.f32 %v2440, %v2458
    %v2480 = vadd.f32 %v2441, %v2458
    %v2481 = vadd.f32 %v2442, %v2458
    %v2482 = vadd.f32 %v2443, %v2458
    %v2483 = vadd.f32 %v2444, %v2458
    %v2484 = vadd.f32 %v2445, %v2458
    %v2485 = vadd.f32 %v2446, %v2458
    %v2486 = vadd.f32 %v2447, %v2458
    %v2487 = vadd.f32 %v2448, %v2458
    %v2488 = vadd.f32 %v2449, %v2458
    %v2489 = vadd.f32 %v2450, %v2458
    %v2490 = vadd.f32 %v2451, %v2458
    %v2491 = vadd.f32 %v2452, %v2458
    %v2492 = vld [vmem:[%s13 + $0x1] sm:$0x1]
    %v2493 = vlaneseq
    %v2494 = vshrl.u32 %v2493, 7
    %v2495 = vsub.s32 0, %v2494
    %v2496 = vrot.slane %v2492, %v2495
    %v2497 = vmul.f32 %v705, %v2496
    %v2498 = vmul.f32 %v706, %v2496
    %v2499 = vmul.f32 %v707, %v2496
    %v2500 = vmul.f32 %v708, %v2496
    %v2501 = vmul.f32 %v709, %v2496
    %v2502 = vmul.f32 %v710, %v2496
    %v2503 = vmul.f32 %v711, %v2496
    %v2504 = vmul.f32 %v712, %v2496
    %v2505 = vmul.f32 %v713, %v2496
    %v2506 = vmul.f32 %v714, %v2496
    %v2507 = vmul.f32 %v715, %v2496
    %v2508 = vmul.f32 %v716, %v2496
    %v2509 = vmul.f32 %v717, %v2496
    %v2510 = vmul.f32 %v718, %v2496
    %v2511 = vmul.f32 %v719, %v2496
    %v2512 = vmul.f32 %v720, %v2496
    %v2513 = vmul.f32 %v721, %v2496
    %v2514 = vmul.f32 %v722, %v2496
    %v2515 = vmul.f32 %v723, %v2496
    %v2516 = vmul.f32 %v724, %v2496
    %v2517 = vmul.f32 %v725, %v2496
    %v2518 = vmul.f32 %v726, %v2496
    %v2519 = vmul.f32 %v727, %v2496
    %v2520 = vmul.f32 %v728, %v2496
    %v2521 = vmul.f32 %v729, %v2496
    %v2522 = vmul.f32 %v730, %v2496
    %v2523 = vmul.f32 %v731, %v2496
    %v2524 = vmul.f32 %v732, %v2496
    %v2525 = vmul.f32 %v733, %v2496
    %v2526 = vmul.f32 %v734, %v2496
    %v2527 = vmul.f32 %v735, %v2496
    %v2528 = vmul.f32 %v736, %v2496
    %v2529 = vsel %vm1433, %v2497, 0.0
    %2530 = vadd.xlane.f32.xlu0 %v2529
    %v2531 = vpop.xlane.xlu0 %2530
    %v2532 = vsel %vm1433, %v2498, 0.0
    %2533 = vadd.xlane.f32.xlu0 %v2532
    %v2534 = vpop.xlane.xlu0 %2533
    %v2535 = vsel %vm1433, %v2499, 0.0
    %2536 = vadd.xlane.f32.xlu0 %v2535
    %v2537 = vpop.xlane.xlu0 %2536
    %v2538 = vsel %vm1433, %v2500, 0.0
    %2539 = vadd.xlane.f32.xlu0 %v2538
    %v2540 = vpop.xlane.xlu0 %2539
    %v2541 = vsel %vm1433, %v2501, 0.0
    %2542 = vadd.xlane.f32.xlu0 %v2541
    %v2543 = vpop.xlane.xlu0 %2542
    %v2544 = vsel %vm1433, %v2502, 0.0
    %2545 = vadd.xlane.f32.xlu0 %v2544
    %v2546 = vpop.xlane.xlu0 %2545
    %v2547 = vsel %vm1433, %v2503, 0.0
    %2548 = vadd.xlane.f32.xlu0 %v2547
    %v2549 = vpop.xlane.xlu0 %2548
    %v2550 = vsel %vm1433, %v2504, 0.0
    %2551 = vadd.xlane.f32.xlu0 %v2550
    %v2552 = vpop.xlane.xlu0 %2551
    %v2553 = vsel %vm1433, %v2505, 0.0
    %2554 = vadd.xlane.f32.xlu0 %v2553
    %v2555 = vpop.xlane.xlu0 %2554
    %v2556 = vsel %vm1433, %v2506, 0.0
    %2557 = vadd.xlane.f32.xlu0 %v2556
    %v2558 = vpop.xlane.xlu0 %2557
    %v2559 = vsel %vm1433, %v2507, 0.0
    %2560 = vadd.xlane.f32.xlu0 %v2559
    %v2561 = vpop.xlane.xlu0 %2560
    %v2562 = vsel %vm1433, %v2508, 0.0
    %2563 = vadd.xlane.f32.xlu0 %v2562
    %v2564 = vpop.xlane.xlu0 %2563
    %v2565 = vsel %vm1433, %v2509, 0.0
    %2566 = vadd.xlane.f32.xlu0 %v2565
    %v2567 = vpop.xlane.xlu0 %2566
    %v2568 = vsel %vm1433, %v2510, 0.0
    %2569 = vadd.xlane.f32.xlu0 %v2568
    %v2570 = vpop.xlane.xlu0 %2569
    %v2571 = vsel %vm1433, %v2511, 0.0
    %2572 = vadd.xlane.f32.xlu0 %v2571
    %v2573 = vpop.xlane.xlu0 %2572
    %v2574 = vsel %vm1433, %v2512, 0.0
    %2575 = vadd.xlane.f32.xlu0 %v2574
    %v2576 = vpop.xlane.xlu0 %2575
    %v2577 = vsel %vm1433, %v2513, 0.0
    %2578 = vadd.xlane.f32.xlu0 %v2577
    %v2579 = vpop.xlane.xlu0 %2578
    %v2580 = vsel %vm1433, %v2514, 0.0
    %2581 = vadd.xlane.f32.xlu0 %v2580
    %v2582 = vpop.xlane.xlu0 %2581
    %v2583 = vsel %vm1433, %v2515, 0.0
    %2584 = vadd.xlane.f32.xlu0 %v2583
    %v2585 = vpop.xlane.xlu0 %2584
    %v2586 = vsel %vm1433, %v2516, 0.0
    %2587 = vadd.xlane.f32.xlu0 %v2586
    %v2588 = vpop.xlane.xlu0 %2587
    %v2589 = vsel %vm1433, %v2517, 0.0
    %2590 = vadd.xlane.f32.xlu0 %v2589
    %v2591 = vpop.xlane.xlu0 %2590
    %v2592 = vsel %vm1433, %v2518, 0.0
    %2593 = vadd.xlane.f32.xlu0 %v2592
    %v2594 = vpop.xlane.xlu0 %2593
    %v2595 = vsel %vm1433, %v2519, 0.0
    %2596 = vadd.xlane.f32.xlu0 %v2595
    %v2597 = vpop.xlane.xlu0 %2596
    %v2598 = vsel %vm1433, %v2520, 0.0
    %2599 = vadd.xlane.f32.xlu0 %v2598
    %v2600 = vpop.xlane.xlu0 %2599
    %v2601 = vsel %vm1433, %v2521, 0.0
    %2602 = vadd.xlane.f32.xlu0 %v2601
    %v2603 = vpop.xlane.xlu0 %2602
    %v2604 = vsel %vm1433, %v2522, 0.0
    %2605 = vadd.xlane.f32.xlu0 %v2604
    %v2606 = vpop.xlane.xlu0 %2605
    %v2607 = vsel %vm1433, %v2523, 0.0
    %2608 = vadd.xlane.f32.xlu0 %v2607
    %v2609 = vpop.xlane.xlu0 %2608
    %v2610 = vsel %vm1433, %v2524, 0.0
    %2611 = vadd.xlane.f32.xlu0 %v2610
    %v2612 = vpop.xlane.xlu0 %2611
    %v2613 = vsel %vm1433, %v2525, 0.0
    %2614 = vadd.xlane.f32.xlu0 %v2613
    %v2615 = vpop.xlane.xlu0 %2614
    %v2616 = vsel %vm1433, %v2526, 0.0
    %2617 = vadd.xlane.f32.xlu0 %v2616
    %v2618 = vpop.xlane.xlu0 %2617
    %v2619 = vsel %vm1433, %v2527, 0.0
    %2620 = vadd.xlane.f32.xlu0 %v2619
    %v2621 = vpop.xlane.xlu0 %2620
    %v2622 = vsel %vm1433, %v2528, 0.0
    %2623 = vadd.xlane.f32.xlu0 %v2622
    %v2624 = vpop.xlane.xlu0 %2623
    %v2625 = vld [vmem:[%s14 + $0x1] sm:$0x1]
    %v2626 = vlaneseq
    %v2627 = vshrl.u32 %v2626, 7
    %v2628 = vsub.s32 0, %v2627
    %v2629 = vrot.slane %v2625, %v2628
    %v2630 = vmul.f32 %v1377, %v2629
    %v2631 = vmul.f32 %v1378, %v2629
    %v2632 = vmul.f32 %v1379, %v2629
    %v2633 = vmul.f32 %v1380, %v2629
    %v2634 = vmul.f32 %v1381, %v2629
    %v2635 = vmul.f32 %v1382, %v2629
    %v2636 = vmul.f32 %v1383, %v2629
    %v2637 = vmul.f32 %v1384, %v2629
    %v2638 = vmul.f32 %v1385, %v2629
    %v2639 = vmul.f32 %v1386, %v2629
    %v2640 = vmul.f32 %v1387, %v2629
    %v2641 = vmul.f32 %v1388, %v2629
    %v2642 = vmul.f32 %v1389, %v2629
    %v2643 = vmul.f32 %v1390, %v2629
    %v2644 = vmul.f32 %v1391, %v2629
    %v2645 = vmul.f32 %v1392, %v2629
    %v2646 = vmul.f32 %v1393, %v2629
    %v2647 = vmul.f32 %v1394, %v2629
    %v2648 = vmul.f32 %v1395, %v2629
    %v2649 = vmul.f32 %v1396, %v2629
    %v2650 = vmul.f32 %v1397, %v2629
    %v2651 = vmul.f32 %v1398, %v2629
    %v2652 = vmul.f32 %v1399, %v2629
    %v2653 = vmul.f32 %v1400, %v2629
    %v2654 = vmul.f32 %v1401, %v2629
    %v2655 = vmul.f32 %v1402, %v2629
    %v2656 = vmul.f32 %v1403, %v2629
    %v2657 = vmul.f32 %v1404, %v2629
    %v2658 = vmul.f32 %v1405, %v2629
    %v2659 = vmul.f32 %v1406, %v2629
    %v2660 = vmul.f32 %v1407, %v2629
    %v2661 = vmul.f32 %v1408, %v2629
    %v2662 = vsel %vm1433, %v2630, 0.0
    %2663 = vadd.xlane.f32.xlu0 %v2662
    %v2664 = vpop.xlane.xlu0 %2663
    %v2665 = vsel %vm1433, %v2631, 0.0
    %2666 = vadd.xlane.f32.xlu0 %v2665
    %v2667 = vpop.xlane.xlu0 %2666
    %v2668 = vsel %vm1433, %v2632, 0.0
    %2669 = vadd.xlane.f32.xlu0 %v2668
    %v2670 = vpop.xlane.xlu0 %2669
    %v2671 = vsel %vm1433, %v2633, 0.0
    %2672 = vadd.xlane.f32.xlu0 %v2671
    %v2673 = vpop.xlane.xlu0 %2672
    %v2674 = vsel %vm1433, %v2634, 0.0
    %2675 = vadd.xlane.f32.xlu0 %v2674
    %v2676 = vpop.xlane.xlu0 %2675
    %v2677 = vsel %vm1433, %v2635, 0.0
    %2678 = vadd.xlane.f32.xlu0 %v2677
    %v2679 = vpop.xlane.xlu0 %2678
    %v2680 = vsel %vm1433, %v2636, 0.0
    %2681 = vadd.xlane.f32.xlu0 %v2680
    %v2682 = vpop.xlane.xlu0 %2681
    %v2683 = vsel %vm1433, %v2637, 0.0
    %2684 = vadd.xlane.f32.xlu0 %v2683
    %v2685 = vpop.xlane.xlu0 %2684
    %v2686 = vsel %vm1433, %v2638, 0.0
    %2687 = vadd.xlane.f32.xlu0 %v2686
    %v2688 = vpop.xlane.xlu0 %2687
    %v2689 = vsel %vm1433, %v2639, 0.0
    %2690 = vadd.xlane.f32.xlu0 %v2689
    %v2691 = vpop.xlane.xlu0 %2690
    %v2692 = vsel %vm1433, %v2640, 0.0
    %2693 = vadd.xlane.f32.xlu0 %v2692
    %v2694 = vpop.xlane.xlu0 %2693
    %v2695 = vsel %vm1433, %v2641, 0.0
    %2696 = vadd.xlane.f32.xlu0 %v2695
    %v2697 = vpop.xlane.xlu0 %2696
    %v2698 = vsel %vm1433, %v2642, 0.0
    %2699 = vadd.xlane.f32.xlu0 %v2698
    %v2700 = vpop.xlane.xlu0 %2699
    %v2701 = vsel %vm1433, %v2643, 0.0
    %2702 = vadd.xlane.f32.xlu0 %v2701
    %v2703 = vpop.xlane.xlu0 %2702
    %v2704 = vsel %vm1433, %v2644, 0.0
    %2705 = vadd.xlane.f32.xlu0 %v2704
    %v2706 = vpop.xlane.xlu0 %2705
    %v2707 = vsel %vm1433, %v2645, 0.0
    %2708 = vadd.xlane.f32.xlu0 %v2707
    %v2709 = vpop.xlane.xlu0 %2708
    %v2710 = vsel %vm1433, %v2646, 0.0
    %2711 = vadd.xlane.f32.xlu0 %v2710
    %v2712 = vpop.xlane.xlu0 %2711
    %v2713 = vsel %vm1433, %v2647, 0.0
    %2714 = vadd.xlane.f32.xlu0 %v2713
    %v2715 = vpop.xlane.xlu0 %2714
    %v2716 = vsel %vm1433, %v2648, 0.0
    %2717 = vadd.xlane.f32.xlu0 %v2716
    %v2718 = vpop.xlane.xlu0 %2717
    %v2719 = vsel %vm1433, %v2649, 0.0
    %2720 = vadd.xlane.f32.xlu0 %v2719
    %v2721 = vpop.xlane.xlu0 %2720
    %v2722 = vsel %vm1433, %v2650, 0.0
    %2723 = vadd.xlane.f32.xlu0 %v2722
    %v2724 = vpop.xlane.xlu0 %2723
    %v2725 = vsel %vm1433, %v2651, 0.0
    %2726 = vadd.xlane.f32.xlu0 %v2725
    %v2727 = vpop.xlane.xlu0 %2726
    %v2728 = vsel %vm1433, %v2652, 0.0
    %2729 = vadd.xlane.f32.xlu0 %v2728
    %v2730 = vpop.xlane.xlu0 %2729
    %v2731 = vsel %vm1433, %v2653, 0.0
    %2732 = vadd.xlane.f32.xlu0 %v2731
    %v2733 = vpop.xlane.xlu0 %2732
    %v2734 = vsel %vm1433, %v2654, 0.0
    %2735 = vadd.xlane.f32.xlu0 %v2734
    %v2736 = vpop.xlane.xlu0 %2735
    %v2737 = vsel %vm1433, %v2655, 0.0
    %2738 = vadd.xlane.f32.xlu0 %v2737
    %v2739 = vpop.xlane.xlu0 %2738
    %v2740 = vsel %vm1433, %v2656, 0.0
    %2741 = vadd.xlane.f32.xlu0 %v2740
    %v2742 = vpop.xlane.xlu0 %2741
    %v2743 = vsel %vm1433, %v2657, 0.0
    %2744 = vadd.xlane.f32.xlu0 %v2743
    %v2745 = vpop.xlane.xlu0 %2744
    %v2746 = vsel %vm1433, %v2658, 0.0
    %2747 = vadd.xlane.f32.xlu0 %v2746
    %v2748 = vpop.xlane.xlu0 %2747
    %v2749 = vsel %vm1433, %v2659, 0.0
    %2750 = vadd.xlane.f32.xlu0 %v2749
    %v2751 = vpop.xlane.xlu0 %2750
    %v2752 = vsel %vm1433, %v2660, 0.0
    %2753 = vadd.xlane.f32.xlu0 %v2752
    %v2754 = vpop.xlane.xlu0 %2753
    %v2755 = vsel %vm1433, %v2661, 0.0
    %2756 = vadd.xlane.f32.xlu0 %v2755
    %v2757 = vpop.xlane.xlu0 %2756
    %v2758 = vadd.f32 %v2531, %v2664
    %v2759 = vadd.f32 %v2534, %v2667
    %v2760 = vadd.f32 %v2537, %v2670
    %v2761 = vadd.f32 %v2540, %v2673
    %v2762 = vadd.f32 %v2543, %v2676
    %v2763 = vadd.f32 %v2546, %v2679
    %v2764 = vadd.f32 %v2549, %v2682
    %v2765 = vadd.f32 %v2552, %v2685
    %v2766 = vadd.f32 %v2555, %v2688
    %v2767 = vadd.f32 %v2558, %v2691
    %v2768 = vadd.f32 %v2561, %v2694
    %v2769 = vadd.f32 %v2564, %v2697
    %v2770 = vadd.f32 %v2567, %v2700
    %v2771 = vadd.f32 %v2570, %v2703
    %v2772 = vadd.f32 %v2573, %v2706
    %v2773 = vadd.f32 %v2576, %v2709
    %v2774 = vadd.f32 %v2579, %v2712
    %v2775 = vadd.f32 %v2582, %v2715
    %v2776 = vadd.f32 %v2585, %v2718
    %v2777 = vadd.f32 %v2588, %v2721
    %v2778 = vadd.f32 %v2591, %v2724
    %v2779 = vadd.f32 %v2594, %v2727
    %v2780 = vadd.f32 %v2597, %v2730
    %v2781 = vadd.f32 %v2600, %v2733
    %v2782 = vadd.f32 %v2603, %v2736
    %v2783 = vadd.f32 %v2606, %v2739
    %v2784 = vadd.f32 %v2609, %v2742
    %v2785 = vadd.f32 %v2612, %v2745
    %v2786 = vadd.f32 %v2615, %v2748
    %v2787 = vadd.f32 %v2618, %v2751
    %v2788 = vadd.f32 %v2621, %v2754
    %v2789 = vadd.f32 %v2624, %v2757
    %v2790 = vadd.f32 %v2758, %v2458
    %v2791 = vadd.f32 %v2759, %v2458
    %v2792 = vadd.f32 %v2760, %v2458
    %v2793 = vadd.f32 %v2761, %v2458
    %v2794 = vadd.f32 %v2762, %v2458
    %v2795 = vadd.f32 %v2763, %v2458
    %v2796 = vadd.f32 %v2764, %v2458
    %v2797 = vadd.f32 %v2765, %v2458
    %v2798 = vadd.f32 %v2766, %v2458
    %v2799 = vadd.f32 %v2767, %v2458
    %v2800 = vadd.f32 %v2768, %v2458
    %v2801 = vadd.f32 %v2769, %v2458
    %v2802 = vadd.f32 %v2770, %v2458
    %v2803 = vadd.f32 %v2771, %v2458
    %v2804 = vadd.f32 %v2772, %v2458
    %v2805 = vadd.f32 %v2773, %v2458
    %v2806 = vadd.f32 %v2774, %v2458
    %v2807 = vadd.f32 %v2775, %v2458
    %v2808 = vadd.f32 %v2776, %v2458
    %v2809 = vadd.f32 %v2777, %v2458
    %v2810 = vadd.f32 %v2778, %v2458
    %v2811 = vadd.f32 %v2779, %v2458
    %v2812 = vadd.f32 %v2780, %v2458
    %v2813 = vadd.f32 %v2781, %v2458
    %v2814 = vadd.f32 %v2782, %v2458
    %v2815 = vadd.f32 %v2783, %v2458
    %v2816 = vadd.f32 %v2784, %v2458
    %v2817 = vadd.f32 %v2785, %v2458
    %v2818 = vadd.f32 %v2786, %v2458
    %v2819 = vadd.f32 %v2787, %v2458
    %v2820 = vadd.f32 %v2788, %v2458
    %v2821 = vadd.f32 %v2789, %v2458
    %v2822 = vadd.f32 %v1677, %v2460
    %v2823 = vadd.f32 %v1680, %v2461
    %v2824 = vadd.f32 %v1683, %v2462
    %v2825 = vadd.f32 %v1686, %v2463
    %v2826 = vadd.f32 %v1689, %v2464
    %v2827 = vadd.f32 %v1692, %v2465
    %v2828 = vadd.f32 %v1695, %v2466
    %v2829 = vadd.f32 %v1698, %v2467
    %v2830 = vadd.f32 %v1701, %v2468
    %v2831 = vadd.f32 %v1704, %v2469
    %v2832 = vadd.f32 %v1707, %v2470
    %v2833 = vadd.f32 %v1710, %v2471
    %v2834 = vadd.f32 %v1713, %v2472
    %v2835 = vadd.f32 %v1716, %v2473
    %v2836 = vadd.f32 %v1719, %v2474
    %v2837 = vadd.f32 %v1722, %v2475
    %v2838 = vadd.f32 %v1725, %v2476
    %v2839 = vadd.f32 %v1728, %v2477
    %v2840 = vadd.f32 %v1731, %v2478
    %v2841 = vadd.f32 %v1734, %v2479
    %v2842 = vadd.f32 %v1737, %v2480
    %v2843 = vadd.f32 %v1740, %v2481
    %v2844 = vadd.f32 %v1743, %v2482
    %v2845 = vadd.f32 %v1746, %v2483
    %v2846 = vadd.f32 %v1749, %v2484
    %v2847 = vadd.f32 %v1752, %v2485
    %v2848 = vadd.f32 %v1755, %v2486
    %v2849 = vadd.f32 %v1758, %v2487
    %v2850 = vadd.f32 %v1761, %v2488
    %v2851 = vadd.f32 %v1764, %v2489
    %v2852 = vadd.f32 %v1767, %v2490
    %v2853 = vadd.f32 %v1770, %v2491
    %v2854 = vadd.f32 %v2061, %v2790
    %v2855 = vadd.f32 %v2064, %v2791
    %v2856 = vadd.f32 %v2067, %v2792
    %v2857 = vadd.f32 %v2070, %v2793
    %v2858 = vadd.f32 %v2073, %v2794
    %v2859 = vadd.f32 %v2076, %v2795
    %v2860 = vadd.f32 %v2079, %v2796
    %v2861 = vadd.f32 %v2082, %v2797
    %v2862 = vadd.f32 %v2085, %v2798
    %v2863 = vadd.f32 %v2088, %v2799
    %v2864 = vadd.f32 %v2091, %v2800
    %v2865 = vadd.f32 %v2094, %v2801
    %v2866 = vadd.f32 %v2097, %v2802
    %v2867 = vadd.f32 %v2100, %v2803
    %v2868 = vadd.f32 %v2103, %v2804
    %v2869 = vadd.f32 %v2106, %v2805
    %v2870 = vadd.f32 %v2109, %v2806
    %v2871 = vadd.f32 %v2112, %v2807
    %v2872 = vadd.f32 %v2115, %v2808
    %v2873 = vadd.f32 %v2118, %v2809
    %v2874 = vadd.f32 %v2121, %v2810
    %v2875 = vadd.f32 %v2124, %v2811
    %v2876 = vadd.f32 %v2127, %v2812
    %v2877 = vadd.f32 %v2130, %v2813
    %v2878 = vadd.f32 %v2133, %v2814
    %v2879 = vadd.f32 %v2136, %v2815
    %v2880 = vadd.f32 %v2139, %v2816
    %v2881 = vadd.f32 %v2142, %v2817
    %v2882 = vadd.f32 %v2145, %v2818
    %v2883 = vadd.f32 %v2148, %v2819
    %v2884 = vadd.f32 %v2151, %v2820
    %v2885 = vadd.f32 %v2154, %v2821
    %v2886 = vlaneseq
    %v2887 = vand.u32 %v2886, 127
    %vm2888 = vcmp.eq.s32.totalorder %v2887, 0
    %vm2889 = vcmp.eq.s32.totalorder %v2887, 1
    %2891 = vset.pattern.permute.xlu0 1
    %2892 = vperm.xlu0 %2891, %v2854
    %v2893 = vpop.permute.xlu0 %2892
    %2896 = vset.pattern.permute.xlu0 1
    %2897 = vperm.xlu0 %2896, %v2855
    %v2898 = vpop.permute.xlu0 %2897
    %2901 = vset.pattern.permute.xlu0 1
    %2902 = vperm.xlu0 %2901, %v2856
    %v2903 = vpop.permute.xlu0 %2902
    %2906 = vset.pattern.permute.xlu0 1
    %2907 = vperm.xlu0 %2906, %v2857
    %v2908 = vpop.permute.xlu0 %2907
    %2911 = vset.pattern.permute.xlu0 1
    %2912 = vperm.xlu0 %2911, %v2858
    %v2913 = vpop.permute.xlu0 %2912
    %2916 = vset.pattern.permute.xlu0 1
    %2917 = vperm.xlu0 %2916, %v2859
    %v2918 = vpop.permute.xlu0 %2917
    %2921 = vset.pattern.permute.xlu0 1
    %2922 = vperm.xlu0 %2921, %v2860
    %v2923 = vpop.permute.xlu0 %2922
    %2926 = vset.pattern.permute.xlu0 1
    %2927 = vperm.xlu0 %2926, %v2861
    %v2928 = vpop.permute.xlu0 %2927
    %2931 = vset.pattern.permute.xlu0 1
    %2932 = vperm.xlu0 %2931, %v2862
    %v2933 = vpop.permute.xlu0 %2932
    %2936 = vset.pattern.permute.xlu0 1
    %2937 = vperm.xlu0 %2936, %v2863
    %v2938 = vpop.permute.xlu0 %2937
    %2941 = vset.pattern.permute.xlu0 1
    %2942 = vperm.xlu0 %2941, %v2864
    %v2943 = vpop.permute.xlu0 %2942
    %2946 = vset.pattern.permute.xlu0 1
    %2947 = vperm.xlu0 %2946, %v2865
    %v2948 = vpop.permute.xlu0 %2947
    %2951 = vset.pattern.permute.xlu0 1
    %2952 = vperm.xlu0 %2951, %v2866
    %v2953 = vpop.permute.xlu0 %2952
    %2956 = vset.pattern.permute.xlu0 1
    %2957 = vperm.xlu0 %2956, %v2867
    %v2958 = vpop.permute.xlu0 %2957
    %2961 = vset.pattern.permute.xlu0 1
    %2962 = vperm.xlu0 %2961, %v2868
    %v2963 = vpop.permute.xlu0 %2962
    %2966 = vset.pattern.permute.xlu0 1
    %2967 = vperm.xlu0 %2966, %v2869
    %v2968 = vpop.permute.xlu0 %2967
    %2971 = vset.pattern.permute.xlu0 1
    %2972 = vperm.xlu0 %2971, %v2870
    %v2973 = vpop.permute.xlu0 %2972
    %2976 = vset.pattern.permute.xlu0 1
    %2977 = vperm.xlu0 %2976, %v2871
    %v2978 = vpop.permute.xlu0 %2977
    %2981 = vset.pattern.permute.xlu0 1
    %2982 = vperm.xlu0 %2981, %v2872
    %v2983 = vpop.permute.xlu0 %2982
    %2986 = vset.pattern.permute.xlu0 1
    %2987 = vperm.xlu0 %2986, %v2873
    %v2988 = vpop.permute.xlu0 %2987
    %2991 = vset.pattern.permute.xlu0 1
    %2992 = vperm.xlu0 %2991, %v2874
    %v2993 = vpop.permute.xlu0 %2992
    %2996 = vset.pattern.permute.xlu0 1
    %2997 = vperm.xlu0 %2996, %v2875
    %v2998 = vpop.permute.xlu0 %2997
    %3001 = vset.pattern.permute.xlu0 1
    %3002 = vperm.xlu0 %3001, %v2876
    %v3003 = vpop.permute.xlu0 %3002
    %3006 = vset.pattern.permute.xlu0 1
    %3007 = vperm.xlu0 %3006, %v2877
    %v3008 = vpop.permute.xlu0 %3007
    %3011 = vset.pattern.permute.xlu0 1
    %3012 = vperm.xlu0 %3011, %v2878
    %v3013 = vpop.permute.xlu0 %3012
    %3016 = vset.pattern.permute.xlu0 1
    %3017 = vperm.xlu0 %3016, %v2879
    %v3018 = vpop.permute.xlu0 %3017
    %3021 = vset.pattern.permute.xlu0 1
    %3022 = vperm.xlu0 %3021, %v2880
    %v3023 = vpop.permute.xlu0 %3022
    %3026 = vset.pattern.permute.xlu0 1
    %3027 = vperm.xlu0 %3026, %v2881
    %v3028 = vpop.permute.xlu0 %3027
    %3031 = vset.pattern.permute.xlu0 1
    %3032 = vperm.xlu0 %3031, %v2882
    %v3033 = vpop.permute.xlu0 %3032
    %3036 = vset.pattern.permute.xlu0 1
    %3037 = vperm.xlu0 %3036, %v2883
    %v3038 = vpop.permute.xlu0 %3037
    %3041 = vset.pattern.permute.xlu0 1
    %3042 = vperm.xlu0 %3041, %v2884
    %v3043 = vpop.permute.xlu0 %3042
    %3046 = vset.pattern.permute.xlu0 1
    %3047 = vperm.xlu0 %3046, %v2885
    %v3048 = vpop.permute.xlu0 %3047
    %v3050 = vsel %vm2889, %v2893, 0.0
    %v3051 = vsel %vm2889, %v2898, 0.0
    %v3052 = vsel %vm2889, %v2903, 0.0
    %v3053 = vsel %vm2889, %v2908, 0.0
    %v3054 = vsel %vm2889, %v2913, 0.0
    %v3055 = vsel %vm2889, %v2918, 0.0
    %v3056 = vsel %vm2889, %v2923, 0.0
    %v3057 = vsel %vm2889, %v2928, 0.0
    %v3058 = vsel %vm2889, %v2933, 0.0
    %v3059 = vsel %vm2889, %v2938, 0.0
    %v3060 = vsel %vm2889, %v2943, 0.0
    %v3061 = vsel %vm2889, %v2948, 0.0
    %v3062 = vsel %vm2889, %v2953, 0.0
    %v3063 = vsel %vm2889, %v2958, 0.0
    %v3064 = vsel %vm2889, %v2963, 0.0
    %v3065 = vsel %vm2889, %v2968, 0.0
    %v3066 = vsel %vm2889, %v2973, 0.0
    %v3067 = vsel %vm2889, %v2978, 0.0
    %v3068 = vsel %vm2889, %v2983, 0.0
    %v3069 = vsel %vm2889, %v2988, 0.0
    %v3070 = vsel %vm2889, %v2993, 0.0
    %v3071 = vsel %vm2889, %v2998, 0.0
    %v3072 = vsel %vm2889, %v3003, 0.0
    %v3073 = vsel %vm2889, %v3008, 0.0
    %v3074 = vsel %vm2889, %v3013, 0.0
    %v3075 = vsel %vm2889, %v3018, 0.0
    %v3076 = vsel %vm2889, %v3023, 0.0
    %v3077 = vsel %vm2889, %v3028, 0.0
    %v3078 = vsel %vm2889, %v3033, 0.0
    %v3079 = vsel %vm2889, %v3038, 0.0
    %v3080 = vsel %vm2889, %v3043, 0.0
    %v3081 = vsel %vm2889, %v3048, 0.0
    %3083 = vset.pattern.permute.xlu0 0
    %3084 = vperm.xlu0 %3083, %v2822
    %v3085 = vpop.permute.xlu0 %3084
    %3088 = vset.pattern.permute.xlu0 0
    %3089 = vperm.xlu0 %3088, %v2823
    %v3090 = vpop.permute.xlu0 %3089
    %3093 = vset.pattern.permute.xlu0 0
    %3094 = vperm.xlu0 %3093, %v2824
    %v3095 = vpop.permute.xlu0 %3094
    %3098 = vset.pattern.permute.xlu0 0
    %3099 = vperm.xlu0 %3098, %v2825
    %v3100 = vpop.permute.xlu0 %3099
    %3103 = vset.pattern.permute.xlu0 0
    %3104 = vperm.xlu0 %3103, %v2826
    %v3105 = vpop.permute.xlu0 %3104
    %3108 = vset.pattern.permute.xlu0 0
    %3109 = vperm.xlu0 %3108, %v2827
    %v3110 = vpop.permute.xlu0 %3109
    %3113 = vset.pattern.permute.xlu0 0
    %3114 = vperm.xlu0 %3113, %v2828
    %v3115 = vpop.permute.xlu0 %3114
    %3118 = vset.pattern.permute.xlu0 0
    %3119 = vperm.xlu0 %3118, %v2829
    %v3120 = vpop.permute.xlu0 %3119
    %3123 = vset.pattern.permute.xlu0 0
    %3124 = vperm.xlu0 %3123, %v2830
    %v3125 = vpop.permute.xlu0 %3124
    %3128 = vset.pattern.permute.xlu0 0
    %3129 = vperm.xlu0 %3128, %v2831
    %v3130 = vpop.permute.xlu0 %3129
    %3133 = vset.pattern.permute.xlu0 0
    %3134 = vperm.xlu0 %3133, %v2832
    %v3135 = vpop.permute.xlu0 %3134
    %3138 = vset.pattern.permute.xlu0 0
    %3139 = vperm.xlu0 %3138, %v2833
    %v3140 = vpop.permute.xlu0 %3139
    %3143 = vset.pattern.permute.xlu0 0
    %3144 = vperm.xlu0 %3143, %v2834
    %v3145 = vpop.permute.xlu0 %3144
    %3148 = vset.pattern.permute.xlu0 0
    %3149 = vperm.xlu0 %3148, %v2835
    %v3150 = vpop.permute.xlu0 %3149
    %3153 = vset.pattern.permute.xlu0 0
    %3154 = vperm.xlu0 %3153, %v2836
    %v3155 = vpop.permute.xlu0 %3154
    %3158 = vset.pattern.permute.xlu0 0
    %3159 = vperm.xlu0 %3158, %v2837
    %v3160 = vpop.permute.xlu0 %3159
    %3163 = vset.pattern.permute.xlu0 0
    %3164 = vperm.xlu0 %3163, %v2838
    %v3165 = vpop.permute.xlu0 %3164
    %3168 = vset.pattern.permute.xlu0 0
    %3169 = vperm.xlu0 %3168, %v2839
    %v3170 = vpop.permute.xlu0 %3169
    %3173 = vset.pattern.permute.xlu0 0
    %3174 = vperm.xlu0 %3173, %v2840
    %v3175 = vpop.permute.xlu0 %3174
    %3178 = vset.pattern.permute.xlu0 0
    %3179 = vperm.xlu0 %3178, %v2841
    %v3180 = vpop.permute.xlu0 %3179
    %3183 = vset.pattern.permute.xlu0 0
    %3184 = vperm.xlu0 %3183, %v2842
    %v3185 = vpop.permute.xlu0 %3184
    %3188 = vset.pattern.permute.xlu0 0
    %3189 = vperm.xlu0 %3188, %v2843
    %v3190 = vpop.permute.xlu0 %3189
    %3193 = vset.pattern.permute.xlu0 0
    %3194 = vperm.xlu0 %3193, %v2844
    %v3195 = vpop.permute.xlu0 %3194
    %3198 = vset.pattern.permute.xlu0 0
    %3199 = vperm.xlu0 %3198, %v2845
    %v3200 = vpop.permute.xlu0 %3199
    %3203 = vset.pattern.permute.xlu0 0
    %3204 = vperm.xlu0 %3203, %v2846
    %v3205 = vpop.permute.xlu0 %3204
    %3208 = vset.pattern.permute.xlu0 0
    %3209 = vperm.xlu0 %3208, %v2847
    %v3210 = vpop.permute.xlu0 %3209
    %3213 = vset.pattern.permute.xlu0 0
    %3214 = vperm.xlu0 %3213, %v2848
    %v3215 = vpop.permute.xlu0 %3214
    %3218 = vset.pattern.permute.xlu0 0
    %3219 = vperm.xlu0 %3218, %v2849
    %v3220 = vpop.permute.xlu0 %3219
    %3223 = vset.pattern.permute.xlu0 0
    %3224 = vperm.xlu0 %3223, %v2850
    %v3225 = vpop.permute.xlu0 %3224
    %3228 = vset.pattern.permute.xlu0 0
    %3229 = vperm.xlu0 %3228, %v2851
    %v3230 = vpop.permute.xlu0 %3229
    %3233 = vset.pattern.permute.xlu0 0
    %3234 = vperm.xlu0 %3233, %v2852
    %v3235 = vpop.permute.xlu0 %3234
    %3238 = vset.pattern.permute.xlu0 0
    %3239 = vperm.xlu0 %3238, %v2853
    %v3240 = vpop.permute.xlu0 %3239
    %v3242 = vsel %vm2888, %v3085, %v3050
    %v3243 = vsel %vm2888, %v3090, %v3051
    %v3244 = vsel %vm2888, %v3095, %v3052
    %v3245 = vsel %vm2888, %v3100, %v3053
    %v3246 = vsel %vm2888, %v3105, %v3054
    %v3247 = vsel %vm2888, %v3110, %v3055
    %v3248 = vsel %vm2888, %v3115, %v3056
    %v3249 = vsel %vm2888, %v3120, %v3057
    %v3250 = vsel %vm2888, %v3125, %v3058
    %v3251 = vsel %vm2888, %v3130, %v3059
    %v3252 = vsel %vm2888, %v3135, %v3060
    %v3253 = vsel %vm2888, %v3140, %v3061
    %v3254 = vsel %vm2888, %v3145, %v3062
    %v3255 = vsel %vm2888, %v3150, %v3063
    %v3256 = vsel %vm2888, %v3155, %v3064
    %v3257 = vsel %vm2888, %v3160, %v3065
    %v3258 = vsel %vm2888, %v3165, %v3066
    %v3259 = vsel %vm2888, %v3170, %v3067
    %v3260 = vsel %vm2888, %v3175, %v3068
    %v3261 = vsel %vm2888, %v3180, %v3069
    %v3262 = vsel %vm2888, %v3185, %v3070
    %v3263 = vsel %vm2888, %v3190, %v3071
    %v3264 = vsel %vm2888, %v3195, %v3072
    %v3265 = vsel %vm2888, %v3200, %v3073
    %v3266 = vsel %vm2888, %v3205, %v3074
    %v3267 = vsel %vm2888, %v3210, %v3075
    %v3268 = vsel %vm2888, %v3215, %v3076
    %v3269 = vsel %vm2888, %v3220, %v3077
    %v3270 = vsel %vm2888, %v3225, %v3078
    %v3271 = vsel %vm2888, %v3230, %v3079
    %v3272 = vsel %vm2888, %v3235, %v3080
    %v3273 = vsel %vm2888, %v3240, %v3081
    %3274 = vst [vmem:[%s16] sm:$0xff] %v3242
    %3275 = vst [vmem:[%s16 + $0x8] sm:$0xff] %v3243
    %3276 = vst [vmem:[%s16 + $0x10] sm:$0xff] %v3244
    %3277 = vst [vmem:[%s16 + $0x18] sm:$0xff] %v3245
    %3278 = vst [vmem:[%s16 + $0x20] sm:$0xff] %v3246
    %3279 = vst [vmem:[%s16 + $0x28] sm:$0xff] %v3247
    %3280 = vst [vmem:[%s16 + $0x30] sm:$0xff] %v3248
    %3281 = vst [vmem:[%s16 + $0x38] sm:$0xff] %v3249
    %3282 = vst [vmem:[%s16 + $0x40] sm:$0xff] %v3250
    %3283 = vst [vmem:[%s16 + $0x48] sm:$0xff] %v3251
    %3284 = vst [vmem:[%s16 + $0x50] sm:$0xff] %v3252
    %3285 = vst [vmem:[%s16 + $0x58] sm:$0xff] %v3253
    %3286 = vst [vmem:[%s16 + $0x60] sm:$0xff] %v3254
    %3287 = vst [vmem:[%s16 + $0x68] sm:$0xff] %v3255
    %3288 = vst [vmem:[%s16 + $0x70] sm:$0xff] %v3256
    %3289 = vst [vmem:[%s16 + $0x78] sm:$0xff] %v3257
    %3290 = vst [vmem:[%s16 + $0x80] sm:$0xff] %v3258
    %3291 = vst [vmem:[%s16 + $0x88] sm:$0xff] %v3259
    %3292 = vst [vmem:[%s16 + $0x90] sm:$0xff] %v3260
    %3293 = vst [vmem:[%s16 + $0x98] sm:$0xff] %v3261
    %3294 = vst [vmem:[%s16 + $0xa0] sm:$0xff] %v3262
    %3295 = vst [vmem:[%s16 + $0xa8] sm:$0xff] %v3263
    %3296 = vst [vmem:[%s16 + $0xb0] sm:$0xff] %v3264
    %3297 = vst [vmem:[%s16 + $0xb8] sm:$0xff] %v3265
    %3298 = vst [vmem:[%s16 + $0xc0] sm:$0xff] %v3266
    %3299 = vst [vmem:[%s16 + $0xc8] sm:$0xff] %v3267
    %3300 = vst [vmem:[%s16 + $0xd0] sm:$0xff] %v3268
    %3301 = vst [vmem:[%s16 + $0xd8] sm:$0xff] %v3269
    %3302 = vst [vmem:[%s16 + $0xe0] sm:$0xff] %v3270
    %3303 = vst [vmem:[%s16 + $0xe8] sm:$0xff] %v3271
    %3304 = vst [vmem:[%s16 + $0xf0] sm:$0xff] %v3272
    %3305 = vst [vmem:[%s16 + $0xf8] sm:$0xff] %v3273
    %v3306 = vld [vmem:[%s2] sm:$0xff]
    %v3307 = vld [vmem:[%s2 + $0x8] sm:$0xff]
    %v3308 = vld [vmem:[%s2 + $0x10] sm:$0xff]
    %v3309 = vld [vmem:[%s2 + $0x18] sm:$0xff]
    %v3310 = vld [vmem:[%s2 + $0x20] sm:$0xff]
    %v3311 = vld [vmem:[%s2 + $0x28] sm:$0xff]
    %v3312 = vld [vmem:[%s2 + $0x30] sm:$0xff]
    %v3313 = vld [vmem:[%s2 + $0x38] sm:$0xff]
    %v3314 = vld [vmem:[%s2 + $0x40] sm:$0xff]
    %v3315 = vld [vmem:[%s2 + $0x48] sm:$0xff]
    %v3316 = vld [vmem:[%s2 + $0x50] sm:$0xff]
    %v3317 = vld [vmem:[%s2 + $0x58] sm:$0xff]
    %v3318 = vld [vmem:[%s2 + $0x60] sm:$0xff]
    %v3319 = vld [vmem:[%s2 + $0x68] sm:$0xff]
    %v3320 = vld [vmem:[%s2 + $0x70] sm:$0xff]
    %v3321 = vld [vmem:[%s2 + $0x78] sm:$0xff]
    %v3322 = vld [vmem:[%s2 + $0x80] sm:$0xff]
    %v3323 = vld [vmem:[%s2 + $0x88] sm:$0xff]
    %v3324 = vld [vmem:[%s2 + $0x90] sm:$0xff]
    %v3325 = vld [vmem:[%s2 + $0x98] sm:$0xff]
    %v3326 = vld [vmem:[%s2 + $0xa0] sm:$0xff]
    %v3327 = vld [vmem:[%s2 + $0xa8] sm:$0xff]
    %v3328 = vld [vmem:[%s2 + $0xb0] sm:$0xff]
    %v3329 = vld [vmem:[%s2 + $0xb8] sm:$0xff]
    %v3330 = vld [vmem:[%s2 + $0xc0] sm:$0xff]
    %v3331 = vld [vmem:[%s2 + $0xc8] sm:$0xff]
    %v3332 = vld [vmem:[%s2 + $0xd0] sm:$0xff]
    %v3333 = vld [vmem:[%s2 + $0xd8] sm:$0xff]
    %v3334 = vld [vmem:[%s2 + $0xe0] sm:$0xff]
    %v3335 = vld [vmem:[%s2 + $0xe8] sm:$0xff]
    %v3336 = vld [vmem:[%s2 + $0xf0] sm:$0xff]
    %v3337 = vld [vmem:[%s2 + $0xf8] sm:$0xff]
    %v3338 = vld [vmem:[%s3] sm:$0xff]
    %v3339 = vld [vmem:[%s3 + $0x8] sm:$0xff]
    %v3340 = vld [vmem:[%s3 + $0x10] sm:$0xff]
    %v3341 = vld [vmem:[%s3 + $0x18] sm:$0xff]
    %v3342 = vld [vmem:[%s3 + $0x20] sm:$0xff]
    %v3343 = vld [vmem:[%s3 + $0x28] sm:$0xff]
    %v3344 = vld [vmem:[%s3 + $0x30] sm:$0xff]
    %v3345 = vld [vmem:[%s3 + $0x38] sm:$0xff]
    %v3346 = vld [vmem:[%s3 + $0x40] sm:$0xff]
    %v3347 = vld [vmem:[%s3 + $0x48] sm:$0xff]
    %v3348 = vld [vmem:[%s3 + $0x50] sm:$0xff]
    %v3349 = vld [vmem:[%s3 + $0x58] sm:$0xff]
    %v3350 = vld [vmem:[%s3 + $0x60] sm:$0xff]
    %v3351 = vld [vmem:[%s3 + $0x68] sm:$0xff]
    %v3352 = vld [vmem:[%s3 + $0x70] sm:$0xff]
    %v3353 = vld [vmem:[%s3 + $0x78] sm:$0xff]
    %v3354 = vld [vmem:[%s3 + $0x80] sm:$0xff]
    %v3355 = vld [vmem:[%s3 + $0x88] sm:$0xff]
    %v3356 = vld [vmem:[%s3 + $0x90] sm:$0xff]
    %v3357 = vld [vmem:[%s3 + $0x98] sm:$0xff]
    %v3358 = vld [vmem:[%s3 + $0xa0] sm:$0xff]
    %v3359 = vld [vmem:[%s3 + $0xa8] sm:$0xff]
    %v3360 = vld [vmem:[%s3 + $0xb0] sm:$0xff]
    %v3361 = vld [vmem:[%s3 + $0xb8] sm:$0xff]
    %v3362 = vld [vmem:[%s3 + $0xc0] sm:$0xff]
    %v3363 = vld [vmem:[%s3 + $0xc8] sm:$0xff]
    %v3364 = vld [vmem:[%s3 + $0xd0] sm:$0xff]
    %v3365 = vld [vmem:[%s3 + $0xd8] sm:$0xff]
    %v3366 = vld [vmem:[%s3 + $0xe0] sm:$0xff]
    %v3367 = vld [vmem:[%s3 + $0xe8] sm:$0xff]
    %v3368 = vld [vmem:[%s3 + $0xf0] sm:$0xff]
    %v3369 = vld [vmem:[%s3 + $0xf8] sm:$0xff]
    %3370 = vrot.lane.b32.xlu0 %v2854, 127
    %v3371 = vpop.permute.xlu0 %3370
    %3372 = vrot.lane.b32.xlu0 %v2855, 127
    %v3373 = vpop.permute.xlu0 %3372
    %3374 = vrot.lane.b32.xlu0 %v2856, 127
    %v3375 = vpop.permute.xlu0 %3374
    %3376 = vrot.lane.b32.xlu0 %v2857, 127
    %v3377 = vpop.permute.xlu0 %3376
    %3378 = vrot.lane.b32.xlu0 %v2858, 127
    %v3379 = vpop.permute.xlu0 %3378
    %3380 = vrot.lane.b32.xlu0 %v2859, 127
    %v3381 = vpop.permute.xlu0 %3380
    %3382 = vrot.lane.b32.xlu0 %v2860, 127
    %v3383 = vpop.permute.xlu0 %3382
    %3384 = vrot.lane.b32.xlu0 %v2861, 127
    %v3385 = vpop.permute.xlu0 %3384
    %3386 = vrot.lane.b32.xlu0 %v2862, 127
    %v3387 = vpop.permute.xlu0 %3386
    %3388 = vrot.lane.b32.xlu0 %v2863, 127
    %v3389 = vpop.permute.xlu0 %3388
    %3390 = vrot.lane.b32.xlu0 %v2864, 127
    %v3391 = vpop.permute.xlu0 %3390
    %3392 = vrot.lane.b32.xlu0 %v2865, 127
    %v3393 = vpop.permute.xlu0 %3392
    %3394 = vrot.lane.b32.xlu0 %v2866, 127
    %v3395 = vpop.permute.xlu0 %3394
    %3396 = vrot.lane.b32.xlu0 %v2867, 127
    %v3397 = vpop.permute.xlu0 %3396
    %3398 = vrot.lane.b32.xlu0 %v2868, 127
    %v3399 = vpop.permute.xlu0 %3398
    %3400 = vrot.lane.b32.xlu0 %v2869, 127
    %v3401 = vpop.permute.xlu0 %3400
    %3402 = vrot.lane.b32.xlu0 %v2870, 127
    %v3403 = vpop.permute.xlu0 %3402
    %3404 = vrot.lane.b32.xlu0 %v2871, 127
    %v3405 = vpop.permute.xlu0 %3404
    %3406 = vrot.lane.b32.xlu0 %v2872, 127
    %v3407 = vpop.permute.xlu0 %3406
    %3408 = vrot.lane.b32.xlu0 %v2873, 127
    %v3409 = vpop.permute.xlu0 %3408
    %3410 = vrot.lane.b32.xlu0 %v2874, 127
    %v3411 = vpop.permute.xlu0 %3410
    %3412 = vrot.lane.b32.xlu0 %v2875, 127
    %v3413 = vpop.permute.xlu0 %3412
    %3414 = vrot.lane.b32.xlu0 %v2876, 127
    %v3415 = vpop.permute.xlu0 %3414
    %3416 = vrot.lane.b32.xlu0 %v2877, 127
    %v3417 = vpop.permute.xlu0 %3416
    %3418 = vrot.lane.b32.xlu0 %v2878, 127
    %v3419 = vpop.permute.xlu0 %3418
    %3420 = vrot.lane.b32.xlu0 %v2879, 127
    %v3421 = vpop.permute.xlu0 %3420
    %3422 = vrot.lane.b32.xlu0 %v2880, 127
    %v3423 = vpop.permute.xlu0 %3422
    %3424 = vrot.lane.b32.xlu0 %v2881, 127
    %v3425 = vpop.permute.xlu0 %3424
    %3426 = vrot.lane.b32.xlu0 %v2882, 127
    %v3427 = vpop.permute.xlu0 %3426
    %3428 = vrot.lane.b32.xlu0 %v2883, 127
    %v3429 = vpop.permute.xlu0 %3428
    %3430 = vrot.lane.b32.xlu0 %v2884, 127
    %v3431 = vpop.permute.xlu0 %3430
    %3432 = vrot.lane.b32.xlu0 %v2885, 127
    %v3433 = vpop.permute.xlu0 %3432
    %v3466 = vmax.f32 %v2822, %v3371
    %v3467 = vmax.f32 %v2823, %v3373
    %v3468 = vmax.f32 %v2824, %v3375
    %v3469 = vmax.f32 %v2825, %v3377
    %v3470 = vmax.f32 %v2826, %v3379
    %v3471 = vmax.f32 %v2827, %v3381
    %v3472 = vmax.f32 %v2828, %v3383
    %v3473 = vmax.f32 %v2829, %v3385
    %v3474 = vmax.f32 %v2830, %v3387
    %v3475 = vmax.f32 %v2831, %v3389
    %v3476 = vmax.f32 %v2832, %v3391
    %v3477 = vmax.f32 %v2833, %v3393
    %v3478 = vmax.f32 %v2834, %v3395
    %v3479 = vmax.f32 %v2835, %v3397
    %v3480 = vmax.f32 %v2836, %v3399
    %v3481 = vmax.f32 %v2837, %v3401
    %v3482 = vmax.f32 %v2838, %v3403
    %v3483 = vmax.f32 %v2839, %v3405
    %v3484 = vmax.f32 %v2840, %v3407
    %v3485 = vmax.f32 %v2841, %v3409
    %v3486 = vmax.f32 %v2842, %v3411
    %v3487 = vmax.f32 %v2843, %v3413
    %v3488 = vmax.f32 %v2844, %v3415
    %v3489 = vmax.f32 %v2845, %v3417
    %v3490 = vmax.f32 %v2846, %v3419
    %v3491 = vmax.f32 %v2847, %v3421
    %v3492 = vmax.f32 %v2848, %v3423
    %v3493 = vmax.f32 %v2849, %v3425
    %v3494 = vmax.f32 %v2850, %v3427
    %v3495 = vmax.f32 %v2851, %v3429
    %v3496 = vmax.f32 %v2852, %v3431
    %v3497 = vmax.f32 %v2853, %v3433
    %v3498 = vsub.f32 %v2822, %v3466
    %v3499 = vsub.f32 %v2823, %v3467
    %v3500 = vsub.f32 %v2824, %v3468
    %v3501 = vsub.f32 %v2825, %v3469
    %v3502 = vsub.f32 %v2826, %v3470
    %v3503 = vsub.f32 %v2827, %v3471
    %v3504 = vsub.f32 %v2828, %v3472
    %v3505 = vsub.f32 %v2829, %v3473
    %v3506 = vsub.f32 %v2830, %v3474
    %v3507 = vsub.f32 %v2831, %v3475
    %v3508 = vsub.f32 %v2832, %v3476
    %v3509 = vsub.f32 %v2833, %v3477
    %v3510 = vsub.f32 %v2834, %v3478
    %v3511 = vsub.f32 %v2835, %v3479
    %v3512 = vsub.f32 %v2836, %v3480
    %v3513 = vsub.f32 %v2837, %v3481
    %v3514 = vsub.f32 %v2838, %v3482
    %v3515 = vsub.f32 %v2839, %v3483
    %v3516 = vsub.f32 %v2840, %v3484
    %v3517 = vsub.f32 %v2841, %v3485
    %v3518 = vsub.f32 %v2842, %v3486
    %v3519 = vsub.f32 %v2843, %v3487
    %v3520 = vsub.f32 %v2844, %v3488
    %v3521 = vsub.f32 %v2845, %v3489
    %v3522 = vsub.f32 %v2846, %v3490
    %v3523 = vsub.f32 %v2847, %v3491
    %v3524 = vsub.f32 %v2848, %v3492
    %v3525 = vsub.f32 %v2849, %v3493
    %v3526 = vsub.f32 %v2850, %v3494
    %v3527 = vsub.f32 %v2851, %v3495
    %v3528 = vsub.f32 %v2852, %v3496
    %v3529 = vsub.f32 %v2853, %v3497
    %v3530 = vmul.f32 %v3498, 1.442695
    %v3531 = vpow.pop %v3530
    %v3532 = vmul.f32 %v3499, 1.442695
    %v3533 = vpow.pop %v3532
    %v3534 = vmul.f32 %v3500, 1.442695
    %v3535 = vpow.pop %v3534
    %v3536 = vmul.f32 %v3501, 1.442695
    %v3537 = vpow.pop %v3536
    %v3538 = vmul.f32 %v3502, 1.442695
    %v3539 = vpow.pop %v3538
    %v3540 = vmul.f32 %v3503, 1.442695
    %v3541 = vpow.pop %v3540
    %v3542 = vmul.f32 %v3504, 1.442695
    %v3543 = vpow.pop %v3542
    %v3544 = vmul.f32 %v3505, 1.442695
    %v3545 = vpow.pop %v3544
    %v3546 = vmul.f32 %v3506, 1.442695
    %v3547 = vpow.pop %v3546
    %v3548 = vmul.f32 %v3507, 1.442695
    %v3549 = vpow.pop %v3548
    %v3550 = vmul.f32 %v3508, 1.442695
    %v3551 = vpow.pop %v3550
    %v3552 = vmul.f32 %v3509, 1.442695
    %v3553 = vpow.pop %v3552
    %v3554 = vmul.f32 %v3510, 1.442695
    %v3555 = vpow.pop %v3554
    %v3556 = vmul.f32 %v3511, 1.442695
    %v3557 = vpow.pop %v3556
    %v3558 = vmul.f32 %v3512, 1.442695
    %v3559 = vpow.pop %v3558
    %v3560 = vmul.f32 %v3513, 1.442695
    %v3561 = vpow.pop %v3560
    %v3562 = vmul.f32 %v3514, 1.442695
    %v3563 = vpow.pop %v3562
    %v3564 = vmul.f32 %v3515, 1.442695
    %v3565 = vpow.pop %v3564
    %v3566 = vmul.f32 %v3516, 1.442695
    %v3567 = vpow.pop %v3566
    %v3568 = vmul.f32 %v3517, 1.442695
    %v3569 = vpow.pop %v3568
    %v3570 = vmul.f32 %v3518, 1.442695
    %v3571 = vpow.pop %v3570
    %v3572 = vmul.f32 %v3519, 1.442695
    %v3573 = vpow.pop %v3572
    %v3574 = vmul.f32 %v3520, 1.442695
    %v3575 = vpow.pop %v3574
    %v3576 = vmul.f32 %v3521, 1.442695
    %v3577 = vpow.pop %v3576
    %v3578 = vmul.f32 %v3522, 1.442695
    %v3579 = vpow.pop %v3578
    %v3580 = vmul.f32 %v3523, 1.442695
    %v3581 = vpow.pop %v3580
    %v3582 = vmul.f32 %v3524, 1.442695
    %v3583 = vpow.pop %v3582
    %v3584 = vmul.f32 %v3525, 1.442695
    %v3585 = vpow.pop %v3584
    %v3586 = vmul.f32 %v3526, 1.442695
    %v3587 = vpow.pop %v3586
    %v3588 = vmul.f32 %v3527, 1.442695
    %v3589 = vpow.pop %v3588
    %v3590 = vmul.f32 %v3528, 1.442695
    %v3591 = vpow.pop %v3590
    %v3592 = vmul.f32 %v3529, 1.442695
    %v3593 = vpow.pop %v3592
    %3626 = vrot.lane.b32.xlu0 %v3466, 1
    %v3627 = vpop.permute.xlu0 %3626
    %3628 = vrot.lane.b32.xlu0 %v3467, 1
    %v3629 = vpop.permute.xlu0 %3628
    %3630 = vrot.lane.b32.xlu0 %v3468, 1
    %v3631 = vpop.permute.xlu0 %3630
    %3632 = vrot.lane.b32.xlu0 %v3469, 1
    %v3633 = vpop.permute.xlu0 %3632
    %3634 = vrot.lane.b32.xlu0 %v3470, 1
    %v3635 = vpop.permute.xlu0 %3634
    %3636 = vrot.lane.b32.xlu0 %v3471, 1
    %v3637 = vpop.permute.xlu0 %3636
    %3638 = vrot.lane.b32.xlu0 %v3472, 1
    %v3639 = vpop.permute.xlu0 %3638
    %3640 = vrot.lane.b32.xlu0 %v3473, 1
    %v3641 = vpop.permute.xlu0 %3640
    %3642 = vrot.lane.b32.xlu0 %v3474, 1
    %v3643 = vpop.permute.xlu0 %3642
    %3644 = vrot.lane.b32.xlu0 %v3475, 1
    %v3645 = vpop.permute.xlu0 %3644
    %3646 = vrot.lane.b32.xlu0 %v3476, 1
    %v3647 = vpop.permute.xlu0 %3646
    %3648 = vrot.lane.b32.xlu0 %v3477, 1
    %v3649 = vpop.permute.xlu0 %3648
    %3650 = vrot.lane.b32.xlu0 %v3478, 1
    %v3651 = vpop.permute.xlu0 %3650
    %3652 = vrot.lane.b32.xlu0 %v3479, 1
    %v3653 = vpop.permute.xlu0 %3652
    %3654 = vrot.lane.b32.xlu0 %v3480, 1
    %v3655 = vpop.permute.xlu0 %3654
    %3656 = vrot.lane.b32.xlu0 %v3481, 1
    %v3657 = vpop.permute.xlu0 %3656
    %3658 = vrot.lane.b32.xlu0 %v3482, 1
    %v3659 = vpop.permute.xlu0 %3658
    %3660 = vrot.lane.b32.xlu0 %v3483, 1
    %v3661 = vpop.permute.xlu0 %3660
    %3662 = vrot.lane.b32.xlu0 %v3484, 1
    %v3663 = vpop.permute.xlu0 %3662
    %3664 = vrot.lane.b32.xlu0 %v3485, 1
    %v3665 = vpop.permute.xlu0 %3664
    %3666 = vrot.lane.b32.xlu0 %v3486, 1
    %v3667 = vpop.permute.xlu0 %3666
    %3668 = vrot.lane.b32.xlu0 %v3487, 1
    %v3669 = vpop.permute.xlu0 %3668
    %3670 = vrot.lane.b32.xlu0 %v3488, 1
    %v3671 = vpop.permute.xlu0 %3670
    %3672 = vrot.lane.b32.xlu0 %v3489, 1
    %v3673 = vpop.permute.xlu0 %3672
    %3674 = vrot.lane.b32.xlu0 %v3490, 1
    %v3675 = vpop.permute.xlu0 %3674
    %3676 = vrot.lane.b32.xlu0 %v3491, 1
    %v3677 = vpop.permute.xlu0 %3676
    %3678 = vrot.lane.b32.xlu0 %v3492, 1
    %v3679 = vpop.permute.xlu0 %3678
    %3680 = vrot.lane.b32.xlu0 %v3493, 1
    %v3681 = vpop.permute.xlu0 %3680
    %3682 = vrot.lane.b32.xlu0 %v3494, 1
    %v3683 = vpop.permute.xlu0 %3682
    %3684 = vrot.lane.b32.xlu0 %v3495, 1
    %v3685 = vpop.permute.xlu0 %3684
    %3686 = vrot.lane.b32.xlu0 %v3496, 1
    %v3687 = vpop.permute.xlu0 %3686
    %3688 = vrot.lane.b32.xlu0 %v3497, 1
    %v3689 = vpop.permute.xlu0 %3688
    %v3722 = vsub.f32 %v2854, %v3627
    %v3723 = vsub.f32 %v2855, %v3629
    %v3724 = vsub.f32 %v2856, %v3631
    %v3725 = vsub.f32 %v2857, %v3633
    %v3726 = vsub.f32 %v2858, %v3635
    %v3727 = vsub.f32 %v2859, %v3637
    %v3728 = vsub.f32 %v2860, %v3639
    %v3729 = vsub.f32 %v2861, %v3641
    %v3730 = vsub.f32 %v2862, %v3643
    %v3731 = vsub.f32 %v2863, %v3645
    %v3732 = vsub.f32 %v2864, %v3647
    %v3733 = vsub.f32 %v2865, %v3649
    %v3734 = vsub.f32 %v2866, %v3651
    %v3735 = vsub.f32 %v2867, %v3653
    %v3736 = vsub.f32 %v2868, %v3655
    %v3737 = vsub.f32 %v2869, %v3657
    %v3738 = vsub.f32 %v2870, %v3659
    %v3739 = vsub.f32 %v2871, %v3661
    %v3740 = vsub.f32 %v2872, %v3663
    %v3741 = vsub.f32 %v2873, %v3665
    %v3742 = vsub.f32 %v2874, %v3667
    %v3743 = vsub.f32 %v2875, %v3669
    %v3744 = vsub.f32 %v2876, %v3671
    %v3745 = vsub.f32 %v2877, %v3673
    %v3746 = vsub.f32 %v2878, %v3675
    %v3747 = vsub.f32 %v2879, %v3677
    %v3748 = vsub.f32 %v2880, %v3679
    %v3749 = vsub.f32 %v2881, %v3681
    %v3750 = vsub.f32 %v2882, %v3683
    %v3751 = vsub.f32 %v2883, %v3685
    %v3752 = vsub.f32 %v2884, %v3687
    %v3753 = vsub.f32 %v2885, %v3689
    %v3754 = vmul.f32 %v3722, 1.442695
    %v3755 = vpow.pop %v3754
    %v3756 = vmul.f32 %v3723, 1.442695
    %v3757 = vpow.pop %v3756
    %v3758 = vmul.f32 %v3724, 1.442695
    %v3759 = vpow.pop %v3758
    %v3760 = vmul.f32 %v3725, 1.442695
    %v3761 = vpow.pop %v3760
    %v3762 = vmul.f32 %v3726, 1.442695
    %v3763 = vpow.pop %v3762
    %v3764 = vmul.f32 %v3727, 1.442695
    %v3765 = vpow.pop %v3764
    %v3766 = vmul.f32 %v3728, 1.442695
    %v3767 = vpow.pop %v3766
    %v3768 = vmul.f32 %v3729, 1.442695
    %v3769 = vpow.pop %v3768
    %v3770 = vmul.f32 %v3730, 1.442695
    %v3771 = vpow.pop %v3770
    %v3772 = vmul.f32 %v3731, 1.442695
    %v3773 = vpow.pop %v3772
    %v3774 = vmul.f32 %v3732, 1.442695
    %v3775 = vpow.pop %v3774
    %v3776 = vmul.f32 %v3733, 1.442695
    %v3777 = vpow.pop %v3776
    %v3778 = vmul.f32 %v3734, 1.442695
    %v3779 = vpow.pop %v3778
    %v3780 = vmul.f32 %v3735, 1.442695
    %v3781 = vpow.pop %v3780
    %v3782 = vmul.f32 %v3736, 1.442695
    %v3783 = vpow.pop %v3782
    %v3784 = vmul.f32 %v3737, 1.442695
    %v3785 = vpow.pop %v3784
    %v3786 = vmul.f32 %v3738, 1.442695
    %v3787 = vpow.pop %v3786
    %v3788 = vmul.f32 %v3739, 1.442695
    %v3789 = vpow.pop %v3788
    %v3790 = vmul.f32 %v3740, 1.442695
    %v3791 = vpow.pop %v3790
    %v3792 = vmul.f32 %v3741, 1.442695
    %v3793 = vpow.pop %v3792
    %v3794 = vmul.f32 %v3742, 1.442695
    %v3795 = vpow.pop %v3794
    %v3796 = vmul.f32 %v3743, 1.442695
    %v3797 = vpow.pop %v3796
    %v3798 = vmul.f32 %v3744, 1.442695
    %v3799 = vpow.pop %v3798
    %v3800 = vmul.f32 %v3745, 1.442695
    %v3801 = vpow.pop %v3800
    %v3802 = vmul.f32 %v3746, 1.442695
    %v3803 = vpow.pop %v3802
    %v3804 = vmul.f32 %v3747, 1.442695
    %v3805 = vpow.pop %v3804
    %v3806 = vmul.f32 %v3748, 1.442695
    %v3807 = vpow.pop %v3806
    %v3808 = vmul.f32 %v3749, 1.442695
    %v3809 = vpow.pop %v3808
    %v3810 = vmul.f32 %v3750, 1.442695
    %v3811 = vpow.pop %v3810
    %v3812 = vmul.f32 %v3751, 1.442695
    %v3813 = vpow.pop %v3812
    %v3814 = vmul.f32 %v3752, 1.442695
    %v3815 = vpow.pop %v3814
    %v3816 = vmul.f32 %v3753, 1.442695
    %v3817 = vpow.pop %v3816
    %3850 = vrot.lane.b32.xlu0 %v3755, 127
    %v3851 = vpop.permute.xlu0 %3850
    %3852 = vrot.lane.b32.xlu0 %v3757, 127
    %v3853 = vpop.permute.xlu0 %3852
    %3854 = vrot.lane.b32.xlu0 %v3759, 127
    %v3855 = vpop.permute.xlu0 %3854
    %3856 = vrot.lane.b32.xlu0 %v3761, 127
    %v3857 = vpop.permute.xlu0 %3856
    %3858 = vrot.lane.b32.xlu0 %v3763, 127
    %v3859 = vpop.permute.xlu0 %3858
    %3860 = vrot.lane.b32.xlu0 %v3765, 127
    %v3861 = vpop.permute.xlu0 %3860
    %3862 = vrot.lane.b32.xlu0 %v3767, 127
    %v3863 = vpop.permute.xlu0 %3862
    %3864 = vrot.lane.b32.xlu0 %v3769, 127
    %v3865 = vpop.permute.xlu0 %3864
    %3866 = vrot.lane.b32.xlu0 %v3771, 127
    %v3867 = vpop.permute.xlu0 %3866
    %3868 = vrot.lane.b32.xlu0 %v3773, 127
    %v3869 = vpop.permute.xlu0 %3868
    %3870 = vrot.lane.b32.xlu0 %v3775, 127
    %v3871 = vpop.permute.xlu0 %3870
    %3872 = vrot.lane.b32.xlu0 %v3777, 127
    %v3873 = vpop.permute.xlu0 %3872
    %3874 = vrot.lane.b32.xlu0 %v3779, 127
    %v3875 = vpop.permute.xlu0 %3874
    %3876 = vrot.lane.b32.xlu0 %v3781, 127
    %v3877 = vpop.permute.xlu0 %3876
    %3878 = vrot.lane.b32.xlu0 %v3783, 127
    %v3879 = vpop.permute.xlu0 %3878
    %3880 = vrot.lane.b32.xlu0 %v3785, 127
    %v3881 = vpop.permute.xlu0 %3880
    %3882 = vrot.lane.b32.xlu0 %v3787, 127
    %v3883 = vpop.permute.xlu0 %3882
    %3884 = vrot.lane.b32.xlu0 %v3789, 127
    %v3885 = vpop.permute.xlu0 %3884
    %3886 = vrot.lane.b32.xlu0 %v3791, 127
    %v3887 = vpop.permute.xlu0 %3886
    %3888 = vrot.lane.b32.xlu0 %v3793, 127
    %v3889 = vpop.permute.xlu0 %3888
    %3890 = vrot.lane.b32.xlu0 %v3795, 127
    %v3891 = vpop.permute.xlu0 %3890
    %3892 = vrot.lane.b32.xlu0 %v3797, 127
    %v3893 = vpop.permute.xlu0 %3892
    %3894 = vrot.lane.b32.xlu0 %v3799, 127
    %v3895 = vpop.permute.xlu0 %3894
    %3896 = vrot.lane.b32.xlu0 %v3801, 127
    %v3897 = vpop.permute.xlu0 %3896
    %3898 = vrot.lane.b32.xlu0 %v3803, 127
    %v3899 = vpop.permute.xlu0 %3898
    %3900 = vrot.lane.b32.xlu0 %v3805, 127
    %v3901 = vpop.permute.xlu0 %3900
    %3902 = vrot.lane.b32.xlu0 %v3807, 127
    %v3903 = vpop.permute.xlu0 %3902
    %3904 = vrot.lane.b32.xlu0 %v3809, 127
    %v3905 = vpop.permute.xlu0 %3904
    %3906 = vrot.lane.b32.xlu0 %v3811, 127
    %v3907 = vpop.permute.xlu0 %3906
    %3908 = vrot.lane.b32.xlu0 %v3813, 127
    %v3909 = vpop.permute.xlu0 %3908
    %3910 = vrot.lane.b32.xlu0 %v3815, 127
    %v3911 = vpop.permute.xlu0 %3910
    %3912 = vrot.lane.b32.xlu0 %v3817, 127
    %v3913 = vpop.permute.xlu0 %3912
    %v3946 = vadd.f32 %v3531, %v3851
    %v3947 = vadd.f32 %v3533, %v3853
    %v3948 = vadd.f32 %v3535, %v3855
    %v3949 = vadd.f32 %v3537, %v3857
    %v3950 = vadd.f32 %v3539, %v3859
    %v3951 = vadd.f32 %v3541, %v3861
    %v3952 = vadd.f32 %v3543, %v3863
    %v3953 = vadd.f32 %v3545, %v3865
    %v3954 = vadd.f32 %v3547, %v3867
    %v3955 = vadd.f32 %v3549, %v3869
    %v3956 = vadd.f32 %v3551, %v3871
    %v3957 = vadd.f32 %v3553, %v3873
    %v3958 = vadd.f32 %v3555, %v3875
    %v3959 = vadd.f32 %v3557, %v3877
    %v3960 = vadd.f32 %v3559, %v3879
    %v3961 = vadd.f32 %v3561, %v3881
    %v3962 = vadd.f32 %v3563, %v3883
    %v3963 = vadd.f32 %v3565, %v3885
    %v3964 = vadd.f32 %v3567, %v3887
    %v3965 = vadd.f32 %v3569, %v3889
    %v3966 = vadd.f32 %v3571, %v3891
    %v3967 = vadd.f32 %v3573, %v3893
    %v3968 = vadd.f32 %v3575, %v3895
    %v3969 = vadd.f32 %v3577, %v3897
    %v3970 = vadd.f32 %v3579, %v3899
    %v3971 = vadd.f32 %v3581, %v3901
    %v3972 = vadd.f32 %v3583, %v3903
    %v3973 = vadd.f32 %v3585, %v3905
    %v3974 = vadd.f32 %v3587, %v3907
    %v3975 = vadd.f32 %v3589, %v3909
    %v3976 = vadd.f32 %v3591, %v3911
    %v3977 = vadd.f32 %v3593, %v3913
    %v3978 = vlog2.pop %v3946
    %v3979 = vmul.f32 %v3978, 0.6931472
    %v3980 = vlog2.pop %v3947
    %v3981 = vmul.f32 %v3980, 0.6931472
    %v3982 = vlog2.pop %v3948
    %v3983 = vmul.f32 %v3982, 0.6931472
    %v3984 = vlog2.pop %v3949
    %v3985 = vmul.f32 %v3984, 0.6931472
    %v3986 = vlog2.pop %v3950
    %v3987 = vmul.f32 %v3986, 0.6931472
    %v3988 = vlog2.pop %v3951
    %v3989 = vmul.f32 %v3988, 0.6931472
    %v3990 = vlog2.pop %v3952
    %v3991 = vmul.f32 %v3990, 0.6931472
    %v3992 = vlog2.pop %v3953
    %v3993 = vmul.f32 %v3992, 0.6931472
    %v3994 = vlog2.pop %v3954
    %v3995 = vmul.f32 %v3994, 0.6931472
    %v3996 = vlog2.pop %v3955
    %v3997 = vmul.f32 %v3996, 0.6931472
    %v3998 = vlog2.pop %v3956
    %v3999 = vmul.f32 %v3998, 0.6931472
    %v4000 = vlog2.pop %v3957
    %v4001 = vmul.f32 %v4000, 0.6931472
    %v4002 = vlog2.pop %v3958
    %v4003 = vmul.f32 %v4002, 0.6931472
    %v4004 = vlog2.pop %v3959
    %v4005 = vmul.f32 %v4004, 0.6931472
    %v4006 = vlog2.pop %v3960
    %v4007 = vmul.f32 %v4006, 0.6931472
    %v4008 = vlog2.pop %v3961
    %v4009 = vmul.f32 %v4008, 0.6931472
    %v4010 = vlog2.pop %v3962
    %v4011 = vmul.f32 %v4010, 0.6931472
    %v4012 = vlog2.pop %v3963
    %v4013 = vmul.f32 %v4012, 0.6931472
    %v4014 = vlog2.pop %v3964
    %v4015 = vmul.f32 %v4014, 0.6931472
    %v4016 = vlog2.pop %v3965
    %v4017 = vmul.f32 %v4016, 0.6931472
    %v4018 = vlog2.pop %v3966
    %v4019 = vmul.f32 %v4018, 0.6931472
    %v4020 = vlog2.pop %v3967
    %v4021 = vmul.f32 %v4020, 0.6931472
    %v4022 = vlog2.pop %v3968
    %v4023 = vmul.f32 %v4022, 0.6931472
    %v4024 = vlog2.pop %v3969
    %v4025 = vmul.f32 %v4024, 0.6931472
    %v4026 = vlog2.pop %v3970
    %v4027 = vmul.f32 %v4026, 0.6931472
    %v4028 = vlog2.pop %v3971
    %v4029 = vmul.f32 %v4028, 0.6931472
    %v4030 = vlog2.pop %v3972
    %v4031 = vmul.f32 %v4030, 0.6931472
    %v4032 = vlog2.pop %v3973
    %v4033 = vmul.f32 %v4032, 0.6931472
    %v4034 = vlog2.pop %v3974
    %v4035 = vmul.f32 %v4034, 0.6931472
    %v4036 = vlog2.pop %v3975
    %v4037 = vmul.f32 %v4036, 0.6931472
    %v4038 = vlog2.pop %v3976
    %v4039 = vmul.f32 %v4038, 0.6931472
    %v4040 = vlog2.pop %v3977
    %v4041 = vmul.f32 %v4040, 0.6931472
    %v4042 = vadd.f32 %v3466, %v3979
    %v4043 = vadd.f32 %v3467, %v3981
    %v4044 = vadd.f32 %v3468, %v3983
    %v4045 = vadd.f32 %v3469, %v3985
    %v4046 = vadd.f32 %v3470, %v3987
    %v4047 = vadd.f32 %v3471, %v3989
    %v4048 = vadd.f32 %v3472, %v3991
    %v4049 = vadd.f32 %v3473, %v3993
    %v4050 = vadd.f32 %v3474, %v3995
    %v4051 = vadd.f32 %v3475, %v3997
    %v4052 = vadd.f32 %v3476, %v3999
    %v4053 = vadd.f32 %v3477, %v4001
    %v4054 = vadd.f32 %v3478, %v4003
    %v4055 = vadd.f32 %v3479, %v4005
    %v4056 = vadd.f32 %v3480, %v4007
    %v4057 = vadd.f32 %v3481, %v4009
    %v4058 = vadd.f32 %v3482, %v4011
    %v4059 = vadd.f32 %v3483, %v4013
    %v4060 = vadd.f32 %v3484, %v4015
    %v4061 = vadd.f32 %v3485, %v4017
    %v4062 = vadd.f32 %v3486, %v4019
    %v4063 = vadd.f32 %v3487, %v4021
    %v4064 = vadd.f32 %v3488, %v4023
    %v4065 = vadd.f32 %v3489, %v4025
    %v4066 = vadd.f32 %v3490, %v4027
    %v4067 = vadd.f32 %v3491, %v4029
    %v4068 = vadd.f32 %v3492, %v4031
    %v4069 = vadd.f32 %v3493, %v4033
    %v4070 = vadd.f32 %v3494, %v4035
    %v4071 = vadd.f32 %v3495, %v4037
    %v4072 = vadd.f32 %v3496, %v4039
    %v4073 = vadd.f32 %v3497, %v4041
    %vm4074 = vcmp.eq.s32.totalorder %v3306, 0
    %vm4075 = vcmp.eq.s32.totalorder %v3307, 0
    %vm4076 = vcmp.eq.s32.totalorder %v3308, 0
    %vm4077 = vcmp.eq.s32.totalorder %v3309, 0
    %vm4078 = vcmp.eq.s32.totalorder %v3310, 0
    %vm4079 = vcmp.eq.s32.totalorder %v3311, 0
    %vm4080 = vcmp.eq.s32.totalorder %v3312, 0
    %vm4081 = vcmp.eq.s32.totalorder %v3313, 0
    %vm4082 = vcmp.eq.s32.totalorder %v3314, 0
    %vm4083 = vcmp.eq.s32.totalorder %v3315, 0
    %vm4084 = vcmp.eq.s32.totalorder %v3316, 0
    %vm4085 = vcmp.eq.s32.totalorder %v3317, 0
    %vm4086 = vcmp.eq.s32.totalorder %v3318, 0
    %vm4087 = vcmp.eq.s32.totalorder %v3319, 0
    %vm4088 = vcmp.eq.s32.totalorder %v3320, 0
    %vm4089 = vcmp.eq.s32.totalorder %v3321, 0
    %vm4090 = vcmp.eq.s32.totalorder %v3322, 0
    %vm4091 = vcmp.eq.s32.totalorder %v3323, 0
    %vm4092 = vcmp.eq.s32.totalorder %v3324, 0
    %vm4093 = vcmp.eq.s32.totalorder %v3325, 0
    %vm4094 = vcmp.eq.s32.totalorder %v3326, 0
    %vm4095 = vcmp.eq.s32.totalorder %v3327, 0
    %vm4096 = vcmp.eq.s32.totalorder %v3328, 0
    %vm4097 = vcmp.eq.s32.totalorder %v3329, 0
    %vm4098 = vcmp.eq.s32.totalorder %v3330, 0
    %vm4099 = vcmp.eq.s32.totalorder %v3331, 0
    %vm4100 = vcmp.eq.s32.totalorder %v3332, 0
    %vm4101 = vcmp.eq.s32.totalorder %v3333, 0
    %vm4102 = vcmp.eq.s32.totalorder %v3334, 0
    %vm4103 = vcmp.eq.s32.totalorder %v3335, 0
    %vm4104 = vcmp.eq.s32.totalorder %v3336, 0
    %vm4105 = vcmp.eq.s32.totalorder %v3337, 0
    %v4106 = vsel %vm4074, %v2822, %v3371
    %v4107 = vsel %vm4075, %v2823, %v3373
    %v4108 = vsel %vm4076, %v2824, %v3375
    %v4109 = vsel %vm4077, %v2825, %v3377
    %v4110 = vsel %vm4078, %v2826, %v3379
    %v4111 = vsel %vm4079, %v2827, %v3381
    %v4112 = vsel %vm4080, %v2828, %v3383
    %v4113 = vsel %vm4081, %v2829, %v3385
    %v4114 = vsel %vm4082, %v2830, %v3387
    %v4115 = vsel %vm4083, %v2831, %v3389
    %v4116 = vsel %vm4084, %v2832, %v3391
    %v4117 = vsel %vm4085, %v2833, %v3393
    %v4118 = vsel %vm4086, %v2834, %v3395
    %v4119 = vsel %vm4087, %v2835, %v3397
    %v4120 = vsel %vm4088, %v2836, %v3399
    %v4121 = vsel %vm4089, %v2837, %v3401
    %v4122 = vsel %vm4090, %v2838, %v3403
    %v4123 = vsel %vm4091, %v2839, %v3405
    %v4124 = vsel %vm4092, %v2840, %v3407
    %v4125 = vsel %vm4093, %v2841, %v3409
    %v4126 = vsel %vm4094, %v2842, %v3411
    %v4127 = vsel %vm4095, %v2843, %v3413
    %v4128 = vsel %vm4096, %v2844, %v3415
    %v4129 = vsel %vm4097, %v2845, %v3417
    %v4130 = vsel %vm4098, %v2846, %v3419
    %v4131 = vsel %vm4099, %v2847, %v3421
    %v4132 = vsel %vm4100, %v2848, %v3423
    %v4133 = vsel %vm4101, %v2849, %v3425
    %v4134 = vsel %vm4102, %v2850, %v3427
    %v4135 = vsel %vm4103, %v2851, %v3429
    %v4136 = vsel %vm4104, %v2852, %v3431
    %v4137 = vsel %vm4105, %v2853, %v3433
    %v4138 = vsub.f32 %v4042, %v4106
    %v4139 = vsub.f32 %v4043, %v4107
    %v4140 = vsub.f32 %v4044, %v4108
    %v4141 = vsub.f32 %v4045, %v4109
    %v4142 = vsub.f32 %v4046, %v4110
    %v4143 = vsub.f32 %v4047, %v4111
    %v4144 = vsub.f32 %v4048, %v4112
    %v4145 = vsub.f32 %v4049, %v4113
    %v4146 = vsub.f32 %v4050, %v4114
    %v4147 = vsub.f32 %v4051, %v4115
    %v4148 = vsub.f32 %v4052, %v4116
    %v4149 = vsub.f32 %v4053, %v4117
    %v4150 = vsub.f32 %v4054, %v4118
    %v4151 = vsub.f32 %v4055, %v4119
    %v4152 = vsub.f32 %v4056, %v4120
    %v4153 = vsub.f32 %v4057, %v4121
    %v4154 = vsub.f32 %v4058, %v4122
    %v4155 = vsub.f32 %v4059, %v4123
    %v4156 = vsub.f32 %v4060, %v4124
    %v4157 = vsub.f32 %v4061, %v4125
    %v4158 = vsub.f32 %v4062, %v4126
    %v4159 = vsub.f32 %v4063, %v4127
    %v4160 = vsub.f32 %v4064, %v4128
    %v4161 = vsub.f32 %v4065, %v4129
    %v4162 = vsub.f32 %v4066, %v4130
    %v4163 = vsub.f32 %v4067, %v4131
    %v4164 = vsub.f32 %v4068, %v4132
    %v4165 = vsub.f32 %v4069, %v4133
    %v4166 = vsub.f32 %v4070, %v4134
    %v4167 = vsub.f32 %v4071, %v4135
    %v4168 = vsub.f32 %v4072, %v4136
    %v4169 = vsub.f32 %v4073, %v4137
    %v4170 = vmul.f32 %v3338, %v4138
    %v4171 = vmul.f32 %v3339, %v4139
    %v4172 = vmul.f32 %v3340, %v4140
    %v4173 = vmul.f32 %v3341, %v4141
    %v4174 = vmul.f32 %v3342, %v4142
    %v4175 = vmul.f32 %v3343, %v4143
    %v4176 = vmul.f32 %v3344, %v4144
    %v4177 = vmul.f32 %v3345, %v4145
    %v4178 = vmul.f32 %v3346, %v4146
    %v4179 = vmul.f32 %v3347, %v4147
    %v4180 = vmul.f32 %v3348, %v4148
    %v4181 = vmul.f32 %v3349, %v4149
    %v4182 = vmul.f32 %v3350, %v4150
    %v4183 = vmul.f32 %v3351, %v4151
    %v4184 = vmul.f32 %v3352, %v4152
    %v4185 = vmul.f32 %v3353, %v4153
    %v4186 = vmul.f32 %v3354, %v4154
    %v4187 = vmul.f32 %v3355, %v4155
    %v4188 = vmul.f32 %v3356, %v4156
    %v4189 = vmul.f32 %v3357, %v4157
    %v4190 = vmul.f32 %v3358, %v4158
    %v4191 = vmul.f32 %v3359, %v4159
    %v4192 = vmul.f32 %v3360, %v4160
    %v4193 = vmul.f32 %v3361, %v4161
    %v4194 = vmul.f32 %v3362, %v4162
    %v4195 = vmul.f32 %v3363, %v4163
    %v4196 = vmul.f32 %v3364, %v4164
    %v4197 = vmul.f32 %v3365, %v4165
    %v4198 = vmul.f32 %v3366, %v4166
    %v4199 = vmul.f32 %v3367, %v4167
    %v4200 = vmul.f32 %v3368, %v4168
    %v4201 = vmul.f32 %v3369, %v4169
    %vm4202 = vcmask 7168
    %v4203 = vsel %vm4202, %v4170, 0.0
    %v4204 = vsel %vm4202, %v4171, 0.0
    %v4205 = vadd.f32 %v4203, %v4204
    %v4206 = vsel %vm4202, %v4172, 0.0
    %v4207 = vadd.f32 %v4205, %v4206
    %v4208 = vsel %vm4202, %v4173, 0.0
    %v4209 = vadd.f32 %v4207, %v4208
    %v4210 = vsel %vm4202, %v4174, 0.0
    %v4211 = vadd.f32 %v4209, %v4210
    %v4212 = vsel %vm4202, %v4175, 0.0
    %v4213 = vadd.f32 %v4211, %v4212
    %v4214 = vsel %vm4202, %v4176, 0.0
    %v4215 = vadd.f32 %v4213, %v4214
    %v4216 = vsel %vm4202, %v4177, 0.0
    %v4217 = vadd.f32 %v4215, %v4216
    %v4218 = vsel %vm4202, %v4178, 0.0
    %v4219 = vadd.f32 %v4217, %v4218
    %v4220 = vsel %vm4202, %v4179, 0.0
    %v4221 = vadd.f32 %v4219, %v4220
    %v4222 = vsel %vm4202, %v4180, 0.0
    %v4223 = vadd.f32 %v4221, %v4222
    %v4224 = vsel %vm4202, %v4181, 0.0
    %v4225 = vadd.f32 %v4223, %v4224
    %v4226 = vsel %vm4202, %v4182, 0.0
    %v4227 = vadd.f32 %v4225, %v4226
    %v4228 = vsel %vm4202, %v4183, 0.0
    %v4229 = vadd.f32 %v4227, %v4228
    %v4230 = vsel %vm4202, %v4184, 0.0
    %v4231 = vadd.f32 %v4229, %v4230
    %v4232 = vsel %vm4202, %v4185, 0.0
    %v4233 = vadd.f32 %v4231, %v4232
    %v4234 = vsel %vm4202, %v4186, 0.0
    %v4235 = vadd.f32 %v4233, %v4234
    %v4236 = vsel %vm4202, %v4187, 0.0
    %v4237 = vadd.f32 %v4235, %v4236
    %v4238 = vsel %vm4202, %v4188, 0.0
    %v4239 = vadd.f32 %v4237, %v4238
    %v4240 = vsel %vm4202, %v4189, 0.0
    %v4241 = vadd.f32 %v4239, %v4240
    %v4242 = vsel %vm4202, %v4190, 0.0
    %v4243 = vadd.f32 %v4241, %v4242
    %v4244 = vsel %vm4202, %v4191, 0.0
    %v4245 = vadd.f32 %v4243, %v4244
    %v4246 = vsel %vm4202, %v4192, 0.0
    %v4247 = vadd.f32 %v4245, %v4246
    %v4248 = vsel %vm4202, %v4193, 0.0
    %v4249 = vadd.f32 %v4247, %v4248
    %v4250 = vsel %vm4202, %v4194, 0.0
    %v4251 = vadd.f32 %v4249, %v4250
    %v4252 = vsel %vm4202, %v4195, 0.0
    %v4253 = vadd.f32 %v4251, %v4252
    %v4254 = vsel %vm4202, %v4196, 0.0
    %v4255 = vadd.f32 %v4253, %v4254
    %v4256 = vsel %vm4202, %v4197, 0.0
    %v4257 = vadd.f32 %v4255, %v4256
    %v4258 = vsel %vm4202, %v4198, 0.0
    %v4259 = vadd.f32 %v4257, %v4258
    %v4260 = vsel %vm4202, %v4199, 0.0
    %v4261 = vadd.f32 %v4259, %v4260
    %v4262 = vsel %vm4202, %v4200, 0.0
    %v4263 = vadd.f32 %v4261, %v4262
    %v4264 = vsel %vm4202, %v4201, 0.0
    %v4265 = vadd.f32 %v4263, %v4264
    %v4266 = vrot.slane %v4265, 4
    %v4267 = vadd.f32 %v4265, %v4266
    %v4268 = vrot.slane %v4267, 2
    %v4269 = vadd.f32 %v4267, %v4268
    %v4270 = vrot.slane %v4269, 1
    %v4271 = vadd.f32 %v4269, %v4270
    %v4272 = vld [vmem:[#allocation2] sm:$0x1]
    %v4273 = vadd.f32 %v4272, %v4271
    %vm4274 = vcmask 0
    %4275 = vst.msk [vmem:[#allocation2] sm:$0x1] %vm4274, %v4273
    // Predicated region
    $region70: #{_re_batch.1} parent=1 // pred_check
      _
    $region71: #{_re_batch.1} parent=1 // pred_check_branch
      %4277 = sbr.rel (0) target = $region73
    $region72: #{_re_batch.1} parent=1 // pred_region
      _
    $region73: #{_re_batch.1} parent=1 // pred_fallthru
      _
    // Predicated region
    $region74: #{_re_batch.1} parent=1 // pred_check
      _
    $region75: #{_re_batch.1} parent=1 // pred_check_branch
      %4279 = sbr.rel (0) target = $region77
    $region76: #{_re_batch.1} parent=1 // pred_region
      %s4281 = ssub.s32 16, 16
      %4282 = vsyncadd [#allocation3], %s4281
      %s4284 = sshll.u32 [#allocation2], 4
      %s4285 = int_to_ptr.vmem [resolvable:$true] %s4284
      %4287 = dma.vmem_to_hbm [thread:$0]  %s4285, 16, %s17, [#allocation3]
    $region77: #{_re_batch.1} parent=1 // pred_fallthru
      _
    // Predicated region
    $region78: #{_re_batch.1} parent=1 // pred_check
      _
    $region79: #{_re_batch.1} parent=1 // pred_check_branch
      %4289 = sbr.rel (0) target = $region81
    $region80: #{_re_batch.1} parent=1 // pred_region
      _
    $region81: #{_re_batch.1} parent=1 // pred_fallthru
      _
    // Predicated region
    $region82: #{_re_batch.1} parent=1 // pred_check
      _
    $region83: #{_re_batch.1} parent=1 // pred_check_branch
      %4291 = sbr.rel (0) target = $region85
    $region84: #{_re_batch.1} parent=1 // pred_region
      %4292 = dma.done [#allocation3], 16
    $region85: #{_re_batch.1} parent=1 // pred_fallthru
      _
    %4293 = vsyncpa [#allocation3], 1

</llo_original>
